<compile_context>
chip_gen: v7x
topology: tpu7x:2x2x1
jax: 0.10.0
libtpu: 0.0.40
codegen_flags: <defaults>
</compile_context>

<pallas_src>
import math
from functools import partial

import jax
import jax.numpy as jnp
from jax.experimental import pallas as pl
from jax.experimental.pallas import tpu as pltpu

# ------------------------- model hyper-parameters ---------------------------
BATCH = 2
IN_CH = 4            # input image channels
H = W = 8            # spatial size of the (synthetic) backbone feature map
HW = H * W
BACKBONE_CH = 16     # backbone.num_channels
D_MODEL = 32         # transformer.d_model (num_hidden)
N_HEADS = 4
D_HEAD = D_MODEL // N_HEADS
D_FF = 64
NUM_QUERIES = 8
NUM_CLASSES = 5
N_CLS = NUM_CLASSES + 1
OUT_PAD = 128        # lane-dense padded head-output width (sliced in wrapper)
LN_EPS = 1e-5

# input-slab lane layout: [0:4]=x, [32:96]=pos@[Wq*s|Wk], [96:128]=pos@d_ca_wk
X_LANE = 0
POS_EQK_LANE = 32
POS_DK_LANE = 96
IN_PAD = 128

# --------------------------- slab layout tables ------------------------------
def _r16(k):
    return ((k + 15) // 16) * 16     # bf16 sublane-tile alignment


_W_SEGS = (                           # (name, K, N) -> rows [off, off+K), lanes [0, N)
    ("w_bb", IN_CH, BACKBONE_CH),
    ("w_pr", BACKBONE_CH, D_MODEL),
    ("e_wqkv", D_MODEL, 3 * D_MODEL),
    ("e_wo", D_MODEL, D_MODEL),
    ("e_w1", D_MODEL, D_FF),
    ("e_w2", D_FF, D_MODEL),
    ("d_ca_wkv", D_MODEL, 2 * D_MODEL),
    ("d_ca_wo", D_MODEL, D_MODEL),
    ("d_w1", D_MODEL, D_FF),
    ("d_w2", D_FF, D_MODEL),
    ("h_w0", D_MODEL, D_MODEL),
    ("h_w1", D_MODEL, D_MODEL),
    ("h_wc", D_MODEL, OUT_PAD),       # class head padded to lanes 0..N_CLS-1
    ("h_w2", D_MODEL, OUT_PAD),       # bbox final padded to lanes N_CLS..N_CLS+3
)
_W_OFF = {}
_r = 0
for _n, _k, _c in _W_SEGS:
    _W_OFF[_n] = (_r, _k, _c)
    _r += _r16(_k)
W_ROWS = _r                           # 480 rows of bf16 x 128 lanes (~120 KiB)

_C_SEGS = (                           # (name, n_rows, n_cols) in the f32 const slab
    ("b_bb", 1, BACKBONE_CH), ("b_pr", 1, D_MODEL),
    ("e_bqkv", 1, 3 * D_MODEL), ("e_bo", 1, D_MODEL),
    ("e_ln1g", 1, D_MODEL), ("e_ln1b", 1, D_MODEL),
    ("e_b1", 1, D_FF), ("e_b2", 1, D_MODEL),
    ("e_ln2g", 1, D_MODEL), ("e_ln2b", 1, D_MODEL),
    ("d_ca_bkv", 1, 2 * D_MODEL), ("d_ca_bo", 1, D_MODEL),
    ("d_ln2g", 1, D_MODEL), ("d_ln2b", 1, D_MODEL),
    ("d_b1", 1, D_FF), ("d_b2", 1, D_MODEL),
    ("d_ln3g", 1, D_MODEL), ("d_ln3b", 1, D_MODEL),
    ("h_b0", 1, D_MODEL), ("h_b1", 1, D_MODEL),
    ("h_bout", 1, OUT_PAD),           # class bias lanes 0..5 | box bias lanes 6..9
    ("tgt1", 1, D_MODEL),             # constant decoder state after self-attn + LN1
    ("_pad0", 2, 1),                  # align q_dec to a sublane-tile boundary
    ("q_dec", NUM_QUERIES, D_MODEL),  # constant, pre-scaled cross-attn queries
)
_C_OFF = {}
_r = 0
for _n, _nr, _nc in _C_SEGS:
    _C_OFF[_n] = (_r, _nr, _nc)
    _r += _nr
C_ROWS = ((_r + 7) // 8) * 8          # 32 rows of f32 x 128 lanes (16 KiB)


# --------------------------- in-kernel helpers -------------------------------
def _mm(x, w, b=None):
    """Linear: cast activations to the (bf16) weight dtype, accumulate f32."""
    y = jnp.dot(x.astype(w.dtype), w, preferred_element_type=jnp.float32)
    return y if b is None else y + b


def _ln(x, g, b):
    mu = jnp.mean(x, axis=-1, keepdims=True)
    xc = x - mu
    var = jnp.mean(xc * xc, axis=-1, keepdims=True)
    return xc * jax.lax.rsqrt(var + LN_EPS) * g + b


def _mha(q, k, v, key_bias, att_ref, lq):
    """Multi-head attention; q already carries the 1/sqrt(d_head) scale.
    Per-head scores are stacked along sublanes so max/exp/sum/reciprocal run
    once; per-head outputs are written into lane slices of the VMEM scratch
    `att_ref` (rows 0..lq) instead of a lane concatenate."""
    qb = q.astype(jnp.bfloat16)
    kb = k.astype(jnp.bfloat16)
    vb = v.astype(jnp.bfloat16)
    scores = []
    for h in range(N_HEADS):
        sl = slice(h * D_HEAD, (h + 1) * D_HEAD)
        scores.append(jax.lax.dot_general(
            qb[:, sl], kb[:, sl], (((1,), (1,)), ((), ())),
            preferred_element_type=jnp.float32))
    s = jnp.concatenate(scores, axis=0)                 # (H*lq, Lk)
    if key_bias is not None:
        s = s + key_bias                                # (1, Lk) broadcast
    m = jnp.max(s, axis=-1, keepdims=True)
    p = jnp.exp(s - m)
    p = p * pl.reciprocal(jnp.sum(p, axis=-1, keepdims=True), approx=True)
    for h in range(N_HEADS):
        sl = slice(h * D_HEAD, (h + 1) * D_HEAD)
        ph = p[h * lq:(h + 1) * lq, :].astype(jnp.bfloat16)
        att_ref[0:lq, sl] = jnp.dot(ph, vb[:, sl],
                                    preferred_element_type=jnp.float32)


# ------------------------------ fused kernel ---------------------------------
def _detr_kernel(has_bias, *refs):
    if has_bias:
        in_ref, bias_ref, w_ref, c_ref, o_ref, att_ref = refs
        key_bias = bias_ref[0]                          # (1, HW): 0 / -1e9
    else:
        in_ref, w_ref, c_ref, o_ref, att_ref = refs
        key_bias = None

    def wseg(name):                                     # bf16 weight slab slice
        r, k, n = _W_OFF[name]
        return w_ref[r:r + k, 0:n]

    cs = c_ref[...]                                     # whole const slab (4 vregs)

    def cseg(name):                                     # f32 bias/const row(s)
        r, nr, nc = _C_OFF[name]
        return cs[r:r + nr, 0:nc]

    xin = in_ref[0]                                     # (HW, 128) packed input
    n_tok = xin.shape[0]
    x = xin[:, X_LANE:X_LANE + IN_CH]                   # (HW, 4)
    pos_eqk = xin[:, POS_EQK_LANE:POS_EQK_LANE + 2 * D_MODEL]   # (HW, 64)
    pos_dk = xin[:, POS_DK_LANE:POS_DK_LANE + D_MODEL]          # (HW, 32)

    # ---- stem: backbone (1x1 conv + ReLU stand-in) + input_proj ----
    feat = jnp.maximum(_mm(x, wseg("w_bb"), cseg("b_bb")), 0.0)
    src = _mm(feat, wseg("w_pr"), cseg("b_pr"))          # (HW, D)

    # ---- encoder layer (post-norm): fused QKV on src, hoisted pos added ----
    qkv = _mm(src, wseg("e_wqkv"), cseg("e_bqkv"))       # (HW, 3D)
    qk = qkv[:, 0:2 * D_MODEL] + pos_eqk                 # q (scaled) | k
    _mha(qk[:, 0:D_MODEL], qk[:, D_MODEL:2 * D_MODEL], qkv[:, 2 * D_MODEL:],
         key_bias, att_ref, n_tok)
    att = _mm(att_ref[0:n_tok, :], wseg("e_wo"), cseg("e_bo"))
    mem = _ln(src + att, cseg("e_ln1g"), cseg("e_ln1b"))
    ff = jnp.maximum(_mm(mem, wseg("e_w1"), cseg("e_b1")), 0.0)
    mem = _ln(mem + _mm(ff, wseg("e_w2"), cseg("e_b2")),
              cseg("e_ln2g"), cseg("e_ln2b"))            # (HW, D) memory

    # ---- decoder layer (tgt = 0): self-attn block is an init-time constant ----
    tgt1 = cseg("tgt1")                                  # (1, D)
    kv = _mm(mem, wseg("d_ca_wkv"), cseg("d_ca_bkv"))    # (HW, 2D): k | v
    k = kv[:, 0:D_MODEL] + pos_dk
    v = kv[:, D_MODEL:2 * D_MODEL]
    _mha(cseg("q_dec"), k, v, key_bias, att_ref, NUM_QUERIES)
    ca = _mm(att_ref[0:NUM_QUERIES, :], wseg("d_ca_wo"), cseg("d_ca_bo"))
    tgt2 = _ln(tgt1 + ca, cseg("d_ln2g"), cseg("d_ln2b"))
    ff = jnp.maximum(_mm(tgt2, wseg("d_w1"), cseg("d_b1")), 0.0)
    hs = _ln(tgt2 + _mm(ff, wseg("d_w2"), cseg("d_b2")),
             cseg("d_ln3g"), cseg("d_ln3b"))             # (NQ, D)

    # ---- heads: BitLinear class + bbox MLP, concat-free lane-dense store ----
    hb = jnp.maximum(_mm(hs, wseg("h_w0"), cseg("h_b0")), 0.0)
    hb = jnp.maximum(_mm(hb, wseg("h_w1"), cseg("h_b1")), 0.0)
    out = _mm(hs, wseg("h_wc")) + _mm(hb, wseg("h_w2")) + cseg("h_bout")
    lane = jax.lax.broadcasted_iota(jnp.int32, out.shape, 1)
    is_box = (lane >= N_CLS) & (lane < N_CLS + 4)
    o_ref[0] = jnp.where(is_box, jax.nn.sigmoid(out), out)   # (NQ, 128) unmasked


# ------------------------------ spec helpers ----------------------------------
def _whole_spec(a):
    zeros = (0,) * a.ndim
    return pl.BlockSpec(a.shape, lambda b, _z=zeros: _z)


def _batch_spec(a):
    tail = tuple(a.shape[1:])
    zeros = (0,) * (a.ndim - 1)
    return pl.BlockSpec((1,) + tail, lambda b, _z=zeros: (b,) + _z)


# ----------------------------- XLA-side glue ----------------------------------
def position_embedding_sine(mask, num_pos_feats=D_MODEL // 2,
                            temperature=10000.0, scale=2.0 * math.pi):
    """PositionEmbeddingSine(normalize=True). mask: (B,H,W) bool, True=pad."""
    not_mask = (~mask).astype(jnp.float32)
    y_embed = jnp.cumsum(not_mask, axis=1)
    x_embed = jnp.cumsum(not_mask, axis=2)
    eps = 1e-6
    y_embed = y_embed / (y_embed[:, -1:, :] + eps) * scale
    x_embed = x_embed / (x_embed[:, :, -1:] + eps) * scale

    dim_t = jnp.arange(num_pos_feats, dtype=jnp.float32)
    dim_t = temperature ** (2.0 * jnp.floor(dim_t / 2.0) / num_pos_feats)

    pos_x = x_embed[:, :, :, None] / dim_t
    pos_y = y_embed[:, :, :, None] / dim_t

    def interleave(v):
        s = jnp.sin(v[..., 0::2])
        c = jnp.cos(v[..., 1::2])
        return jnp.stack((s, c), axis=-1).reshape(v.shape[:-1] + (-1,))

    pos = jnp.concatenate((interleave(pos_y), interleave(pos_x)), axis=3)
    return pos.transpose(0, 3, 1, 2)                     # (B, D, H, W)


def detr_forward(params, x, mask=None):
    """x: (B, C, H, W) float32 (NCHW).  Returns (pred_logits, pred_boxes)."""
    B, C, Hx, Wx = x.shape
    hw = Hx * Wx
    has_mask = mask is not None
    if not has_mask:
        mask = jnp.zeros((B, Hx, Wx), dtype=bool)

    # NCHW -> token-major (B, HW, C); 1x1 convs become matmuls in-kernel.
    x_tok = jnp.transpose(x, (0, 2, 3, 1)).reshape(B, hw, C).astype(jnp.float32)

    pos = position_embedding_sine(mask)                  # (B, D, H, W)
    pos = jnp.transpose(pos, (0, 2, 3, 1)).reshape(B, hw, D_MODEL)
    pos = pos.astype(jnp.float32)

    # Hoisted, per-call positional projections (one small XLA matmul):
    # lanes 32..95 = pos @ [Wq*scale | Wk] (encoder), lanes 96..127 = pos @ d_ca_wk
    pos_proj = jnp.einsum("bld,de->ble", pos, params["pos_proj_w"])
    in_slab = jnp.concatenate(
        [x_tok,
         jnp.zeros((B, hw, POS_EQK_LANE - C), jnp.float32),
         pos_proj], axis=-1)                             # (B, HW, 128) lane-dense

    inputs = [in_slab]
    in_specs = [_batch_spec(in_slab)]
    if has_mask:
        # Per-key additive bias (B, 1, HW): 0 for valid, -1e9 for padded keys.
        key_bias = jnp.where(mask.reshape(B, 1, hw), -1e9, 0.0).astype(jnp.float32)
        inputs.append(key_bias)
        in_specs.append(_batch_spec(key_bias))
    inputs += [params["w_slab"], params["c_slab"]]
    in_specs += [_whole_spec(params["w_slab"]), _whole_spec(params["c_slab"])]

    out = pl.pallas_call(
        partial(_detr_kernel, has_mask),
        out_shape=jax.ShapeDtypeStruct((B, NUM_QUERIES, OUT_PAD), jnp.float32),
        grid=(B,),
        in_specs=in_specs,
        out_specs=pl.BlockSpec((1, NUM_QUERIES, OUT_PAD), lambda b: (b, 0, 0)),
        scratch_shapes=[pltpu.VMEM((hw, D_MODEL), jnp.float32)],
        compiler_params=pltpu.CompilerParams(dimension_semantics=("parallel",)),
    )(*inputs)

    pred_logits = out[:, :, :N_CLS]
    pred_boxes = out[:, :, N_CLS:N_CLS + 4]
    return pred_logits, pred_boxes


# ------------------------- deterministic parameter init ----------------------
def init_params(key):
    keys = iter(jax.random.split(key, 40))

    def w(shape, scale=0.02):
        return (scale * jax.random.normal(next(keys), shape)).astype(jnp.float32)

    def zeros(s):
        return jnp.zeros(s, jnp.float32)

    def ones(s):
        return jnp.ones(s, jnp.float32)

    return dict(
        backbone_w=w((IN_CH, BACKBONE_CH)), backbone_b=zeros((1, BACKBONE_CH)),
        proj_w=w((BACKBONE_CH, D_MODEL)), proj_b=zeros((1, D_MODEL)),
        query_embed=w((NUM_QUERIES, D_MODEL), scale=1.0),
        # encoder layer
        e_wq=w((D_MODEL, D_MODEL)), e_bq=zeros((1, D_MODEL)),
        e_wk=w((D_MODEL, D_MODEL)), e_bk=zeros((1, D_MODEL)),
        e_wv=w((D_MODEL, D_MODEL)), e_bv=zeros((1, D_MODEL)),
        e_wo=w((D_MODEL, D_MODEL)), e_bo=zeros((1, D_MODEL)),
        e_ln1g=ones((1, D_MODEL)), e_ln1b=zeros((1, D_MODEL)),
        e_w1=w((D_MODEL, D_FF)), e_b1=zeros((1, D_FF)),
        e_w2=w((D_FF, D_MODEL)), e_b2=zeros((1, D_MODEL)),
        e_ln2g=ones((1, D_MODEL)), e_ln2b=zeros((1, D_MODEL)),
        # decoder self-attention (folds to a constant when tgt == 0)
        d_sa_wq=w((D_MODEL, D_MODEL)), d_sa_bq=zeros((1, D_MODEL)),
        d_sa_wk=w((D_MODEL, D_MODEL)), d_sa_bk=zeros((1, D_MODEL)),
        d_sa_wv=w((D_MODEL, D_MODEL)), d_sa_bv=zeros((1, D_MODEL)),
        d_sa_wo=w((D_MODEL, D_MODEL)), d_sa_bo=zeros((1, D_MODEL)),
        d_ln1g=ones((1, D_MODEL)), d_ln1b=zeros((1, D_MODEL)),
        # decoder cross-attention
        d_ca_wq=w((D_MODEL, D_MODEL)), d_ca_bq=zeros((1, D_MODEL)),
        d_ca_wk=w((D_MODEL, D_MODEL)), d_ca_bk=zeros((1, D_MODEL)),
        d_ca_wv=w((D_MODEL, D_MODEL)), d_ca_bv=zeros((1, D_MODEL)),
        d_ca_wo=w((D_MODEL, D_MODEL)), d_ca_bo=zeros((1, D_MODEL)),
        d_ln2g=ones((1, D_MODEL)), d_ln2b=zeros((1, D_MODEL)),
        # decoder FFN
        d_w1=w((D_MODEL, D_FF)), d_b1=zeros((1, D_FF)),
        d_w2=w((D_FF, D_MODEL)), d_b2=zeros((1, D_MODEL)),
        d_ln3g=ones((1, D_MODEL)), d_ln3b=zeros((1, D_MODEL)),
        # BitLinear heads (binarized once in pack_params)
        h_wc=w((D_MODEL, N_CLS)), h_bc=zeros((1, N_CLS)),
        h_w0=w((D_MODEL, D_MODEL)), h_b0=zeros((1, D_MODEL)),
        h_w1=w((D_MODEL, D_MODEL)), h_b1=zeros((1, D_MODEL)),
        h_w2=w((D_MODEL, 4)), h_b2=zeros((1, 4)),
    )


def pack_params(p):
    """One-time offline packing: fuse/scale weights, fold constants, build slabs."""
    f32 = jnp.float32
    scale = 1.0 / math.sqrt(D_HEAD)

    # attention scale folded into the Q projections (weights AND biases)
    e_wqkv = jnp.concatenate([p["e_wq"] * scale, p["e_wk"], p["e_wv"]], axis=1)
    e_bqkv = jnp.concatenate([p["e_bq"] * scale, p["e_bk"], p["e_bv"]], axis=1)
    d_ca_wkv = jnp.concatenate([p["d_ca_wk"], p["d_ca_wv"]], axis=1)
    d_ca_bkv = jnp.concatenate([p["d_ca_bk"], p["d_ca_bv"]], axis=1)

    # Decoder layer-0 self-attention with tgt == 0: every value row equals
    # d_sa_bv, so softmax(scores) @ V == d_sa_bv regardless of scores.
    # TODO(synk): fold only valid for 1 decoder layer with zero-initialized tgt.
    sa = p["d_sa_bv"] @ p["d_sa_wo"] + p["d_sa_bo"]                     # (1, D)
    mu = jnp.mean(sa, axis=-1, keepdims=True)
    xc = sa - mu
    var = jnp.mean(xc * xc, axis=-1, keepdims=True)
    tgt1 = xc * jax.lax.rsqrt(var + LN_EPS) * p["d_ln1g"] + p["d_ln1b"]  # (1, D)
    # constant, pre-scaled cross-attention queries
    q_dec = ((tgt1 + p["query_embed"]) @ p["d_ca_wq"] + p["d_ca_bq"]) * scale

    # BitNet-style sign-binarized head weights (precomputed once).
    def bitnet(wq):
        alpha = jnp.mean(wq)
        wc = wq - alpha
        beta = jnp.mean(jnp.abs(wc))
        return jnp.sign(wc) * beta

    h_wc = bitnet(p["h_wc"])
    h_w0 = bitnet(p["h_w0"])
    h_w1 = bitnet(p["h_w1"])
    h_w2 = bitnet(p["h_w2"])
    h_wc_pad = jnp.zeros((D_MODEL, OUT_PAD), f32).at[:, :N_CLS].set(h_wc)
    h_w2_pad = jnp.zeros((D_MODEL, OUT_PAD), f32).at[:, N_CLS:N_CLS + 4].set(h_w2)
    h_bout = (jnp.zeros((1, OUT_PAD), f32)
              .at[:, :N_CLS].set(p["h_bc"])
              .at[:, N_CLS:N_CLS + 4].set(p["h_b2"]))

    wmap = {
        "w_bb": p["backbone_w"], "w_pr": p["proj_w"],
        "e_wqkv": e_wqkv, "e_wo": p["e_wo"], "e_w1": p["e_w1"], "e_w2": p["e_w2"],
        "d_ca_wkv": d_ca_wkv, "d_ca_wo": p["d_ca_wo"],
        "d_w1": p["d_w1"], "d_w2": p["d_w2"],
        "h_w0": h_w0, "h_w1": h_w1, "h_wc": h_wc_pad, "h_w2": h_w2_pad,
    }
    w_slab = jnp.zeros((W_ROWS, 128), jnp.bfloat16)
    for name, (r, k, n) in _W_OFF.items():
        w_slab = w_slab.at[r:r + k, 0:n].set(wmap[name].astype(jnp.bfloat16))

    cmap = {
        "b_bb": p["backbone_b"], "b_pr": p["proj_b"],
        "e_bqkv": e_bqkv, "e_bo": p["e_bo"],
        "e_ln1g": p["e_ln1g"], "e_ln1b": p["e_ln1b"],
        "e_b1": p["e_b1"], "e_b2": p["e_b2"],
        "e_ln2g": p["e_ln2g"], "e_ln2b": p["e_ln2b"],
        "d_ca_bkv": d_ca_bkv, "d_ca_bo": p["d_ca_bo"],
        "d_ln2g": p["d_ln2g"], "d_ln2b": p["d_ln2b"],
        "d_b1": p["d_b1"], "d_b2": p["d_b2"],
        "d_ln3g": p["d_ln3g"], "d_ln3b": p["d_ln3b"],
        "h_b0": p["h_b0"], "h_b1": p["h_b1"],
        "h_bout": h_bout, "tgt1": tgt1, "q_dec": q_dec,
    }
    c_slab = jnp.zeros((C_ROWS, 128), f32)
    for name, (r, nr, nc) in _C_OFF.items():
        if name in cmap:
            c_slab = c_slab.at[r:r + nr, 0:nc].set(cmap[name])

    # f32 projection used by the wrapper to hoist pos @ W out of the kernel.
    pos_proj_w = jnp.concatenate(
        [e_wqkv[:, :2 * D_MODEL], d_ca_wkv[:, :D_MODEL]], axis=1)   # (D, 96)

    return {"w_slab": w_slab, "c_slab": c_slab, "pos_proj_w": pos_proj_w}


# ------------------------------------ main ------------------------------------
if __name__ == "__main__":
    key = jax.random.PRNGKey(0)
    pkey, xkey = jax.random.split(key)
    raw = init_params(pkey)
    params = pack_params(raw)
    x = jax.random.normal(xkey, (BATCH, IN_CH, H, W), dtype=jnp.float32)

    fwd = jax.jit(detr_forward)
    pred_logits, pred_boxes = fwd(params, x)
    jax.block_until_ready((pred_logits, pred_boxes))

    assert pred_logits.shape == (BATCH, NUM_QUERIES, N_CLS)
    assert pred_boxes.shape == (BATCH, NUM_QUERIES, 4)
    assert bool(jnp.all(jnp.isfinite(pred_logits)))
    assert bool(jnp.all((pred_boxes >= 0.0) & (pred_boxes <= 1.0)))
    print("KERNEL_OK")
</pallas_src>

<mosaic_0001>
module attributes {stable_mosaic.version = 11 : i64} {
  func.func @_detr_kernel(%arg0: i32, %arg1: memref<1x64x128xf32, #tpu.memory_space<vmem>>, %arg2: memref<480x128xbf16, #tpu.memory_space<vmem>>, %arg3: memref<32x128xf32, #tpu.memory_space<vmem>>, %arg4: memref<1x8x128xf32, #tpu.memory_space<vmem>>, %arg5: memref<64x32xf32, #tpu.memory_space<vmem>>) attributes {dimension_semantics = [#tpu.dimension_semantics<parallel>], iteration_bounds = array<i64: 2>, scalar_prefetch = 0 : i64, scratch_operands = 1 : i64, tpu.core_type = #tpu.core_type<tc>, window_params = [{transform_indices = @transform_0, window_bounds = array<i64: 1, 64, 128>}, {pipeline_mode = #tpu.pipeline_mode<synchronous>, transform_indices = @transform_1, window_bounds = array<i64: 480, 128>}, {pipeline_mode = #tpu.pipeline_mode<synchronous>, transform_indices = @transform_2, window_bounds = array<i64: 32, 128>}, {transform_indices = @transform_3, window_bounds = array<i64: 1, 8, 128>}]} {
    %c0 = arith.constant 0 : index
    %c0_0 = arith.constant 0 : index
    %0 = vector.load %arg3[%c0, %c0_0] : memref<32x128xf32, #tpu.memory_space<vmem>>, vector<32x128xf32>
    %c0_1 = arith.constant 0 : index
    %c0_2 = arith.constant 0 : index
    %c0_3 = arith.constant 0 : index
    %1 = vector.load %arg1[%c0_1, %c0_2, %c0_3] : memref<1x64x128xf32, #tpu.memory_space<vmem>>, vector<1x64x128xf32>
    %2 = vector.shape_cast %1 : vector<1x64x128xf32> to vector<64x128xf32>
    %3 = vector.extract_strided_slice %2 {offsets = [0, 0], sizes = [64, 4], strides = [1, 1]} : vector<64x128xf32> to vector<64x4xf32>
    %4 = vector.extract_strided_slice %2 {offsets = [0, 32], sizes = [64, 64], strides = [1, 1]} : vector<64x128xf32> to vector<64x64xf32>
    %5 = vector.extract_strided_slice %2 {offsets = [0, 96], sizes = [64, 32], strides = [1, 1]} : vector<64x128xf32> to vector<64x32xf32>
    %c0_4 = arith.constant 0 : index
    %c0_5 = arith.constant 0 : index
    %6 = vector.load %arg2[%c0_4, %c0_5] : memref<480x128xbf16, #tpu.memory_space<vmem>>, vector<4x16xbf16>
    %7 = vector.extract_strided_slice %0 {offsets = [0, 0], sizes = [1, 16], strides = [1, 1]} : vector<32x128xf32> to vector<1x16xf32>
    %8 = arith.truncf %3 : vector<64x4xf32> to vector<64x4xbf16>
    %cst = arith.constant dense<0.000000e+00> : vector<64x16xf32>
    %9 = tpu.matmul %8, %6, %cst {dimension_numbers = #tpu.dot_dimension_numbers<[1], [0], [0], [1], [0, 0, 1, 1], [], []>} : vector<64x4xbf16>, vector<4x16xbf16>, vector<64x16xf32> -> vector<64x16xf32>
    %10 = vector.broadcast %7 : vector<1x16xf32> to vector<64x16xf32>
    %11 = arith.addf %9, %10 : vector<64x16xf32>
    %cst_6 = arith.constant 0.000000e+00 : f32
    %12 = vector.broadcast %cst_6 : f32 to vector<64x16xf32>
    %13 = arith.maximumf %11, %12 : vector<64x16xf32>
    %c16 = arith.constant 16 : index
    %c0_7 = arith.constant 0 : index
    %14 = vector.load %arg2[%c16, %c0_7] : memref<480x128xbf16, #tpu.memory_space<vmem>>, vector<16x32xbf16>
    %15 = vector.extract_strided_slice %0 {offsets = [1, 0], sizes = [1, 32], strides = [1, 1]} : vector<32x128xf32> to vector<1x32xf32>
    %16 = arith.truncf %13 : vector<64x16xf32> to vector<64x16xbf16>
    %cst_8 = arith.constant dense<0.000000e+00> : vector<64x32xf32>
    %17 = tpu.matmul %16, %14, %cst_8 {dimension_numbers = #tpu.dot_dimension_numbers<[1], [0], [0], [1], [0, 0, 1, 1], [], []>} : vector<64x16xbf16>, vector<16x32xbf16>, vector<64x32xf32> -> vector<64x32xf32>
    %18 = vector.broadcast %15 : vector<1x32xf32> to vector<64x32xf32>
    %19 = arith.addf %17, %18 : vector<64x32xf32>
    %c32 = arith.constant 32 : index
    %c0_9 = arith.constant 0 : index
    %20 = vector.load %arg2[%c32, %c0_9] : memref<480x128xbf16, #tpu.memory_space<vmem>>, vector<32x96xbf16>
    %21 = vector.extract_strided_slice %0 {offsets = [2, 0], sizes = [1, 96], strides = [1, 1]} : vector<32x128xf32> to vector<1x96xf32>
    %22 = arith.truncf %19 : vector<64x32xf32> to vector<64x32xbf16>
    %cst_10 = arith.constant dense<0.000000e+00> : vector<64x96xf32>
    %23 = tpu.matmul %22, %20, %cst_10 {dimension_numbers = #tpu.dot_dimension_numbers<[1], [0], [0], [1], [0, 0, 1, 1], [], []>} : vector<64x32xbf16>, vector<32x96xbf16>, vector<64x96xf32> -> vector<64x96xf32>
    %24 = vector.broadcast %21 : vector<1x96xf32> to vector<64x96xf32>
    %25 = arith.addf %23, %24 : vector<64x96xf32>
    %26 = vector.extract_strided_slice %25 {offsets = [0, 0], sizes = [64, 64], strides = [1, 1]} : vector<64x96xf32> to vector<64x64xf32>
    %27 = arith.addf %26, %4 : vector<64x64xf32>
    %28 = vector.extract_strided_slice %27 {offsets = [0, 0], sizes = [64, 32], strides = [1, 1]} : vector<64x64xf32> to vector<64x32xf32>
    %29 = vector.extract_strided_slice %27 {offsets = [0, 32], sizes = [64, 32], strides = [1, 1]} : vector<64x64xf32> to vector<64x32xf32>
    %30 = vector.extract_strided_slice %25 {offsets = [0, 64], sizes = [64, 32], strides = [1, 1]} : vector<64x96xf32> to vector<64x32xf32>
    %31 = arith.truncf %28 : vector<64x32xf32> to vector<64x32xbf16>
    %32 = arith.truncf %29 : vector<64x32xf32> to vector<64x32xbf16>
    %33 = arith.truncf %30 : vector<64x32xf32> to vector<64x32xbf16>
    %34 = vector.extract_strided_slice %31 {offsets = [0, 0], sizes = [64, 8], strides = [1, 1]} : vector<64x32xbf16> to vector<64x8xbf16>
    %35 = vector.extract_strided_slice %32 {offsets = [0, 0], sizes = [64, 8], strides = [1, 1]} : vector<64x32xbf16> to vector<64x8xbf16>
    %cst_11 = arith.constant dense<0.000000e+00> : vector<64x64xf32>
    %36 = tpu.matmul %34, %35, %cst_11 {dimension_numbers = #tpu.dot_dimension_numbers<[1], [1], [0], [0], [0, 0, 1, 0], [], []>} : vector<64x8xbf16>, vector<64x8xbf16>, vector<64x64xf32> -> vector<64x64xf32>
    %37 = vector.extract_strided_slice %31 {offsets = [0, 8], sizes = [64, 8], strides = [1, 1]} : vector<64x32xbf16> to vector<64x8xbf16>
    %38 = vector.extract_strided_slice %32 {offsets = [0, 8], sizes = [64, 8], strides = [1, 1]} : vector<64x32xbf16> to vector<64x8xbf16>
    %cst_12 = arith.constant dense<0.000000e+00> : vector<64x64xf32>
    %39 = tpu.matmul %37, %38, %cst_12 {dimension_numbers = #tpu.dot_dimension_numbers<[1], [1], [0], [0], [0, 0, 1, 0], [], []>} : vector<64x8xbf16>, vector<64x8xbf16>, vector<64x64xf32> -> vector<64x64xf32>
    %40 = vector.extract_strided_slice %31 {offsets = [0, 16], sizes = [64, 8], strides = [1, 1]} : vector<64x32xbf16> to vector<64x8xbf16>
    %41 = vector.extract_strided_slice %32 {offsets = [0, 16], sizes = [64, 8], strides = [1, 1]} : vector<64x32xbf16> to vector<64x8xbf16>
    %cst_13 = arith.constant dense<0.000000e+00> : vector<64x64xf32>
    %42 = tpu.matmul %40, %41, %cst_13 {dimension_numbers = #tpu.dot_dimension_numbers<[1], [1], [0], [0], [0, 0, 1, 0], [], []>} : vector<64x8xbf16>, vector<64x8xbf16>, vector<64x64xf32> -> vector<64x64xf32>
    %43 = vector.extract_strided_slice %31 {offsets = [0, 24], sizes = [64, 8], strides = [1, 1]} : vector<64x32xbf16> to vector<64x8xbf16>
    %44 = vector.extract_strided_slice %32 {offsets = [0, 24], sizes = [64, 8], strides = [1, 1]} : vector<64x32xbf16> to vector<64x8xbf16>
    %cst_14 = arith.constant dense<0.000000e+00> : vector<64x64xf32>
    %45 = tpu.matmul %43, %44, %cst_14 {dimension_numbers = #tpu.dot_dimension_numbers<[1], [1], [0], [0], [0, 0, 1, 0], [], []>} : vector<64x8xbf16>, vector<64x8xbf16>, vector<64x64xf32> -> vector<64x64xf32>
    %46 = tpu.concatenate %36, %39, %42, %45 in 0 : vector<64x64xf32>, vector<64x64xf32>, vector<64x64xf32>, vector<64x64xf32> -> vector<256x64xf32>
    %cst_15 = arith.constant dense<0xFF800000> : vector<256xf32>
    %47 = vector.multi_reduction <maximumf>, %46, %cst_15 [1] : vector<256x64xf32> to vector<256xf32>
    %48 = vector.shape_cast %47 : vector<256xf32> to vector<256x1xf32>
    %49 = vector.broadcast %48 : vector<256x1xf32> to vector<256x64xf32>
    %50 = arith.subf %46, %49 : vector<256x64xf32>
    %51 = math.exp %50 : vector<256x64xf32>
    %cst_16 = arith.constant dense<0.000000e+00> : vector<256xf32>
    %52 = vector.multi_reduction <add>, %51, %cst_16 [1] : vector<256x64xf32> to vector<256xf32>
    %53 = vector.shape_cast %52 : vector<256xf32> to vector<256x1xf32>
    %54 = tpu.reciprocal %53 {approx = true} : vector<256x1xf32> -> vector<256x1xf32>
    %55 = vector.broadcast %54 : vector<256x1xf32> to vector<256x64xf32>
    %56 = arith.mulf %51, %55 : vector<256x64xf32>
    %57 = vector.extract_strided_slice %56 {offsets = [0, 0], sizes = [64, 64], strides = [1, 1]} : vector<256x64xf32> to vector<64x64xf32>
    %58 = arith.truncf %57 : vector<64x64xf32> to vector<64x64xbf16>
    %59 = vector.extract_strided_slice %33 {offsets = [0, 0], sizes = [64, 8], strides = [1, 1]} : vector<64x32xbf16> to vector<64x8xbf16>
    %cst_17 = arith.constant dense<0.000000e+00> : vector<64x8xf32>
    %60 = tpu.matmul %58, %59, %cst_17 {dimension_numbers = #tpu.dot_dimension_numbers<[1], [0], [0], [1], [0, 0, 1, 1], [], []>} : vector<64x64xbf16>, vector<64x8xbf16>, vector<64x8xf32> -> vector<64x8xf32>
    %c0_18 = arith.constant 0 : index
    %c0_19 = arith.constant 0 : index
    %61 = vector.load %arg5[%c0_18, %c0_19] : memref<64x32xf32, #tpu.memory_space<vmem>>, vector<64x8xf32>
    tpu.vector_store %arg5[%c0_18, %c0_19], %60 {strides = array<i32>} : memref<64x32xf32, #tpu.memory_space<vmem>>, vector<64x8xf32>,
    %62 = vector.extract_strided_slice %56 {offsets = [64, 0], sizes = [64, 64], strides = [1, 1]} : vector<256x64xf32> to vector<64x64xf32>
    %63 = arith.truncf %62 : vector<64x64xf32> to vector<64x64xbf16>
    %64 = vector.extract_strided_slice %33 {offsets = [0, 8], sizes = [64, 8], strides = [1, 1]} : vector<64x32xbf16> to vector<64x8xbf16>
    %cst_20 = arith.constant dense<0.000000e+00> : vector<64x8xf32>
    %65 = tpu.matmul %63, %64, %cst_20 {dimension_numbers = #tpu.dot_dimension_numbers<[1], [0], [0], [1], [0, 0, 1, 1], [], []>} : vector<64x64xbf16>, vector<64x8xbf16>, vector<64x8xf32> -> vector<64x8xf32>
    %c0_21 = arith.constant 0 : index
    %c8 = arith.constant 8 : index
    %66 = vector.load %arg5[%c0_21, %c8] : memref<64x32xf32, #tpu.memory_space<vmem>>, vector<64x8xf32>
    tpu.vector_store %arg5[%c0_21, %c8], %65 {strides = array<i32>} : memref<64x32xf32, #tpu.memory_space<vmem>>, vector<64x8xf32>,
    %67 = vector.extract_strided_slice %56 {offsets = [128, 0], sizes = [64, 64], strides = [1, 1]} : vector<256x64xf32> to vector<64x64xf32>
    %68 = arith.truncf %67 : vector<64x64xf32> to vector<64x64xbf16>
    %69 = vector.extract_strided_slice %33 {offsets = [0, 16], sizes = [64, 8], strides = [1, 1]} : vector<64x32xbf16> to vector<64x8xbf16>
    %cst_22 = arith.constant dense<0.000000e+00> : vector<64x8xf32>
    %70 = tpu.matmul %68, %69, %cst_22 {dimension_numbers = #tpu.dot_dimension_numbers<[1], [0], [0], [1], [0, 0, 1, 1], [], []>} : vector<64x64xbf16>, vector<64x8xbf16>, vector<64x8xf32> -> vector<64x8xf32>
    %c0_23 = arith.constant 0 : index
    %c16_24 = arith.constant 16 : index
    %71 = vector.load %arg5[%c0_23, %c16_24] : memref<64x32xf32, #tpu.memory_space<vmem>>, vector<64x8xf32>
    tpu.vector_store %arg5[%c0_23, %c16_24], %70 {strides = array<i32>} : memref<64x32xf32, #tpu.memory_space<vmem>>, vector<64x8xf32>,
    %72 = vector.extract_strided_slice %56 {offsets = [192, 0], sizes = [64, 64], strides = [1, 1]} : vector<256x64xf32> to vector<64x64xf32>
    %73 = arith.truncf %72 : vector<64x64xf32> to vector<64x64xbf16>
    %74 = vector.extract_strided_slice %33 {offsets = [0, 24], sizes = [64, 8], strides = [1, 1]} : vector<64x32xbf16> to vector<64x8xbf16>
    %cst_25 = arith.constant dense<0.000000e+00> : vector<64x8xf32>
    %75 = tpu.matmul %73, %74, %cst_25 {dimension_numbers = #tpu.dot_dimension_numbers<[1], [0], [0], [1], [0, 0, 1, 1], [], []>} : vector<64x64xbf16>, vector<64x8xbf16>, vector<64x8xf32> -> vector<64x8xf32>
    %c0_26 = arith.constant 0 : index
    %c24 = arith.constant 24 : index
    %76 = vector.load %arg5[%c0_26, %c24] : memref<64x32xf32, #tpu.memory_space<vmem>>, vector<64x8xf32>
    tpu.vector_store %arg5[%c0_26, %c24], %75 {strides = array<i32>} : memref<64x32xf32, #tpu.memory_space<vmem>>, vector<64x8xf32>,
    %c0_27 = arith.constant 0 : index
    %c0_28 = arith.constant 0 : index
    %77 = vector.load %arg5[%c0_27, %c0_28] : memref<64x32xf32, #tpu.memory_space<vmem>>, vector<64x32xf32>
    %c64 = arith.constant 64 : index
    %c0_29 = arith.constant 0 : index
    %78 = vector.load %arg2[%c64, %c0_29] : memref<480x128xbf16, #tpu.memory_space<vmem>>, vector<32x32xbf16>
    %79 = vector.extract_strided_slice %0 {offsets = [3, 0], sizes = [1, 32], strides = [1, 1]} : vector<32x128xf32> to vector<1x32xf32>
    %80 = arith.truncf %77 : vector<64x32xf32> to vector<64x32xbf16>
    %cst_30 = arith.constant dense<0.000000e+00> : vector<64x32xf32>
    %81 = tpu.matmul %80, %78, %cst_30 {dimension_numbers = #tpu.dot_dimension_numbers<[1], [0], [0], [1], [0, 0, 1, 1], [], []>} : vector<64x32xbf16>, vector<32x32xbf16>, vector<64x32xf32> -> vector<64x32xf32>
    %82 = vector.broadcast %79 : vector<1x32xf32> to vector<64x32xf32>
    %83 = arith.addf %81, %82 : vector<64x32xf32>
    %84 = arith.addf %19, %83 : vector<64x32xf32>
    %85 = vector.extract_strided_slice %0 {offsets = [4, 0], sizes = [1, 32], strides = [1, 1]} : vector<32x128xf32> to vector<1x32xf32>
    %86 = vector.extract_strided_slice %0 {offsets = [5, 0], sizes = [1, 32], strides = [1, 1]} : vector<32x128xf32> to vector<1x32xf32>
    %cst_31 = arith.constant dense<0.000000e+00> : vector<64xf32>
    %87 = vector.multi_reduction <add>, %84, %cst_31 [1] : vector<64x32xf32> to vector<64xf32>
    %88 = vector.shape_cast %87 : vector<64xf32> to vector<64x1xf32>
    %cst_32 = arith.constant 3.200000e+01 : f32
    %89 = vector.broadcast %cst_32 : f32 to vector<64x1xf32>
    %90 = arith.divf %88, %89 : vector<64x1xf32>
    %91 = vector.broadcast %90 : vector<64x1xf32> to vector<64x32xf32>
    %92 = arith.subf %84, %91 : vector<64x32xf32>
    %93 = arith.mulf %92, %92 : vector<64x32xf32>
    %cst_33 = arith.constant dense<0.000000e+00> : vector<64xf32>
    %94 = vector.multi_reduction <add>, %93, %cst_33 [1] : vector<64x32xf32> to vector<64xf32>
    %95 = vector.shape_cast %94 : vector<64xf32> to vector<64x1xf32>
    %cst_34 = arith.constant 3.200000e+01 : f32
    %96 = vector.broadcast %cst_34 : f32 to vector<64x1xf32>
    %97 = arith.divf %95, %96 : vector<64x1xf32>
    %cst_35 = arith.constant 9.99999974E-6 : f32
    %98 = vector.broadcast %cst_35 : f32 to vector<64x1xf32>
    %99 = arith.addf %97, %98 : vector<64x1xf32>
    %100 = math.rsqrt %99 : vector<64x1xf32>
    %101 = vector.broadcast %100 : vector<64x1xf32> to vector<64x32xf32>
    %102 = arith.mulf %92, %101 : vector<64x32xf32>
    %103 = vector.broadcast %85 : vector<1x32xf32> to vector<64x32xf32>
    %104 = arith.mulf %102, %103 : vector<64x32xf32>
    %105 = vector.broadcast %86 : vector<1x32xf32> to vector<64x32xf32>
    %106 = arith.addf %104, %105 : vector<64x32xf32>
    %c96 = arith.constant 96 : index
    %c0_36 = arith.constant 0 : index
    %107 = vector.load %arg2[%c96, %c0_36] : memref<480x128xbf16, #tpu.memory_space<vmem>>, vector<32x64xbf16>
    %108 = vector.extract_strided_slice %0 {offsets = [6, 0], sizes = [1, 64], strides = [1, 1]} : vector<32x128xf32> to vector<1x64xf32>
    %109 = arith.truncf %106 : vector<64x32xf32> to vector<64x32xbf16>
    %cst_37 = arith.constant dense<0.000000e+00> : vector<64x64xf32>
    %110 = tpu.matmul %109, %107, %cst_37 {dimension_numbers = #tpu.dot_dimension_numbers<[1], [0], [0], [1], [0, 0, 1, 1], [], []>} : vector<64x32xbf16>, vector<32x64xbf16>, vector<64x64xf32> -> vector<64x64xf32>
    %111 = vector.broadcast %108 : vector<1x64xf32> to vector<64x64xf32>
    %112 = arith.addf %110, %111 : vector<64x64xf32>
    %cst_38 = arith.constant 0.000000e+00 : f32
    %113 = vector.broadcast %cst_38 : f32 to vector<64x64xf32>
    %114 = arith.maximumf %112, %113 : vector<64x64xf32>
    %c128 = arith.constant 128 : index
    %c0_39 = arith.constant 0 : index
    %115 = vector.load %arg2[%c128, %c0_39] : memref<480x128xbf16, #tpu.memory_space<vmem>>, vector<64x32xbf16>
    %116 = vector.extract_strided_slice %0 {offsets = [7, 0], sizes = [1, 32], strides = [1, 1]} : vector<32x128xf32> to vector<1x32xf32>
    %117 = arith.truncf %114 : vector<64x64xf32> to vector<64x64xbf16>
    %cst_40 = arith.constant dense<0.000000e+00> : vector<64x32xf32>
    %118 = tpu.matmul %117, %115, %cst_40 {dimension_numbers = #tpu.dot_dimension_numbers<[1], [0], [0], [1], [0, 0, 1, 1], [], []>} : vector<64x64xbf16>, vector<64x32xbf16>, vector<64x32xf32> -> vector<64x32xf32>
    %119 = vector.broadcast %116 : vector<1x32xf32> to vector<64x32xf32>
    %120 = arith.addf %118, %119 : vector<64x32xf32>
    %121 = arith.addf %106, %120 : vector<64x32xf32>
    %122 = vector.extract_strided_slice %0 {offsets = [8, 0], sizes = [1, 32], strides = [1, 1]} : vector<32x128xf32> to vector<1x32xf32>
    %123 = vector.extract_strided_slice %0 {offsets = [9, 0], sizes = [1, 32], strides = [1, 1]} : vector<32x128xf32> to vector<1x32xf32>
    %cst_41 = arith.constant dense<0.000000e+00> : vector<64xf32>
    %124 = vector.multi_reduction <add>, %121, %cst_41 [1] : vector<64x32xf32> to vector<64xf32>
    %125 = vector.shape_cast %124 : vector<64xf32> to vector<64x1xf32>
    %cst_42 = arith.constant 3.200000e+01 : f32
    %126 = vector.broadcast %cst_42 : f32 to vector<64x1xf32>
    %127 = arith.divf %125, %126 : vector<64x1xf32>
    %128 = vector.broadcast %127 : vector<64x1xf32> to vector<64x32xf32>
    %129 = arith.subf %121, %128 : vector<64x32xf32>
    %130 = arith.mulf %129, %129 : vector<64x32xf32>
    %cst_43 = arith.constant dense<0.000000e+00> : vector<64xf32>
    %131 = vector.multi_reduction <add>, %130, %cst_43 [1] : vector<64x32xf32> to vector<64xf32>
    %132 = vector.shape_cast %131 : vector<64xf32> to vector<64x1xf32>
    %cst_44 = arith.constant 3.200000e+01 : f32
    %133 = vector.broadcast %cst_44 : f32 to vector<64x1xf32>
    %134 = arith.divf %132, %133 : vector<64x1xf32>
    %cst_45 = arith.constant 9.99999974E-6 : f32
    %135 = vector.broadcast %cst_45 : f32 to vector<64x1xf32>
    %136 = arith.addf %134, %135 : vector<64x1xf32>
    %137 = math.rsqrt %136 : vector<64x1xf32>
    %138 = vector.broadcast %137 : vector<64x1xf32> to vector<64x32xf32>
    %139 = arith.mulf %129, %138 : vector<64x32xf32>
    %140 = vector.broadcast %122 : vector<1x32xf32> to vector<64x32xf32>
    %141 = arith.mulf %139, %140 : vector<64x32xf32>
    %142 = vector.broadcast %123 : vector<1x32xf32> to vector<64x32xf32>
    %143 = arith.addf %141, %142 : vector<64x32xf32>
    %144 = vector.extract_strided_slice %0 {offsets = [21, 0], sizes = [1, 32], strides = [1, 1]} : vector<32x128xf32> to vector<1x32xf32>
    %c192 = arith.constant 192 : index
    %c0_46 = arith.constant 0 : index
    %145 = vector.load %arg2[%c192, %c0_46] : memref<480x128xbf16, #tpu.memory_space<vmem>>, vector<32x64xbf16>
    %146 = vector.extract_strided_slice %0 {offsets = [10, 0], sizes = [1, 64], strides = [1, 1]} : vector<32x128xf32> to vector<1x64xf32>
    %147 = arith.truncf %143 : vector<64x32xf32> to vector<64x32xbf16>
    %cst_47 = arith.constant dense<0.000000e+00> : vector<64x64xf32>
    %148 = tpu.matmul %147, %145, %cst_47 {dimension_numbers = #tpu.dot_dimension_numbers<[1], [0], [0], [1], [0, 0, 1, 1], [], []>} : vector<64x32xbf16>, vector<32x64xbf16>, vector<64x64xf32> -> vector<64x64xf32>
    %149 = vector.broadcast %146 : vector<1x64xf32> to vector<64x64xf32>
    %150 = arith.addf %148, %149 : vector<64x64xf32>
    %151 = vector.extract_strided_slice %150 {offsets = [0, 0], sizes = [64, 32], strides = [1, 1]} : vector<64x64xf32> to vector<64x32xf32>
    %152 = arith.addf %151, %5 : vector<64x32xf32>
    %153 = vector.extract_strided_slice %150 {offsets = [0, 32], sizes = [64, 32], strides = [1, 1]} : vector<64x64xf32> to vector<64x32xf32>
    %154 = vector.extract_strided_slice %0 {offsets = [24, 0], sizes = [8, 32], strides = [1, 1]} : vector<32x128xf32> to vector<8x32xf32>
    %155 = arith.truncf %154 : vector<8x32xf32> to vector<8x32xbf16>
    %156 = arith.truncf %152 : vector<64x32xf32> to vector<64x32xbf16>
    %157 = arith.truncf %153 : vector<64x32xf32> to vector<64x32xbf16>
    %158 = vector.extract_strided_slice %155 {offsets = [0, 0], sizes = [8, 8], strides = [1, 1]} : vector<8x32xbf16> to vector<8x8xbf16>
    %159 = vector.extract_strided_slice %156 {offsets = [0, 0], sizes = [64, 8], strides = [1, 1]} : vector<64x32xbf16> to vector<64x8xbf16>
    %cst_48 = arith.constant dense<0.000000e+00> : vector<8x64xf32>
    %160 = tpu.matmul %158, %159, %cst_48 {dimension_numbers = #tpu.dot_dimension_numbers<[1], [1], [0], [0], [0, 0, 1, 0], [], []>} : vector<8x8xbf16>, vector<64x8xbf16>, vector<8x64xf32> -> vector<8x64xf32>
    %161 = vector.extract_strided_slice %155 {offsets = [0, 8], sizes = [8, 8], strides = [1, 1]} : vector<8x32xbf16> to vector<8x8xbf16>
    %162 = vector.extract_strided_slice %156 {offsets = [0, 8], sizes = [64, 8], strides = [1, 1]} : vector<64x32xbf16> to vector<64x8xbf16>
    %cst_49 = arith.constant dense<0.000000e+00> : vector<8x64xf32>
    %163 = tpu.matmul %161, %162, %cst_49 {dimension_numbers = #tpu.dot_dimension_numbers<[1], [1], [0], [0], [0, 0, 1, 0], [], []>} : vector<8x8xbf16>, vector<64x8xbf16>, vector<8x64xf32> -> vector<8x64xf32>
    %164 = vector.extract_strided_slice %155 {offsets = [0, 16], sizes = [8, 8], strides = [1, 1]} : vector<8x32xbf16> to vector<8x8xbf16>
    %165 = vector.extract_strided_slice %156 {offsets = [0, 16], sizes = [64, 8], strides = [1, 1]} : vector<64x32xbf16> to vector<64x8xbf16>
    %cst_50 = arith.constant dense<0.000000e+00> : vector<8x64xf32>
    %166 = tpu.matmul %164, %165, %cst_50 {dimension_numbers = #tpu.dot_dimension_numbers<[1], [1], [0], [0], [0, 0, 1, 0], [], []>} : vector<8x8xbf16>, vector<64x8xbf16>, vector<8x64xf32> -> vector<8x64xf32>
    %167 = vector.extract_strided_slice %155 {offsets = [0, 24], sizes = [8, 8], strides = [1, 1]} : vector<8x32xbf16> to vector<8x8xbf16>
    %168 = vector.extract_strided_slice %156 {offsets = [0, 24], sizes = [64, 8], strides = [1, 1]} : vector<64x32xbf16> to vector<64x8xbf16>
    %cst_51 = arith.constant dense<0.000000e+00> : vector<8x64xf32>
    %169 = tpu.matmul %167, %168, %cst_51 {dimension_numbers = #tpu.dot_dimension_numbers<[1], [1], [0], [0], [0, 0, 1, 0], [], []>} : vector<8x8xbf16>, vector<64x8xbf16>, vector<8x64xf32> -> vector<8x64xf32>
    %170 = tpu.concatenate %160, %163, %166, %169 in 0 : vector<8x64xf32>, vector<8x64xf32>, vector<8x64xf32>, vector<8x64xf32> -> vector<32x64xf32>
    %cst_52 = arith.constant dense<0xFF800000> : vector<32xf32>
    %171 = vector.multi_reduction <maximumf>, %170, %cst_52 [1] : vector<32x64xf32> to vector<32xf32>
    %172 = vector.shape_cast %171 : vector<32xf32> to vector<32x1xf32>
    %173 = vector.broadcast %172 : vector<32x1xf32> to vector<32x64xf32>
    %174 = arith.subf %170, %173 : vector<32x64xf32>
    %175 = math.exp %174 : vector<32x64xf32>
    %cst_53 = arith.constant dense<0.000000e+00> : vector<32xf32>
    %176 = vector.multi_reduction <add>, %175, %cst_53 [1] : vector<32x64xf32> to vector<32xf32>
    %177 = vector.shape_cast %176 : vector<32xf32> to vector<32x1xf32>
    %178 = tpu.reciprocal %177 {approx = true} : vector<32x1xf32> -> vector<32x1xf32>
    %179 = vector.broadcast %178 : vector<32x1xf32> to vector<32x64xf32>
    %180 = arith.mulf %175, %179 : vector<32x64xf32>
    %181 = vector.extract_strided_slice %180 {offsets = [0, 0], sizes = [8, 64], strides = [1, 1]} : vector<32x64xf32> to vector<8x64xf32>
    %182 = arith.truncf %181 : vector<8x64xf32> to vector<8x64xbf16>
    %183 = vector.extract_strided_slice %157 {offsets = [0, 0], sizes = [64, 8], strides = [1, 1]} : vector<64x32xbf16> to vector<64x8xbf16>
    %cst_54 = arith.constant dense<0.000000e+00> : vector<8x8xf32>
    %184 = tpu.matmul %182, %183, %cst_54 {dimension_numbers = #tpu.dot_dimension_numbers<[1], [0], [0], [1], [0, 0, 1, 1], [], []>} : vector<8x64xbf16>, vector<64x8xbf16>, vector<8x8xf32> -> vector<8x8xf32>
    %c0_55 = arith.constant 0 : index
    %c0_56 = arith.constant 0 : index
    %185 = vector.load %arg5[%c0_55, %c0_56] : memref<64x32xf32, #tpu.memory_space<vmem>>, vector<8x8xf32>
    tpu.vector_store %arg5[%c0_55, %c0_56], %184 {strides = array<i32>} : memref<64x32xf32, #tpu.memory_space<vmem>>, vector<8x8xf32>,
    %186 = vector.extract_strided_slice %180 {offsets = [8, 0], sizes = [8, 64], strides = [1, 1]} : vector<32x64xf32> to vector<8x64xf32>
    %187 = arith.truncf %186 : vector<8x64xf32> to vector<8x64xbf16>
    %188 = vector.extract_strided_slice %157 {offsets = [0, 8], sizes = [64, 8], strides = [1, 1]} : vector<64x32xbf16> to vector<64x8xbf16>
    %cst_57 = arith.constant dense<0.000000e+00> : vector<8x8xf32>
    %189 = tpu.matmul %187, %188, %cst_57 {dimension_numbers = #tpu.dot_dimension_numbers<[1], [0], [0], [1], [0, 0, 1, 1], [], []>} : vector<8x64xbf16>, vector<64x8xbf16>, vector<8x8xf32> -> vector<8x8xf32>
    %c0_58 = arith.constant 0 : index
    %c8_59 = arith.constant 8 : index
    %190 = vector.load %arg5[%c0_58, %c8_59] : memref<64x32xf32, #tpu.memory_space<vmem>>, vector<8x8xf32>
    tpu.vector_store %arg5[%c0_58, %c8_59], %189 {strides = array<i32>} : memref<64x32xf32, #tpu.memory_space<vmem>>, vector<8x8xf32>,
    %191 = vector.extract_strided_slice %180 {offsets = [16, 0], sizes = [8, 64], strides = [1, 1]} : vector<32x64xf32> to vector<8x64xf32>
    %192 = arith.truncf %191 : vector<8x64xf32> to vector<8x64xbf16>
    %193 = vector.extract_strided_slice %157 {offsets = [0, 16], sizes = [64, 8], strides = [1, 1]} : vector<64x32xbf16> to vector<64x8xbf16>
    %cst_60 = arith.constant dense<0.000000e+00> : vector<8x8xf32>
    %194 = tpu.matmul %192, %193, %cst_60 {dimension_numbers = #tpu.dot_dimension_numbers<[1], [0], [0], [1], [0, 0, 1, 1], [], []>} : vector<8x64xbf16>, vector<64x8xbf16>, vector<8x8xf32> -> vector<8x8xf32>
    %c0_61 = arith.constant 0 : index
    %c16_62 = arith.constant 16 : index
    %195 = vector.load %arg5[%c0_61, %c16_62] : memref<64x32xf32, #tpu.memory_space<vmem>>, vector<8x8xf32>
    tpu.vector_store %arg5[%c0_61, %c16_62], %194 {strides = array<i32>} : memref<64x32xf32, #tpu.memory_space<vmem>>, vector<8x8xf32>,
    %196 = vector.extract_strided_slice %180 {offsets = [24, 0], sizes = [8, 64], strides = [1, 1]} : vector<32x64xf32> to vector<8x64xf32>
    %197 = arith.truncf %196 : vector<8x64xf32> to vector<8x64xbf16>
    %198 = vector.extract_strided_slice %157 {offsets = [0, 24], sizes = [64, 8], strides = [1, 1]} : vector<64x32xbf16> to vector<64x8xbf16>
    %cst_63 = arith.constant dense<0.000000e+00> : vector<8x8xf32>
    %199 = tpu.matmul %197, %198, %cst_63 {dimension_numbers = #tpu.dot_dimension_numbers<[1], [0], [0], [1], [0, 0, 1, 1], [], []>} : vector<8x64xbf16>, vector<64x8xbf16>, vector<8x8xf32> -> vector<8x8xf32>
    %c0_64 = arith.constant 0 : index
    %c24_65 = arith.constant 24 : index
    %200 = vector.load %arg5[%c0_64, %c24_65] : memref<64x32xf32, #tpu.memory_space<vmem>>, vector<8x8xf32>
    tpu.vector_store %arg5[%c0_64, %c24_65], %199 {strides = array<i32>} : memref<64x32xf32, #tpu.memory_space<vmem>>, vector<8x8xf32>,
    %c0_66 = arith.constant 0 : index
    %c0_67 = arith.constant 0 : index
    %201 = vector.load %arg5[%c0_66, %c0_67] : memref<64x32xf32, #tpu.memory_space<vmem>>, vector<8x32xf32>
    %c224 = arith.constant 224 : index
    %c0_68 = arith.constant 0 : index
    %202 = vector.load %arg2[%c224, %c0_68] : memref<480x128xbf16, #tpu.memory_space<vmem>>, vector<32x32xbf16>
    %203 = vector.extract_strided_slice %0 {offsets = [11, 0], sizes = [1, 32], strides = [1, 1]} : vector<32x128xf32> to vector<1x32xf32>
    %204 = arith.truncf %201 : vector<8x32xf32> to vector<8x32xbf16>
    %cst_69 = arith.constant dense<0.000000e+00> : vector<8x32xf32>
    %205 = tpu.matmul %204, %202, %cst_69 {dimension_numbers = #tpu.dot_dimension_numbers<[1], [0], [0], [1], [0, 0, 1, 1], [], []>} : vector<8x32xbf16>, vector<32x32xbf16>, vector<8x32xf32> -> vector<8x32xf32>
    %206 = vector.broadcast %203 : vector<1x32xf32> to vector<8x32xf32>
    %207 = arith.addf %205, %206 : vector<8x32xf32>
    %208 = vector.broadcast %144 : vector<1x32xf32> to vector<8x32xf32>
    %209 = arith.addf %208, %207 : vector<8x32xf32>
    %210 = vector.extract_strided_slice %0 {offsets = [12, 0], sizes = [1, 32], strides = [1, 1]} : vector<32x128xf32> to vector<1x32xf32>
    %211 = vector.extract_strided_slice %0 {offsets = [13, 0], sizes = [1, 32], strides = [1, 1]} : vector<32x128xf32> to vector<1x32xf32>
    %cst_70 = arith.constant dense<0.000000e+00> : vector<8xf32>
    %212 = vector.multi_reduction <add>, %209, %cst_70 [1] : vector<8x32xf32> to vector<8xf32>
    %213 = vector.shape_cast %212 : vector<8xf32> to vector<8x1xf32>
    %cst_71 = arith.constant 3.200000e+01 : f32
    %214 = vector.broadcast %cst_71 : f32 to vector<8x1xf32>
    %215 = arith.divf %213, %214 : vector<8x1xf32>
    %216 = vector.broadcast %215 : vector<8x1xf32> to vector<8x32xf32>
    %217 = arith.subf %209, %216 : vector<8x32xf32>
    %218 = arith.mulf %217, %217 : vector<8x32xf32>
    %cst_72 = arith.constant dense<0.000000e+00> : vector<8xf32>
    %219 = vector.multi_reduction <add>, %218, %cst_72 [1] : vector<8x32xf32> to vector<8xf32>
    %220 = vector.shape_cast %219 : vector<8xf32> to vector<8x1xf32>
    %cst_73 = arith.constant 3.200000e+01 : f32
    %221 = vector.broadcast %cst_73 : f32 to vector<8x1xf32>
    %222 = arith.divf %220, %221 : vector<8x1xf32>
    %cst_74 = arith.constant 9.99999974E-6 : f32
    %223 = vector.broadcast %cst_74 : f32 to vector<8x1xf32>
    %224 = arith.addf %222, %223 : vector<8x1xf32>
    %225 = math.rsqrt %224 : vector<8x1xf32>
    %226 = vector.broadcast %225 : vector<8x1xf32> to vector<8x32xf32>
    %227 = arith.mulf %217, %226 : vector<8x32xf32>
    %228 = vector.broadcast %210 : vector<1x32xf32> to vector<8x32xf32>
    %229 = arith.mulf %227, %228 : vector<8x32xf32>
    %230 = vector.broadcast %211 : vector<1x32xf32> to vector<8x32xf32>
    %231 = arith.addf %229, %230 : vector<8x32xf32>
    %c256 = arith.constant 256 : index
    %c0_75 = arith.constant 0 : index
    %232 = vector.load %arg2[%c256, %c0_75] : memref<480x128xbf16, #tpu.memory_space<vmem>>, vector<32x64xbf16>
    %233 = vector.extract_strided_slice %0 {offsets = [14, 0], sizes = [1, 64], strides = [1, 1]} : vector<32x128xf32> to vector<1x64xf32>
    %234 = arith.truncf %231 : vector<8x32xf32> to vector<8x32xbf16>
    %cst_76 = arith.constant dense<0.000000e+00> : vector<8x64xf32>
    %235 = tpu.matmul %234, %232, %cst_76 {dimension_numbers = #tpu.dot_dimension_numbers<[1], [0], [0], [1], [0, 0, 1, 1], [], []>} : vector<8x32xbf16>, vector<32x64xbf16>, vector<8x64xf32> -> vector<8x64xf32>
    %236 = vector.broadcast %233 : vector<1x64xf32> to vector<8x64xf32>
    %237 = arith.addf %235, %236 : vector<8x64xf32>
    %cst_77 = arith.constant 0.000000e+00 : f32
    %238 = vector.broadcast %cst_77 : f32 to vector<8x64xf32>
    %239 = arith.maximumf %237, %238 : vector<8x64xf32>
    %c288 = arith.constant 288 : index
    %c0_78 = arith.constant 0 : index
    %240 = vector.load %arg2[%c288, %c0_78] : memref<480x128xbf16, #tpu.memory_space<vmem>>, vector<64x32xbf16>
    %241 = vector.extract_strided_slice %0 {offsets = [15, 0], sizes = [1, 32], strides = [1, 1]} : vector<32x128xf32> to vector<1x32xf32>
    %242 = arith.truncf %239 : vector<8x64xf32> to vector<8x64xbf16>
    %cst_79 = arith.constant dense<0.000000e+00> : vector<8x32xf32>
    %243 = tpu.matmul %242, %240, %cst_79 {dimension_numbers = #tpu.dot_dimension_numbers<[1], [0], [0], [1], [0, 0, 1, 1], [], []>} : vector<8x64xbf16>, vector<64x32xbf16>, vector<8x32xf32> -> vector<8x32xf32>
    %244 = vector.broadcast %241 : vector<1x32xf32> to vector<8x32xf32>
    %245 = arith.addf %243, %244 : vector<8x32xf32>
    %246 = arith.addf %231, %245 : vector<8x32xf32>
    %247 = vector.extract_strided_slice %0 {offsets = [16, 0], sizes = [1, 32], strides = [1, 1]} : vector<32x128xf32> to vector<1x32xf32>
    %248 = vector.extract_strided_slice %0 {offsets = [17, 0], sizes = [1, 32], strides = [1, 1]} : vector<32x128xf32> to vector<1x32xf32>
    %cst_80 = arith.constant dense<0.000000e+00> : vector<8xf32>
    %249 = vector.multi_reduction <add>, %246, %cst_80 [1] : vector<8x32xf32> to vector<8xf32>
    %250 = vector.shape_cast %249 : vector<8xf32> to vector<8x1xf32>
    %cst_81 = arith.constant 3.200000e+01 : f32
    %251 = vector.broadcast %cst_81 : f32 to vector<8x1xf32>
    %252 = arith.divf %250, %251 : vector<8x1xf32>
    %253 = vector.broadcast %252 : vector<8x1xf32> to vector<8x32xf32>
    %254 = arith.subf %246, %253 : vector<8x32xf32>
    %255 = arith.mulf %254, %254 : vector<8x32xf32>
    %cst_82 = arith.constant dense<0.000000e+00> : vector<8xf32>
    %256 = vector.multi_reduction <add>, %255, %cst_82 [1] : vector<8x32xf32> to vector<8xf32>
    %257 = vector.shape_cast %256 : vector<8xf32> to vector<8x1xf32>
    %cst_83 = arith.constant 3.200000e+01 : f32
    %258 = vector.broadcast %cst_83 : f32 to vector<8x1xf32>
    %259 = arith.divf %257, %258 : vector<8x1xf32>
    %cst_84 = arith.constant 9.99999974E-6 : f32
    %260 = vector.broadcast %cst_84 : f32 to vector<8x1xf32>
    %261 = arith.addf %259, %260 : vector<8x1xf32>
    %262 = math.rsqrt %261 : vector<8x1xf32>
    %263 = vector.broadcast %262 : vector<8x1xf32> to vector<8x32xf32>
    %264 = arith.mulf %254, %263 : vector<8x32xf32>
    %265 = vector.broadcast %247 : vector<1x32xf32> to vector<8x32xf32>
    %266 = arith.mulf %264, %265 : vector<8x32xf32>
    %267 = vector.broadcast %248 : vector<1x32xf32> to vector<8x32xf32>
    %268 = arith.addf %266, %267 : vector<8x32xf32>
    %c352 = arith.constant 352 : index
    %c0_85 = arith.constant 0 : index
    %269 = vector.load %arg2[%c352, %c0_85] : memref<480x128xbf16, #tpu.memory_space<vmem>>, vector<32x32xbf16>
    %270 = vector.extract_strided_slice %0 {offsets = [18, 0], sizes = [1, 32], strides = [1, 1]} : vector<32x128xf32> to vector<1x32xf32>
    %271 = arith.truncf %268 : vector<8x32xf32> to vector<8x32xbf16>
    %cst_86 = arith.constant dense<0.000000e+00> : vector<8x32xf32>
    %272 = tpu.matmul %271, %269, %cst_86 {dimension_numbers = #tpu.dot_dimension_numbers<[1], [0], [0], [1], [0, 0, 1, 1], [], []>} : vector<8x32xbf16>, vector<32x32xbf16>, vector<8x32xf32> -> vector<8x32xf32>
    %273 = vector.broadcast %270 : vector<1x32xf32> to vector<8x32xf32>
    %274 = arith.addf %272, %273 : vector<8x32xf32>
    %cst_87 = arith.constant 0.000000e+00 : f32
    %275 = vector.broadcast %cst_87 : f32 to vector<8x32xf32>
    %276 = arith.maximumf %274, %275 : vector<8x32xf32>
    %c384 = arith.constant 384 : index
    %c0_88 = arith.constant 0 : index
    %277 = vector.load %arg2[%c384, %c0_88] : memref<480x128xbf16, #tpu.memory_space<vmem>>, vector<32x32xbf16>
    %278 = vector.extract_strided_slice %0 {offsets = [19, 0], sizes = [1, 32], strides = [1, 1]} : vector<32x128xf32> to vector<1x32xf32>
    %279 = arith.truncf %276 : vector<8x32xf32> to vector<8x32xbf16>
    %cst_89 = arith.constant dense<0.000000e+00> : vector<8x32xf32>
    %280 = tpu.matmul %279, %277, %cst_89 {dimension_numbers = #tpu.dot_dimension_numbers<[1], [0], [0], [1], [0, 0, 1, 1], [], []>} : vector<8x32xbf16>, vector<32x32xbf16>, vector<8x32xf32> -> vector<8x32xf32>
    %281 = vector.broadcast %278 : vector<1x32xf32> to vector<8x32xf32>
    %282 = arith.addf %280, %281 : vector<8x32xf32>
    %cst_90 = arith.constant 0.000000e+00 : f32
    %283 = vector.broadcast %cst_90 : f32 to vector<8x32xf32>
    %284 = arith.maximumf %282, %283 : vector<8x32xf32>
    %c416 = arith.constant 416 : index
    %c0_91 = arith.constant 0 : index
    %285 = vector.load %arg2[%c416, %c0_91] : memref<480x128xbf16, #tpu.memory_space<vmem>>, vector<32x128xbf16>
    %286 = arith.truncf %268 : vector<8x32xf32> to vector<8x32xbf16>
    %cst_92 = arith.constant dense<0.000000e+00> : vector<8x128xf32>
    %287 = tpu.matmul %286, %285, %cst_92 {dimension_numbers = #tpu.dot_dimension_numbers<[1], [0], [0], [1], [0, 0, 1, 1], [], []>} : vector<8x32xbf16>, vector<32x128xbf16>, vector<8x128xf32> -> vector<8x128xf32>
    %c448 = arith.constant 448 : index
    %c0_93 = arith.constant 0 : index
    %288 = vector.load %arg2[%c448, %c0_93] : memref<480x128xbf16, #tpu.memory_space<vmem>>, vector<32x128xbf16>
    %289 = arith.truncf %284 : vector<8x32xf32> to vector<8x32xbf16>
    %cst_94 = arith.constant dense<0.000000e+00> : vector<8x128xf32>
    %290 = tpu.matmul %289, %288, %cst_94 {dimension_numbers = #tpu.dot_dimension_numbers<[1], [0], [0], [1], [0, 0, 1, 1], [], []>} : vector<8x32xbf16>, vector<32x128xbf16>, vector<8x128xf32> -> vector<8x128xf32>
    %291 = arith.addf %287, %290 : vector<8x128xf32>
    %292 = vector.extract_strided_slice %0 {offsets = [20, 0], sizes = [1, 128], strides = [1, 1]} : vector<32x128xf32> to vector<1x128xf32>
    %293 = vector.broadcast %292 : vector<1x128xf32> to vector<8x128xf32>
    %294 = arith.addf %291, %293 : vector<8x128xf32>
    %295 = tpu.iota {dimensions = array<i32: 1>} : vector<8x128xi32>
    %c6_i32 = arith.constant 6 : i32
    %296 = vector.broadcast %c6_i32 : i32 to vector<8x128xi32>
    %297 = arith.cmpi sge, %295, %296 : vector<8x128xi32>
    %c10_i32 = arith.constant 10 : i32
    %298 = vector.broadcast %c10_i32 : i32 to vector<8x128xi32>
    %299 = arith.cmpi slt, %295, %298 : vector<8x128xi32>
    %300 = arith.andi %297, %299 : vector<8x128xi1>
    %301 = arith.negf %294 : vector<8x128xf32>
    %302 = math.exp %301 : vector<8x128xf32>
    %cst_95 = arith.constant 1.000000e+00 : f32
    %303 = vector.broadcast %cst_95 : f32 to vector<8x128xf32>
    %304 = arith.addf %303, %302 : vector<8x128xf32>
    %305 = arith.divf %303, %304 : vector<8x128xf32>
    %306 = arith.select %300, %305, %294 : vector<8x128xi1>, vector<8x128xf32>
    %c0_96 = arith.constant 0 : index
    %c0_97 = arith.constant 0 : index
    %c0_98 = arith.constant 0 : index
    %307 = vector.load %arg4[%c0_96, %c0_97, %c0_98] : memref<1x8x128xf32, #tpu.memory_space<vmem>>, vector<1x8x128xf32>
    %308 = vector.shape_cast %307 : vector<1x8x128xf32> to vector<8x128xf32>
    %309 = vector.shape_cast %306 : vector<8x128xf32> to vector<1x8x128xf32>
    tpu.vector_store %arg4[%c0_96, %c0_97, %c0_98], %309 {strides = array<i32>} : memref<1x8x128xf32, #tpu.memory_space<vmem>>, vector<1x8x128xf32>,
    return
  }
  func.func @transform_0(%arg0: i32) -> (i32, i32, i32) {
    %c0_i32 = arith.constant 0 : i32
    %c0_i32_0 = arith.constant 0 : i32
    %c0_i32_1 = arith.constant 0 : i32
    return %arg0, %c0_i32, %c0_i32_0 : i32, i32, i32
  }
  func.func @transform_1(%arg0: i32) -> (i32, i32) {
    %c0_i32 = arith.constant 0 : i32
    %c0_i32_0 = arith.constant 0 : i32
    %c0_i32_1 = arith.constant 0 : i32
    return %c0_i32, %c0_i32_0 : i32, i32
  }
  func.func @transform_2(%arg0: i32) -> (i32, i32) {
    %c0_i32 = arith.constant 0 : i32
    %c0_i32_0 = arith.constant 0 : i32
    %c0_i32_1 = arith.constant 0 : i32
    return %c0_i32, %c0_i32_0 : i32, i32
  }
  func.func @transform_3(%arg0: i32) -> (i32, i32, i32) {
    %c0_i32 = arith.constant 0 : i32
    %c0_i32_0 = arith.constant 0 : i32
    %c0_i32_1 = arith.constant 0 : i32
    return %arg0, %c0_i32, %c0_i32_0 : i32, i32, i32
  }
}

</mosaic_0001>

<llo_original>
// kernel: detr_forward.1
$region0: #{detr_forward.1}
  #allocation0 [shape = 'u32[]', space=smem, size = 0x4, offset = 0x4, fixed_abs, tag = 'smem constant byte address 0x4 - core index']
  #allocation1 [shape = 'u32[144,128]{1,0:T(1,128)}', space=vmem, size = 0x12000, scoped, tag = 'internal scratch']
  #allocation2 [shape = 'f32[64,32]{1,0:T(8,128)}', space=vmem, size = 0x8000, scoped, tag = 'scratch operand']
  %s0 = inlined_call_operand.vmem [shape: f32[2,64,128], index: 0, kind: input, shape index: {}]
  %s1 = inlined_call_operand.vmem [shape: bf16[480,128], index: 1, kind: input, shape index: {}]
  %s2 = inlined_call_operand.vmem [shape: f32[32,128], index: 2, kind: input, shape index: {}]
  %s3 = inlined_call_operand.vmem [shape: f32[2,8,128], index: 3, kind: output, shape index: {}]
  %s4 = sld [smem:[#allocation0]]
  $region45: #{detr_forward.1} parent=0
    _
  %s6 = ssub.s32 1, %s4
  %s7 = scalar_select 0, %s6, %s4
  loop: start=0, step=1, limit=4
  $region2: #{detr_forward.1} parent=0 // loop_pre_header
    _
  $region3: #{detr_forward.1} parent=0 // loop_header
    %s9 = sphi 0, %s13
    %p10 = scmp.ge.s32.totalorder %s9, 4
    %s19 = sphi 0, %s21
    %s22 = sphi 0, %s19
    %s23 = sphi 0, %s22
    %s39 = sphi 0, %s23
    %s43 = sphi 0, %s43
    %s45 = sphi 0, %s43
    %s46 = sphi 0, %s45
    %s60 = sphi 0, %s46
    %s64 = sphi 0, %s64
    %s66 = sphi 0, %s64
    %s67 = sphi 0, %s66
    %s81 = sphi 0, %s67
    %s87 = sphi 0, %s89
    %s90 = sphi 0, %s87
    %s91 = sphi 0, %s90
    %s107 = sphi 0, %s91
  $region4: #{detr_forward.1} parent=0 // loop_header_branch
    %12 = sbr.rel (%p10) target = $region8
  $region5: #{detr_forward.1} parent=0 // loop_body
    %s14 = ssub.s32 %s9, 1
    %s15 = ssub.s32 %s9, 2
    %s16 = sadd.s32 %s9, 1
    %s17 = ssub.s32 %s9, %s16
    %p18 = scmp.eq.s32.totalorder %s17, 0
    %s20 = sadd.s32 %s19, 1
    %s21 = scalar_select %p18, %s19, %s20
    %p24 = pneg %p18
    %p25 = scmp.eq.s32.totalorder %s9, 1
    %p26 = por %p24, %p25
    %p27 = scmp.ne.s32.totalorder %s19, %s22
    %p28 = scmp.eq.s32.totalorder %s9, 0
    %p29 = por %p27, %p28
    %p30 = scmp.ne.s32.totalorder %s19, %s22
    %p31 = scmp.eq.s32.totalorder %s14, 1
    %p32 = por %p30, %p31
    %p33 = scmp.ne.s32.totalorder %s22, %s23
    %p34 = scmp.eq.s32.totalorder %s14, 0
    %p35 = por %p33, %p34
    %p36 = scmp.ne.s32.totalorder %s22, %s23
    %p37 = scmp.eq.s32.totalorder %s15, 1
    %p38 = por %p36, %p37
    %p40 = scmp.ne.s32.totalorder %s23, %s39
    %p41 = scmp.eq.s32.totalorder %s15, 0
    %p42 = por %p40, %p41
    %s44 = sadd.s32 %s43, 1
    %p47 = scmp.eq.s32.totalorder %s9, 1
    %p48 = scmp.ne.s32.totalorder %s43, %s45
    %p49 = scmp.eq.s32.totalorder %s9, 0
    %p50 = por %p48, %p49
    %p51 = scmp.ne.s32.totalorder %s43, %s45
    %p52 = scmp.eq.s32.totalorder %s14, 1
    %p53 = por %p51, %p52
    %p54 = scmp.ne.s32.totalorder %s45, %s46
    %p55 = scmp.eq.s32.totalorder %s14, 0
    %p56 = por %p54, %p55
    %p57 = scmp.ne.s32.totalorder %s45, %s46
    %p58 = scmp.eq.s32.totalorder %s15, 1
    %p59 = por %p57, %p58
    %p61 = scmp.ne.s32.totalorder %s46, %s60
    %p62 = scmp.eq.s32.totalorder %s15, 0
    %p63 = por %p61, %p62
    %s65 = sadd.s32 %s64, 1
    %p68 = scmp.eq.s32.totalorder %s9, 1
    %p69 = scmp.ne.s32.totalorder %s64, %s66
    %p70 = scmp.eq.s32.totalorder %s9, 0
    %p71 = por %p69, %p70
    %p72 = scmp.ne.s32.totalorder %s64, %s66
    %p73 = scmp.eq.s32.totalorder %s14, 1
    %p74 = por %p72, %p73
    %p75 = scmp.ne.s32.totalorder %s66, %s67
    %p76 = scmp.eq.s32.totalorder %s14, 0
    %p77 = por %p75, %p76
    %p78 = scmp.ne.s32.totalorder %s66, %s67
    %p79 = scmp.eq.s32.totalorder %s15, 1
    %p80 = por %p78, %p79
    %p82 = scmp.ne.s32.totalorder %s67, %s81
    %p83 = scmp.eq.s32.totalorder %s15, 0
    %p84 = por %p82, %p83
    %s85 = ssub.s32 %s9, %s16
    %p86 = scmp.eq.s32.totalorder %s85, 0
    %s88 = sadd.s32 %s87, 1
    %s89 = scalar_select %p86, %s87, %s88
    %p92 = pneg %p86
    %p93 = scmp.eq.s32.totalorder %s9, 1
    %p94 = por %p92, %p93
    %p95 = scmp.ne.s32.totalorder %s87, %s90
    %p96 = scmp.eq.s32.totalorder %s9, 0
    %p97 = por %p95, %p96
    %p98 = scmp.ne.s32.totalorder %s87, %s90
    %p99 = scmp.eq.s32.totalorder %s14, 1
    %p100 = por %p98, %p99
    %p101 = scmp.ne.s32.totalorder %s90, %s91
    %p102 = scmp.eq.s32.totalorder %s14, 0
    %p103 = por %p101, %p102
    %p104 = scmp.ne.s32.totalorder %s90, %s91
    %p105 = scmp.eq.s32.totalorder %s15, 1
    %p106 = por %p104, %p105
    %p108 = scmp.ne.s32.totalorder %s91, %s107
    %p109 = scmp.eq.s32.totalorder %s15, 0
    %p110 = por %p108, %p109
    %p111 = scmp.le.s32.totalorder 1, %s9
    %p112 = scmp.lt.s32.totalorder %s9, 3
    %p113 = pnand %p111, %p112
    %p114 = pneg %p113
    // Predicated region
    $region9: #{detr_forward.1} parent=5 // pred_check
      _
    $region10: #{detr_forward.1} parent=5 // pred_check_branch
      %116 = sbr.rel (%p113) target = $region12
    $region11: #{detr_forward.1} parent=5 // pred_region
      %s117 = ssub.s32 %s9, 1
      // Predicated region
      $region13: #{detr_forward.1} parent=11 // pred_check
        %p118 = pneg %p56
      $region14: #{detr_forward.1} parent=11 // pred_check_branch
        %120 = sbr.rel (%p118) target = $region16
      $region15: #{detr_forward.1} parent=11 // pred_region
        _
      $region16: #{detr_forward.1} parent=11 // pred_fallthru
        _
      // Predicated region
      $region17: #{detr_forward.1} parent=11 // pred_check
        %p121 = pneg %p77
      $region18: #{detr_forward.1} parent=11 // pred_check_branch
        %123 = sbr.rel (%p121) target = $region20
      $region19: #{detr_forward.1} parent=11 // pred_region
        _
      $region20: #{detr_forward.1} parent=11 // pred_fallthru
        _
    $region12: #{detr_forward.1} parent=5 // pred_fallthru
      _
    %p124 = scmp.lt.s32.totalorder %s9, 2
    // Predicated region
    $region21: #{detr_forward.1} parent=5 // pred_check
      %p125 = pneg %p124
    $region22: #{detr_forward.1} parent=5 // pred_check_branch
      %127 = sbr.rel (%p125) target = $region24
    $region23: #{detr_forward.1} parent=5 // pred_region
      // Predicated region
      $region25: #{detr_forward.1} parent=23 // pred_check
        %p128 = pneg %p29
      $region26: #{detr_forward.1} parent=23 // pred_check_branch
        %130 = sbr.rel (%p128) target = $region28
      $region27: #{detr_forward.1} parent=23 // pred_region
        %p131 = scmp.lt.s32.totalorder %s9, 1
        %s132 = scalar_select %p131, %s9, 1
        %s133 = smul.addr %s132, 8
        %s134 = smul.addr %s133, 8
        %s135 = scalar_lea.vmem %s0, %s134
      $region28: #{detr_forward.1} parent=23 // pred_fallthru
        _
    $region24: #{detr_forward.1} parent=5 // pred_fallthru
      _
    %p136 = scmp.le.s32.totalorder 1, %s9
    %p137 = scmp.lt.s32.totalorder %s9, 3
    %p138 = pnand %p136, %p137
    %p139 = pneg %p138
    // Predicated region
    $region29: #{detr_forward.1} parent=5 // pred_check
      _
    $region30: #{detr_forward.1} parent=5 // pred_check_branch
      %141 = sbr.rel (%p138) target = $region32
    $region31: #{detr_forward.1} parent=5 // pred_region
      %s142 = ssub.s32 %s9, 1
      %p143 = scmp.lt.s32.totalorder %s14, 1
      %s144 = scalar_select %p143, %s14, 1
      %s145 = smul.addr %s144, 8
      %s146 = smul.addr %s145, 8
      %s147 = scalar_lea.vmem %s0, %s146
      %p148 = pneg %p35
      %p149 = pneg %p32
      %p150 = pneg %p56
      %p151 = pneg %p53
      %p152 = pneg %p77
      %p153 = pneg %p74
      %p154 = pneg %p103
      %p155 = pneg %p100
      %p156 = scmp.lt.s32.totalorder %s14, 1
      %s157 = scalar_select %p156, %s14, 1
      %s158 = smul.addr %s157, 8
      %s159 = scalar_lea.vmem %s3, %s158
      %p160 = scmp.lt.s32.totalorder %s14, 1
      %s161 = scalar_select %p160, %s14, 1
      %s162 = smul.addr %s161, 8
      %s163 = smul.addr %s162, 8
      %s164 = scalar_lea.vmem %s0, %s163
      %p165 = scmp.lt.s32.totalorder %s14, 1
      %s166 = scalar_select %p165, %s14, 1
      %s167 = smul.addr %s166, 8
      %s168 = scalar_lea.vmem %s3, %s167
      %v170 = vld [vmem:[%s2] sm:$0xff]
      %v171 = vld [vmem:[%s2 + $0x8] sm:$0xff]
      %v172 = vld [vmem:[%s2 + $0x10] sm:$0xff]
      %v173 = vld [vmem:[%s2 + $0x18] sm:$0xff]
      %v174 = vld [vmem:[%s164] sm:$0xff]
      %v175 = vld [vmem:[%s164 + $0x8] sm:$0xff]
      %v176 = vld [vmem:[%s164 + $0x10] sm:$0xff]
      %v177 = vld [vmem:[%s164 + $0x18] sm:$0xff]
      %v178 = vld [vmem:[%s164 + $0x20] sm:$0xff]
      %v179 = vld [vmem:[%s164 + $0x28] sm:$0xff]
      %v180 = vld [vmem:[%s164 + $0x30] sm:$0xff]
      %v181 = vld [vmem:[%s164 + $0x38] sm:$0xff]
      %v182 = vld [vmem:[%s1] sm:$0x3]
      %v183 = vpack.c.bf16 %v175, %v174
      %v184 = vpack.c.bf16 %v177, %v176
      %v185 = vpack.c.bf16 %v179, %v178
      %v186 = vpack.c.bf16 %v181, %v180
      %v187 = vlaneseq
      %v188 = vshrl.u32 %v187, 7
      %v189 = vsub.s32 0, %v188
      %v190 = vrot.slane %v170, %v189
      %vm191 = vcmask 31744
      %v193 = vsel %vm191, %v183, 0
      %v196 = vsel %vm191, %v184, 0
      %v199 = vsel %vm191, %v185, 0
      %v202 = vsel %vm191, %v186, 0
      %vm204 = vcmask 1041408
      %v206 = vsel %vm204, %v182, 0
      %208 = vmatprep.subr.bf16.mxu0 0
      %209 = vmatpush1.bf16.msra.mxu0 %v206
      %210 = vmatprep.subr.bf16.mxu0 0
      %211 = vmatpush1.bf16.msra.mxu0 0
      %212 = vmatprep.subr.bf16.mxu0 0
      %213 = vmatpush1.bf16.msra.mxu0 0
      %214 = vmatprep.subr.bf16.mxu0 0
      %215 = vmatpush1.bf16.msra.mxu0 0
      %216 = vmatprep.subr.bf16.mxu0 0
      %217 = vmatpush1.bf16.msra.mxu0 0
      %218 = vmatprep.subr.bf16.mxu0 0
      %219 = vmatpush1.bf16.msra.mxu0 0
      %220 = vmatprep.subr.bf16.mxu0 0
      %221 = vmatpush1.bf16.msra.mxu0 0
      %222 = vmatprep.subr.bf16.mxu0 0
      %223 = vmatpush1.bf16.msra.mxu0 0
      %224 = vmatprep.subr.bf16.mxu0 0
      %225 = vmatpush1.bf16.msra.mxu0 0
      %226 = vmatprep.subr.bf16.mxu0 0
      %227 = vmatpush1.bf16.msra.mxu0 0
      %228 = vmatprep.subr.bf16.mxu0 0
      %229 = vmatpush1.bf16.msra.mxu0 0
      %230 = vmatprep.subr.bf16.mxu0 0
      %231 = vmatpush1.bf16.msra.mxu0 0
      %232 = vmatprep.subr.bf16.mxu0 0
      %233 = vmatpush1.bf16.msra.mxu0 0
      %234 = vmatprep.subr.bf16.mxu0 0
      %235 = vmatpush1.bf16.msra.mxu0 0
      %236 = vmatprep.subr.bf16.mxu0 0
      %237 = vmatpush1.bf16.msra.mxu0 0
      %238 = vmatprep.subr.bf16.mxu0 0
      %239 = vmatpush1.bf16.msra.mxu0 0
      %240 = vmatprep.mubr.bf16.mxu0 0
      %241 = vmatmul.mubr.bf16.gmra.mrb[0].mxu0 %v193
      %v242 = vpop.f32.mrb[0].mxu0
      %v243 = vadd.f32 %v190, %v242
      %v244 = vpop.f32.mrb[0].mxu0
      %v245 = vpop.f32.mrb[0].mxu0
      %v246 = vadd.f32 %v190, %v245
      %v247 = vpop.f32.mrb[0].mxu0
      %248 = vmatprep.mubr.bf16.mxu0 0
      %249 = vmatmul.mubr.bf16.gmra.mrb[0].mxu0 %v196
      %v250 = vpop.f32.mrb[0].mxu0
      %v251 = vadd.f32 %v190, %v250
      %v252 = vpop.f32.mrb[0].mxu0
      %v253 = vpop.f32.mrb[0].mxu0
      %v254 = vadd.f32 %v190, %v253
      %v255 = vpop.f32.mrb[0].mxu0
      %256 = vmatprep.mubr.bf16.mxu0 0
      %257 = vmatmul.mubr.bf16.gmra.mrb[0].mxu0 %v199
      %v258 = vpop.f32.mrb[0].mxu0
      %v259 = vadd.f32 %v190, %v258
      %v260 = vpop.f32.mrb[0].mxu0
      %v261 = vpop.f32.mrb[0].mxu0
      %v262 = vadd.f32 %v190, %v261
      %v263 = vpop.f32.mrb[0].mxu0
      %264 = vmatprep.mubr.bf16.mxu0 0
      %265 = vmatmul.mubr.bf16.gmra.mrb[0].mxu0 %v202
      %v266 = vpop.f32.mrb[0].mxu0
      %v267 = vadd.f32 %v190, %v266
      %v268 = vpop.f32.mrb[0].mxu0
      %v269 = vpop.f32.mrb[0].mxu0
      %v270 = vadd.f32 %v190, %v269
      %v271 = vpop.f32.mrb[0].mxu0
      %272 = vdwg.mxu0
      %v273 = vmax.f32 %v243, 0.0
      %v274 = vmax.f32 %v246, 0.0
      %v275 = vmax.f32 %v251, 0.0
      %v276 = vmax.f32 %v254, 0.0
      %v277 = vmax.f32 %v259, 0.0
      %v278 = vmax.f32 %v262, 0.0
      %v279 = vmax.f32 %v267, 0.0
      %v280 = vmax.f32 %v270, 0.0
      %v281 = vld [vmem:[%s1 + $0x8] sm:$0xf]
      %v282 = vld [vmem:[%s1 + $0xc] sm:$0xf]
      %v283 = vpack.c.bf16 %v274, %v273
      %v284 = vpack.c.bf16 %v276, %v275
      %v285 = vpack.c.bf16 %v278, %v277
      %v286 = vpack.c.bf16 %v280, %v279
      %v287 = vlaneseq
      %v288 = vshrl.u32 %v287, 7
      %v289 = vsub.s32 1, %v288
      %v290 = vrot.slane %v170, %v289
      %v293 = vunpack.c.l.b16 %v281
      %v294 = vunpack.c.l.b16 %v282
      %v295 = vpack.c.b16 %v294, %v293
      %vm297 = vcmask 130048
      %v299 = vsel %vm297, %v283, 0
      %v302 = vsel %vm297, %v284, 0
      %v305 = vsel %vm297, %v285, 0
      %v308 = vsel %vm297, %v286, 0
      %310 = vmatprep.subr.bf16.mxu0 0
      %311 = vmatpush1.bf16.msra.mxu0 %v295
      %312 = vmatprep.subr.bf16.mxu0 0
      %313 = vmatpush1.bf16.msra.mxu0 0
      %314 = vmatprep.subr.bf16.mxu0 0
      %315 = vmatpush1.bf16.msra.mxu0 0
      %316 = vmatprep.subr.bf16.mxu0 0
      %317 = vmatpush1.bf16.msra.mxu0 0
      %318 = vmatprep.subr.bf16.mxu0 0
      %319 = vmatpush1.bf16.msra.mxu0 0
      %320 = vmatprep.subr.bf16.mxu0 0
      %321 = vmatpush1.bf16.msra.mxu0 0
      %322 = vmatprep.subr.bf16.mxu0 0
      %323 = vmatpush1.bf16.msra.mxu0 0
      %324 = vmatprep.subr.bf16.mxu0 0
      %325 = vmatpush1.bf16.msra.mxu0 0
      %326 = vmatprep.subr.bf16.mxu0 0
      %327 = vmatpush1.bf16.msra.mxu0 0
      %328 = vmatprep.subr.bf16.mxu0 0
      %329 = vmatpush1.bf16.msra.mxu0 0
      %330 = vmatprep.subr.bf16.mxu0 0
      %331 = vmatpush1.bf16.msra.mxu0 0
      %332 = vmatprep.subr.bf16.mxu0 0
      %333 = vmatpush1.bf16.msra.mxu0 0
      %334 = vmatprep.subr.bf16.mxu0 0
      %335 = vmatpush1.bf16.msra.mxu0 0
      %336 = vmatprep.subr.bf16.mxu0 0
      %337 = vmatpush1.bf16.msra.mxu0 0
      %338 = vmatprep.subr.bf16.mxu0 0
      %339 = vmatpush1.bf16.msra.mxu0 0
      %340 = vmatprep.subr.bf16.mxu0 0
      %341 = vmatpush1.bf16.msra.mxu0 0
      %342 = vmatprep.mubr.bf16.mxu0 0
      %343 = vmatmul.mubr.bf16.gmra.mrb[0].mxu0 %v299
      %v344 = vpop.f32.mrb[0].mxu0
      %v345 = vadd.f32 %v290, %v344
      %v346 = vpop.f32.mrb[0].mxu0
      %v347 = vpop.f32.mrb[0].mxu0
      %v348 = vadd.f32 %v290, %v347
      %v349 = vpop.f32.mrb[0].mxu0
      %350 = vmatprep.mubr.bf16.mxu0 0
      %351 = vmatmul.mubr.bf16.gmra.mrb[0].mxu0 %v302
      %v352 = vpop.f32.mrb[0].mxu0
      %v353 = vadd.f32 %v290, %v352
      %v354 = vpop.f32.mrb[0].mxu0
      %v355 = vpop.f32.mrb[0].mxu0
      %v356 = vadd.f32 %v290, %v355
      %v357 = vpop.f32.mrb[0].mxu0
      %358 = vmatprep.mubr.bf16.mxu0 0
      %359 = vmatmul.mubr.bf16.gmra.mrb[0].mxu0 %v305
      %v360 = vpop.f32.mrb[0].mxu0
      %v361 = vadd.f32 %v290, %v360
      %v362 = vpop.f32.mrb[0].mxu0
      %v363 = vpop.f32.mrb[0].mxu0
      %v364 = vadd.f32 %v290, %v363
      %v365 = vpop.f32.mrb[0].mxu0
      %366 = vmatprep.mubr.bf16.mxu0 0
      %367 = vmatmul.mubr.bf16.gmra.mrb[0].mxu0 %v308
      %v368 = vpop.f32.mrb[0].mxu0
      %v369 = vadd.f32 %v290, %v368
      %v370 = vpop.f32.mrb[0].mxu0
      %v371 = vpop.f32.mrb[0].mxu0
      %v372 = vadd.f32 %v290, %v371
      %v373 = vpop.f32.mrb[0].mxu0
      %374 = vdwg.mxu0
      %v375 = vld [vmem:[%s1 + $0x10] sm:$0xf]
      %v376 = vld [vmem:[%s1 + $0x14] sm:$0xf]
      %v377 = vld [vmem:[%s1 + $0x18] sm:$0xf]
      %v378 = vld [vmem:[%s1 + $0x1c] sm:$0xf]
      %v379 = vpack.c.bf16 %v348, %v345
      %v380 = vpack.c.bf16 %v356, %v353
      %v381 = vpack.c.bf16 %v364, %v361
      %v382 = vpack.c.bf16 %v372, %v369
      %v383 = vlaneseq
      %v384 = vshrl.u32 %v383, 7
      %v385 = vsub.s32 2, %v384
      %v386 = vrot.slane %v170, %v385
      %v391 = vunpack.c.l.b16 %v375
      %v392 = vunpack.c.l.b16 %v376
      %v393 = vunpack.c.l.b16 %v377
      %v394 = vunpack.c.l.b16 %v378
      %v395 = vpack.c.b16 %v392, %v391
      %v396 = vpack.c.b16 %v394, %v393
      %vm399 = vcmask 261120
      %v401 = vsel %vm399, %v379, 0
      %v404 = vsel %vm399, %v380, 0
      %v407 = vsel %vm399, %v381, 0
      %v410 = vsel %vm399, %v382, 0
      %412 = vmatprep.subr.bf16.mxu0 0
      %413 = vmatpush1.bf16.msra.mxu0 %v395
      %414 = vmatprep.subr.bf16.mxu0 0
      %415 = vmatpush1.bf16.msra.mxu0 %v396
      %416 = vmatprep.subr.bf16.mxu0 0
      %417 = vmatpush1.bf16.msra.mxu0 0
      %418 = vmatprep.subr.bf16.mxu0 0
      %419 = vmatpush1.bf16.msra.mxu0 0
      %420 = vmatprep.subr.bf16.mxu0 0
      %421 = vmatpush1.bf16.msra.mxu0 0
      %422 = vmatprep.subr.bf16.mxu0 0
      %423 = vmatpush1.bf16.msra.mxu0 0
      %424 = vmatprep.subr.bf16.mxu0 0
      %425 = vmatpush1.bf16.msra.mxu0 0
      %426 = vmatprep.subr.bf16.mxu0 0
      %427 = vmatpush1.bf16.msra.mxu0 0
      %428 = vmatprep.subr.bf16.mxu0 0
      %429 = vmatpush1.bf16.msra.mxu0 0
      %430 = vmatprep.subr.bf16.mxu0 0
      %431 = vmatpush1.bf16.msra.mxu0 0
      %432 = vmatprep.subr.bf16.mxu0 0
      %433 = vmatpush1.bf16.msra.mxu0 0
      %434 = vmatprep.subr.bf16.mxu0 0
      %435 = vmatpush1.bf16.msra.mxu0 0
      %436 = vmatprep.subr.bf16.mxu0 0
      %437 = vmatpush1.bf16.msra.mxu0 0
      %438 = vmatprep.subr.bf16.mxu0 0
      %439 = vmatpush1.bf16.msra.mxu0 0
      %440 = vmatprep.subr.bf16.mxu0 0
      %441 = vmatpush1.bf16.msra.mxu0 0
      %442 = vmatprep.subr.bf16.mxu0 0
      %443 = vmatpush1.bf16.msra.mxu0 0
      %444 = vmatprep.mubr.bf16.mxu0 0
      %445 = vmatmul.mubr.bf16.gmra.mrb[0].mxu0 %v401
      %v446 = vpop.f32.mrb[0].mxu0
      %v447 = vadd.f32 %v386, %v446
      %v448 = vpop.f32.mrb[0].mxu0
      %v449 = vpop.f32.mrb[0].mxu0
      %v450 = vadd.f32 %v386, %v449
      %v451 = vpop.f32.mrb[0].mxu0
      %452 = vmatprep.mubr.bf16.mxu0 0
      %453 = vmatmul.mubr.bf16.gmra.mrb[0].mxu0 %v404
      %v454 = vpop.f32.mrb[0].mxu0
      %v455 = vadd.f32 %v386, %v454
      %v456 = vpop.f32.mrb[0].mxu0
      %v457 = vpop.f32.mrb[0].mxu0
      %v458 = vadd.f32 %v386, %v457
      %v459 = vpop.f32.mrb[0].mxu0
      %460 = vmatprep.mubr.bf16.mxu0 0
      %461 = vmatmul.mubr.bf16.gmra.mrb[0].mxu0 %v407
      %v462 = vpop.f32.mrb[0].mxu0
      %v463 = vadd.f32 %v386, %v462
      %v464 = vpop.f32.mrb[0].mxu0
      %v465 = vpop.f32.mrb[0].mxu0
      %v466 = vadd.f32 %v386, %v465
      %v467 = vpop.f32.mrb[0].mxu0
      %468 = vmatprep.mubr.bf16.mxu0 0
      %469 = vmatmul.mubr.bf16.gmra.mrb[0].mxu0 %v410
      %v470 = vpop.f32.mrb[0].mxu0
      %v471 = vadd.f32 %v386, %v470
      %v472 = vpop.f32.mrb[0].mxu0
      %v473 = vpop.f32.mrb[0].mxu0
      %v474 = vadd.f32 %v386, %v473
      %v475 = vpop.f32.mrb[0].mxu0
      %476 = vdwg.mxu0
      %485 = vrot.lane.b32.xlu0 %v174, 96
      %v486 = vpop.permute.xlu0 %485
      %487 = vrot.lane.b32.xlu0 %v175, 96
      %v488 = vpop.permute.xlu0 %487
      %489 = vrot.lane.b32.xlu0 %v176, 96
      %v490 = vpop.permute.xlu0 %489
      %491 = vrot.lane.b32.xlu0 %v177, 96
      %v492 = vpop.permute.xlu0 %491
      %493 = vrot.lane.b32.xlu0 %v178, 96
      %v494 = vpop.permute.xlu0 %493
      %495 = vrot.lane.b32.xlu0 %v179, 96
      %v496 = vpop.permute.xlu0 %495
      %497 = vrot.lane.b32.xlu0 %v180, 96
      %v498 = vpop.permute.xlu0 %497
      %499 = vrot.lane.b32.xlu0 %v181, 96
      %v500 = vpop.permute.xlu0 %499
      %v509 = vadd.f32 %v447, %v486
      %v510 = vadd.f32 %v450, %v488
      %v511 = vadd.f32 %v455, %v490
      %v512 = vadd.f32 %v458, %v492
      %v513 = vadd.f32 %v463, %v494
      %v514 = vadd.f32 %v466, %v496
      %v515 = vadd.f32 %v471, %v498
      %v516 = vadd.f32 %v474, %v500
      %v517 = vpack.c.bf16 %v510, %v509
      %v518 = vpack.c.bf16 %v512, %v511
      %v519 = vpack.c.bf16 %v514, %v513
      %v520 = vpack.c.bf16 %v516, %v515
      %v521 = vpack.c.bf16 %v450, %v447
      %v522 = vpack.c.bf16 %v458, %v455
      %v523 = vpack.c.bf16 %v466, %v463
      %v524 = vpack.c.bf16 %v474, %v471
      %529 = vrot.lane.b32.xlu0 %v517, 96
      %v530 = vpop.permute.xlu0 %529
      %531 = vrot.lane.b32.xlu0 %v518, 96
      %v532 = vpop.permute.xlu0 %531
      %533 = vrot.lane.b32.xlu0 %v519, 96
      %v534 = vpop.permute.xlu0 %533
      %535 = vrot.lane.b32.xlu0 %v520, 96
      %v536 = vpop.permute.xlu0 %535
      %vm537 = vcmask 64512
      %v539 = vsel %vm537, %v517, 0
      %v542 = vsel %vm537, %v518, 0
      %v545 = vsel %vm537, %v519, 0
      %v548 = vsel %vm537, %v520, 0
      %v551 = vsel %vm537, %v530, 0
      %v554 = vsel %vm537, %v532, 0
      %v557 = vsel %vm537, %v534, 0
      %v560 = vsel %vm537, %v536, 0
      %562 = vmatprep.subr.bf16.mxu0 0
      %563 = vmatpush1.bf16.xpose.msra.mxu0 %v551
      %564 = vmatprep.subr.bf16.mxu0 0
      %565 = vmatpush1.bf16.xpose.msra.mxu0 %v554
      %566 = vmatprep.subr.bf16.mxu0 0
      %567 = vmatpush1.bf16.xpose.msra.mxu0 %v557
      %568 = vmatprep.subr.bf16.mxu0 0
      %569 = vmatpush1.bf16.xpose.msra.mxu0 %v560
      %570 = vmatprep.subr.bf16.mxu0 0
      %571 = vmatpush1.bf16.xpose.msra.mxu0 0
      %572 = vmatprep.subr.bf16.mxu0 0
      %573 = vmatpush1.bf16.xpose.msra.mxu0 0
      %574 = vmatprep.subr.bf16.mxu0 0
      %575 = vmatpush1.bf16.xpose.msra.mxu0 0
      %576 = vmatprep.subr.bf16.mxu0 0
      %577 = vmatpush1.bf16.xpose.msra.mxu0 0
      %578 = vmatprep.subr.bf16.mxu0 0
      %579 = vmatpush1.bf16.xpose.msra.mxu0 0
      %580 = vmatprep.subr.bf16.mxu0 0
      %581 = vmatpush1.bf16.xpose.msra.mxu0 0
      %582 = vmatprep.subr.bf16.mxu0 0
      %583 = vmatpush1.bf16.xpose.msra.mxu0 0
      %584 = vmatprep.subr.bf16.mxu0 0
      %585 = vmatpush1.bf16.xpose.msra.mxu0 0
      %586 = vmatprep.subr.bf16.mxu0 0
      %587 = vmatpush1.bf16.xpose.msra.mxu0 0
      %588 = vmatprep.subr.bf16.mxu0 0
      %589 = vmatpush1.bf16.xpose.msra.mxu0 0
      %590 = vmatprep.subr.bf16.mxu0 0
      %591 = vmatpush1.bf16.xpose.msra.mxu0 0
      %592 = vmatprep.subr.bf16.mxu0 0
      %593 = vmatpush1.bf16.xpose.msra.mxu0 0
      %594 = vmatprep.mubr.bf16.mxu0 0
      %595 = vmatmul.mubr.bf16.gmra.mrb[0].mxu0 %v539
      %v596 = vpop.f32.mrb[0].mxu0
      %v597 = vadd.f32 0.0, %v596
      %v598 = vpop.f32.mrb[0].mxu0
      %v599 = vpop.f32.mrb[0].mxu0
      %v600 = vadd.f32 0.0, %v599
      %v601 = vpop.f32.mrb[0].mxu0
      %602 = vmatprep.mubr.bf16.mxu0 0
      %603 = vmatmul.mubr.bf16.gmra.mrb[0].mxu0 %v542
      %v604 = vpop.f32.mrb[0].mxu0
      %v605 = vadd.f32 0.0, %v604
      %v606 = vpop.f32.mrb[0].mxu0
      %v607 = vpop.f32.mrb[0].mxu0
      %v608 = vadd.f32 0.0, %v607
      %v609 = vpop.f32.mrb[0].mxu0
      %610 = vmatprep.mubr.bf16.mxu0 0
      %611 = vmatmul.mubr.bf16.gmra.mrb[0].mxu0 %v545
      %v612 = vpop.f32.mrb[0].mxu0
      %v613 = vadd.f32 0.0, %v612
      %v614 = vpop.f32.mrb[0].mxu0
      %v615 = vpop.f32.mrb[0].mxu0
      %v616 = vadd.f32 0.0, %v615
      %v617 = vpop.f32.mrb[0].mxu0
      %618 = vmatprep.mubr.bf16.mxu0 0
      %619 = vmatmul.mubr.bf16.gmra.mrb[0].mxu0 %v548
      %v620 = vpop.f32.mrb[0].mxu0
      %v621 = vadd.f32 0.0, %v620
      %v622 = vpop.f32.mrb[0].mxu0
      %v623 = vpop.f32.mrb[0].mxu0
      %v624 = vadd.f32 0.0, %v623
      %v625 = vpop.f32.mrb[0].mxu0
      %626 = vdwg.mxu0
      %627 = vrot.lane.b32.xlu0 %v517, 120
      %v628 = vpop.permute.xlu0 %627
      %629 = vrot.lane.b32.xlu0 %v518, 120
      %v630 = vpop.permute.xlu0 %629
      %631 = vrot.lane.b32.xlu0 %v519, 120
      %v632 = vpop.permute.xlu0 %631
      %633 = vrot.lane.b32.xlu0 %v520, 120
      %v634 = vpop.permute.xlu0 %633
      %635 = vrot.lane.b32.xlu0 %v517, 88
      %v636 = vpop.permute.xlu0 %635
      %637 = vrot.lane.b32.xlu0 %v518, 88
      %v638 = vpop.permute.xlu0 %637
      %639 = vrot.lane.b32.xlu0 %v519, 88
      %v640 = vpop.permute.xlu0 %639
      %641 = vrot.lane.b32.xlu0 %v520, 88
      %v642 = vpop.permute.xlu0 %641
      %v644 = vsel %vm537, %v628, 0
      %v647 = vsel %vm537, %v630, 0
      %v650 = vsel %vm537, %v632, 0
      %v653 = vsel %vm537, %v634, 0
      %v656 = vsel %vm537, %v636, 0
      %v659 = vsel %vm537, %v638, 0
      %v662 = vsel %vm537, %v640, 0
      %v665 = vsel %vm537, %v642, 0
      %667 = vmatprep.subr.bf16.mxu0 0
      %668 = vmatpush1.bf16.xpose.msra.mxu0 %v656
      %669 = vmatprep.subr.bf16.mxu0 0
      %670 = vmatpush1.bf16.xpose.msra.mxu0 %v659
      %671 = vmatprep.subr.bf16.mxu0 0
      %672 = vmatpush1.bf16.xpose.msra.mxu0 %v662
      %673 = vmatprep.subr.bf16.mxu0 0
      %674 = vmatpush1.bf16.xpose.msra.mxu0 %v665
      %675 = vmatprep.subr.bf16.mxu0 0
      %676 = vmatpush1.bf16.xpose.msra.mxu0 0
      %677 = vmatprep.subr.bf16.mxu0 0
      %678 = vmatpush1.bf16.xpose.msra.mxu0 0
      %679 = vmatprep.subr.bf16.mxu0 0
      %680 = vmatpush1.bf16.xpose.msra.mxu0 0
      %681 = vmatprep.subr.bf16.mxu0 0
      %682 = vmatpush1.bf16.xpose.msra.mxu0 0
      %683 = vmatprep.subr.bf16.mxu0 0
      %684 = vmatpush1.bf16.xpose.msra.mxu0 0
      %685 = vmatprep.subr.bf16.mxu0 0
      %686 = vmatpush1.bf16.xpose.msra.mxu0 0
      %687 = vmatprep.subr.bf16.mxu0 0
      %688 = vmatpush1.bf16.xpose.msra.mxu0 0
      %689 = vmatprep.subr.bf16.mxu0 0
      %690 = vmatpush1.bf16.xpose.msra.mxu0 0
      %691 = vmatprep.subr.bf16.mxu0 0
      %692 = vmatpush1.bf16.xpose.msra.mxu0 0
      %693 = vmatprep.subr.bf16.mxu0 0
      %694 = vmatpush1.bf16.xpose.msra.mxu0 0
      %695 = vmatprep.subr.bf16.mxu0 0
      %696 = vmatpush1.bf16.xpose.msra.mxu0 0
      %697 = vmatprep.subr.bf16.mxu0 0
      %698 = vmatpush1.bf16.xpose.msra.mxu0 0
      %699 = vmatprep.mubr.bf16.mxu0 0
      %700 = vmatmul.mubr.bf16.gmra.mrb[0].mxu0 %v644
      %v701 = vpop.f32.mrb[0].mxu0
      %v702 = vadd.f32 0.0, %v701
      %v703 = vpop.f32.mrb[0].mxu0
      %v704 = vpop.f32.mrb[0].mxu0
      %v705 = vadd.f32 0.0, %v704
      %v706 = vpop.f32.mrb[0].mxu0
      %707 = vmatprep.mubr.bf16.mxu0 0
      %708 = vmatmul.mubr.bf16.gmra.mrb[0].mxu0 %v647
      %v709 = vpop.f32.mrb[0].mxu0
      %v710 = vadd.f32 0.0, %v709
      %v711 = vpop.f32.mrb[0].mxu0
      %v712 = vpop.f32.mrb[0].mxu0
      %v713 = vadd.f32 0.0, %v712
      %v714 = vpop.f32.mrb[0].mxu0
      %715 = vmatprep.mubr.bf16.mxu0 0
      %716 = vmatmul.mubr.bf16.gmra.mrb[0].mxu0 %v650
      %v717 = vpop.f32.mrb[0].mxu0
      %v718 = vadd.f32 0.0, %v717
      %v719 = vpop.f32.mrb[0].mxu0
      %v720 = vpop.f32.mrb[0].mxu0
      %v721 = vadd.f32 0.0, %v720
      %v722 = vpop.f32.mrb[0].mxu0
      %723 = vmatprep.mubr.bf16.mxu0 0
      %724 = vmatmul.mubr.bf16.gmra.mrb[0].mxu0 %v653
      %v725 = vpop.f32.mrb[0].mxu0
      %v726 = vadd.f32 0.0, %v725
      %v727 = vpop.f32.mrb[0].mxu0
      %v728 = vpop.f32.mrb[0].mxu0
      %v729 = vadd.f32 0.0, %v728
      %v730 = vpop.f32.mrb[0].mxu0
      %731 = vdwg.mxu0
      %732 = vrot.lane.b32.xlu0 %v517, 112
      %v733 = vpop.permute.xlu0 %732
      %734 = vrot.lane.b32.xlu0 %v518, 112
      %v735 = vpop.permute.xlu0 %734
      %736 = vrot.lane.b32.xlu0 %v519, 112
      %v737 = vpop.permute.xlu0 %736
      %738 = vrot.lane.b32.xlu0 %v520, 112
      %v739 = vpop.permute.xlu0 %738
      %740 = vrot.lane.b32.xlu0 %v517, 80
      %v741 = vpop.permute.xlu0 %740
      %742 = vrot.lane.b32.xlu0 %v518, 80
      %v743 = vpop.permute.xlu0 %742
      %744 = vrot.lane.b32.xlu0 %v519, 80
      %v745 = vpop.permute.xlu0 %744
      %746 = vrot.lane.b32.xlu0 %v520, 80
      %v747 = vpop.permute.xlu0 %746
      %v749 = vsel %vm537, %v733, 0
      %v752 = vsel %vm537, %v735, 0
      %v755 = vsel %vm537, %v737, 0
      %v758 = vsel %vm537, %v739, 0
      %v761 = vsel %vm537, %v741, 0
      %v764 = vsel %vm537, %v743, 0
      %v767 = vsel %vm537, %v745, 0
      %v770 = vsel %vm537, %v747, 0
      %772 = vmatprep.subr.bf16.mxu0 0
      %773 = vmatpush1.bf16.xpose.msra.mxu0 %v761
      %774 = vmatprep.subr.bf16.mxu0 0
      %775 = vmatpush1.bf16.xpose.msra.mxu0 %v764
      %776 = vmatprep.subr.bf16.mxu0 0
      %777 = vmatpush1.bf16.xpose.msra.mxu0 %v767
      %778 = vmatprep.subr.bf16.mxu0 0
      %779 = vmatpush1.bf16.xpose.msra.mxu0 %v770
      %780 = vmatprep.subr.bf16.mxu0 0
      %781 = vmatpush1.bf16.xpose.msra.mxu0 0
      %782 = vmatprep.subr.bf16.mxu0 0
      %783 = vmatpush1.bf16.xpose.msra.mxu0 0
      %784 = vmatprep.subr.bf16.mxu0 0
      %785 = vmatpush1.bf16.xpose.msra.mxu0 0
      %786 = vmatprep.subr.bf16.mxu0 0
      %787 = vmatpush1.bf16.xpose.msra.mxu0 0
      %788 = vmatprep.subr.bf16.mxu0 0
      %789 = vmatpush1.bf16.xpose.msra.mxu0 0
      %790 = vmatprep.subr.bf16.mxu0 0
      %791 = vmatpush1.bf16.xpose.msra.mxu0 0
      %792 = vmatprep.subr.bf16.mxu0 0
      %793 = vmatpush1.bf16.xpose.msra.mxu0 0
      %794 = vmatprep.subr.bf16.mxu0 0
      %795 = vmatpush1.bf16.xpose.msra.mxu0 0
      %796 = vmatprep.subr.bf16.mxu0 0
      %797 = vmatpush1.bf16.xpose.msra.mxu0 0
      %798 = vmatprep.subr.bf16.mxu0 0
      %799 = vmatpush1.bf16.xpose.msra.mxu0 0
      %800 = vmatprep.subr.bf16.mxu0 0
      %801 = vmatpush1.bf16.xpose.msra.mxu0 0
      %802 = vmatprep.subr.bf16.mxu0 0
      %803 = vmatpush1.bf16.xpose.msra.mxu0 0
      %804 = vmatprep.mubr.bf16.mxu0 0
      %805 = vmatmul.mubr.bf16.gmra.mrb[0].mxu0 %v749
      %v806 = vpop.f32.mrb[0].mxu0
      %v807 = vadd.f32 0.0, %v806
      %v808 = vpop.f32.mrb[0].mxu0
      %v809 = vpop.f32.mrb[0].mxu0
      %v810 = vadd.f32 0.0, %v809
      %v811 = vpop.f32.mrb[0].mxu0
      %812 = vmatprep.mubr.bf16.mxu0 0
      %813 = vmatmul.mubr.bf16.gmra.mrb[0].mxu0 %v752
      %v814 = vpop.f32.mrb[0].mxu0
      %v815 = vadd.f32 0.0, %v814
      %v816 = vpop.f32.mrb[0].mxu0
      %v817 = vpop.f32.mrb[0].mxu0
      %v818 = vadd.f32 0.0, %v817
      %v819 = vpop.f32.mrb[0].mxu0
      %820 = vmatprep.mubr.bf16.mxu0 0
      %821 = vmatmul.mubr.bf16.gmra.mrb[0].mxu0 %v755
      %v822 = vpop.f32.mrb[0].mxu0
      %v823 = vadd.f32 0.0, %v822
      %v824 = vpop.f32.mrb[0].mxu0
      %v825 = vpop.f32.mrb[0].mxu0
      %v826 = vadd.f32 0.0, %v825
      %v827 = vpop.f32.mrb[0].mxu0
      %828 = vmatprep.mubr.bf16.mxu0 0
      %829 = vmatmul.mubr.bf16.gmra.mrb[0].mxu0 %v758
      %v830 = vpop.f32.mrb[0].mxu0
      %v831 = vadd.f32 0.0, %v830
      %v832 = vpop.f32.mrb[0].mxu0
      %v833 = vpop.f32.mrb[0].mxu0
      %v834 = vadd.f32 0.0, %v833
      %v835 = vpop.f32.mrb[0].mxu0
      %836 = vdwg.mxu0
      %837 = vrot.lane.b32.xlu0 %v517, 104
      %v838 = vpop.permute.xlu0 %837
      %839 = vrot.lane.b32.xlu0 %v518, 104
      %v840 = vpop.permute.xlu0 %839
      %841 = vrot.lane.b32.xlu0 %v519, 104
      %v842 = vpop.permute.xlu0 %841
      %843 = vrot.lane.b32.xlu0 %v520, 104
      %v844 = vpop.permute.xlu0 %843
      %845 = vrot.lane.b32.xlu0 %v517, 72
      %v846 = vpop.permute.xlu0 %845
      %847 = vrot.lane.b32.xlu0 %v518, 72
      %v848 = vpop.permute.xlu0 %847
      %849 = vrot.lane.b32.xlu0 %v519, 72
      %v850 = vpop.permute.xlu0 %849
      %851 = vrot.lane.b32.xlu0 %v520, 72
      %v852 = vpop.permute.xlu0 %851
      %v854 = vsel %vm537, %v838, 0
      %v857 = vsel %vm537, %v840, 0
      %v860 = vsel %vm537, %v842, 0
      %v863 = vsel %vm537, %v844, 0
      %v866 = vsel %vm537, %v846, 0
      %v869 = vsel %vm537, %v848, 0
      %v872 = vsel %vm537, %v850, 0
      %v875 = vsel %vm537, %v852, 0
      %877 = vmatprep.subr.bf16.mxu0 0
      %878 = vmatpush1.bf16.xpose.msra.mxu0 %v866
      %879 = vmatprep.subr.bf16.mxu0 0
      %880 = vmatpush1.bf16.xpose.msra.mxu0 %v869
      %881 = vmatprep.subr.bf16.mxu0 0
      %882 = vmatpush1.bf16.xpose.msra.mxu0 %v872
      %883 = vmatprep.subr.bf16.mxu0 0
      %884 = vmatpush1.bf16.xpose.msra.mxu0 %v875
      %885 = vmatprep.subr.bf16.mxu0 0
      %886 = vmatpush1.bf16.xpose.msra.mxu0 0
      %887 = vmatprep.subr.bf16.mxu0 0
      %888 = vmatpush1.bf16.xpose.msra.mxu0 0
      %889 = vmatprep.subr.bf16.mxu0 0
      %890 = vmatpush1.bf16.xpose.msra.mxu0 0
      %891 = vmatprep.subr.bf16.mxu0 0
      %892 = vmatpush1.bf16.xpose.msra.mxu0 0
      %893 = vmatprep.subr.bf16.mxu0 0
      %894 = vmatpush1.bf16.xpose.msra.mxu0 0
      %895 = vmatprep.subr.bf16.mxu0 0
      %896 = vmatpush1.bf16.xpose.msra.mxu0 0
      %897 = vmatprep.subr.bf16.mxu0 0
      %898 = vmatpush1.bf16.xpose.msra.mxu0 0
      %899 = vmatprep.subr.bf16.mxu0 0
      %900 = vmatpush1.bf16.xpose.msra.mxu0 0
      %901 = vmatprep.subr.bf16.mxu0 0
      %902 = vmatpush1.bf16.xpose.msra.mxu0 0
      %903 = vmatprep.subr.bf16.mxu0 0
      %904 = vmatpush1.bf16.xpose.msra.mxu0 0
      %905 = vmatprep.subr.bf16.mxu0 0
      %906 = vmatpush1.bf16.xpose.msra.mxu0 0
      %907 = vmatprep.subr.bf16.mxu0 0
      %908 = vmatpush1.bf16.xpose.msra.mxu0 0
      %909 = vmatprep.mubr.bf16.mxu0 0
      %910 = vmatmul.mubr.bf16.gmra.mrb[0].mxu0 %v854
      %v911 = vpop.f32.mrb[0].mxu0
      %v912 = vadd.f32 0.0, %v911
      %v913 = vpop.f32.mrb[0].mxu0
      %v914 = vpop.f32.mrb[0].mxu0
      %v915 = vadd.f32 0.0, %v914
      %v916 = vpop.f32.mrb[0].mxu0
      %917 = vmatprep.mubr.bf16.mxu0 0
      %918 = vmatmul.mubr.bf16.gmra.mrb[0].mxu0 %v857
      %v919 = vpop.f32.mrb[0].mxu0
      %v920 = vadd.f32 0.0, %v919
      %v921 = vpop.f32.mrb[0].mxu0
      %v922 = vpop.f32.mrb[0].mxu0
      %v923 = vadd.f32 0.0, %v922
      %v924 = vpop.f32.mrb[0].mxu0
      %925 = vmatprep.mubr.bf16.mxu0 0
      %926 = vmatmul.mubr.bf16.gmra.mrb[0].mxu0 %v860
      %v927 = vpop.f32.mrb[0].mxu0
      %v928 = vadd.f32 0.0, %v927
      %v929 = vpop.f32.mrb[0].mxu0
      %v930 = vpop.f32.mrb[0].mxu0
      %v931 = vadd.f32 0.0, %v930
      %v932 = vpop.f32.mrb[0].mxu0
      %933 = vmatprep.mubr.bf16.mxu0 0
      %934 = vmatmul.mubr.bf16.gmra.mrb[0].mxu0 %v863
      %v935 = vpop.f32.mrb[0].mxu0
      %v936 = vadd.f32 0.0, %v935
      %v937 = vpop.f32.mrb[0].mxu0
      %v938 = vpop.f32.mrb[0].mxu0
      %v939 = vadd.f32 0.0, %v938
      %v940 = vpop.f32.mrb[0].mxu0
      %941 = vdwg.mxu0
      %vm942 = vcmask 523264
      %v943 = vsel %vm942, %v597, -inf
      %944 = vmax.xlane.f32.xlu0 %v943
      %v945 = vpop.xlane.xlu0 %944
      %v946 = vsel %vm942, %v600, -inf
      %947 = vmax.xlane.f32.xlu0 %v946
      %v948 = vpop.xlane.xlu0 %947
      %v949 = vsel %vm942, %v605, -inf
      %950 = vmax.xlane.f32.xlu0 %v949
      %v951 = vpop.xlane.xlu0 %950
      %v952 = vsel %vm942, %v608, -inf
      %953 = vmax.xlane.f32.xlu0 %v952
      %v954 = vpop.xlane.xlu0 %953
      %v955 = vsel %vm942, %v613, -inf
      %956 = vmax.xlane.f32.xlu0 %v955
      %v957 = vpop.xlane.xlu0 %956
      %v958 = vsel %vm942, %v616, -inf
      %959 = vmax.xlane.f32.xlu0 %v958
      %v960 = vpop.xlane.xlu0 %959
      %v961 = vsel %vm942, %v621, -inf
      %962 = vmax.xlane.f32.xlu0 %v961
      %v963 = vpop.xlane.xlu0 %962
      %v964 = vsel %vm942, %v624, -inf
      %965 = vmax.xlane.f32.xlu0 %v964
      %v966 = vpop.xlane.xlu0 %965
      %v967 = vsel %vm942, %v702, -inf
      %968 = vmax.xlane.f32.xlu0 %v967
      %v969 = vpop.xlane.xlu0 %968
      %v970 = vsel %vm942, %v705, -inf
      %971 = vmax.xlane.f32.xlu0 %v970
      %v972 = vpop.xlane.xlu0 %971
      %v973 = vsel %vm942, %v710, -inf
      %974 = vmax.xlane.f32.xlu0 %v973
      %v975 = vpop.xlane.xlu0 %974
      %v976 = vsel %vm942, %v713, -inf
      %977 = vmax.xlane.f32.xlu0 %v976
      %v978 = vpop.xlane.xlu0 %977
      %v979 = vsel %vm942, %v718, -inf
      %980 = vmax.xlane.f32.xlu0 %v979
      %v981 = vpop.xlane.xlu0 %980
      %v982 = vsel %vm942, %v721, -inf
      %983 = vmax.xlane.f32.xlu0 %v982
      %v984 = vpop.xlane.xlu0 %983
      %v985 = vsel %vm942, %v726, -inf
      %986 = vmax.xlane.f32.xlu0 %v985
      %v987 = vpop.xlane.xlu0 %986
      %v988 = vsel %vm942, %v729, -inf
      %989 = vmax.xlane.f32.xlu0 %v988
      %v990 = vpop.xlane.xlu0 %989
      %v991 = vsel %vm942, %v807, -inf
      %992 = vmax.xlane.f32.xlu0 %v991
      %v993 = vpop.xlane.xlu0 %992
      %v994 = vsel %vm942, %v810, -inf
      %995 = vmax.xlane.f32.xlu0 %v994
      %v996 = vpop.xlane.xlu0 %995
      %v997 = vsel %vm942, %v815, -inf
      %998 = vmax.xlane.f32.xlu0 %v997
      %v999 = vpop.xlane.xlu0 %998
      %v1000 = vsel %vm942, %v818, -inf
      %1001 = vmax.xlane.f32.xlu0 %v1000
      %v1002 = vpop.xlane.xlu0 %1001
      %v1003 = vsel %vm942, %v823, -inf
      %1004 = vmax.xlane.f32.xlu0 %v1003
      %v1005 = vpop.xlane.xlu0 %1004
      %v1006 = vsel %vm942, %v826, -inf
      %1007 = vmax.xlane.f32.xlu0 %v1006
      %v1008 = vpop.xlane.xlu0 %1007
      %v1009 = vsel %vm942, %v831, -inf
      %1010 = vmax.xlane.f32.xlu0 %v1009
      %v1011 = vpop.xlane.xlu0 %1010
      %v1012 = vsel %vm942, %v834, -inf
      %1013 = vmax.xlane.f32.xlu0 %v1012
      %v1014 = vpop.xlane.xlu0 %1013
      %v1015 = vsel %vm942, %v912, -inf
      %1016 = vmax.xlane.f32.xlu0 %v1015
      %v1017 = vpop.xlane.xlu0 %1016
      %v1018 = vsel %vm942, %v915, -inf
      %1019 = vmax.xlane.f32.xlu0 %v1018
      %v1020 = vpop.xlane.xlu0 %1019
      %v1021 = vsel %vm942, %v920, -inf
      %1022 = vmax.xlane.f32.xlu0 %v1021
      %v1023 = vpop.xlane.xlu0 %1022
      %v1024 = vsel %vm942, %v923, -inf
      %1025 = vmax.xlane.f32.xlu0 %v1024
      %v1026 = vpop.xlane.xlu0 %1025
      %v1027 = vsel %vm942, %v928, -inf
      %1028 = vmax.xlane.f32.xlu0 %v1027
      %v1029 = vpop.xlane.xlu0 %1028
      %v1030 = vsel %vm942, %v931, -inf
      %1031 = vmax.xlane.f32.xlu0 %v1030
      %v1032 = vpop.xlane.xlu0 %1031
      %v1033 = vsel %vm942, %v936, -inf
      %1034 = vmax.xlane.f32.xlu0 %v1033
      %v1035 = vpop.xlane.xlu0 %1034
      %v1036 = vsel %vm942, %v939, -inf
      %1037 = vmax.xlane.f32.xlu0 %v1036
      %v1038 = vpop.xlane.xlu0 %1037
      %v1039 = vsub.f32 %v597, %v945
      %v1040 = vsub.f32 %v600, %v948
      %v1041 = vsub.f32 %v605, %v951
      %v1042 = vsub.f32 %v608, %v954
      %v1043 = vsub.f32 %v613, %v957
      %v1044 = vsub.f32 %v616, %v960
      %v1045 = vsub.f32 %v621, %v963
      %v1046 = vsub.f32 %v624, %v966
      %v1047 = vsub.f32 %v702, %v969
      %v1048 = vsub.f32 %v705, %v972
      %v1049 = vsub.f32 %v710, %v975
      %v1050 = vsub.f32 %v713, %v978
      %v1051 = vsub.f32 %v718, %v981
      %v1052 = vsub.f32 %v721, %v984
      %v1053 = vsub.f32 %v726, %v987
      %v1054 = vsub.f32 %v729, %v990
      %v1055 = vsub.f32 %v807, %v993
      %v1056 = vsub.f32 %v810, %v996
      %v1057 = vsub.f32 %v815, %v999
      %v1058 = vsub.f32 %v818, %v1002
      %v1059 = vsub.f32 %v823, %v1005
      %v1060 = vsub.f32 %v826, %v1008
      %v1061 = vsub.f32 %v831, %v1011
      %v1062 = vsub.f32 %v834, %v1014
      %v1063 = vsub.f32 %v912, %v1017
      %v1064 = vsub.f32 %v915, %v1020
      %v1065 = vsub.f32 %v920, %v1023
      %v1066 = vsub.f32 %v923, %v1026
      %v1067 = vsub.f32 %v928, %v1029
      %v1068 = vsub.f32 %v931, %v1032
      %v1069 = vsub.f32 %v936, %v1035
      %v1070 = vsub.f32 %v939, %v1038
      %v1071 = vmul.f32 %v1039, 1.442695
      %v1072 = vpow.pop %v1071
      %v1073 = vmul.f32 %v1040, 1.442695
      %v1074 = vpow.pop %v1073
      %v1075 = vmul.f32 %v1041, 1.442695
      %v1076 = vpow.pop %v1075
      %v1077 = vmul.f32 %v1042, 1.442695
      %v1078 = vpow.pop %v1077
      %v1079 = vmul.f32 %v1043, 1.442695
      %v1080 = vpow.pop %v1079
      %v1081 = vmul.f32 %v1044, 1.442695
      %v1082 = vpow.pop %v1081
      %v1083 = vmul.f32 %v1045, 1.442695
      %v1084 = vpow.pop %v1083
      %v1085 = vmul.f32 %v1046, 1.442695
      %v1086 = vpow.pop %v1085
      %v1087 = vmul.f32 %v1047, 1.442695
      %v1088 = vpow.pop %v1087
      %v1089 = vmul.f32 %v1048, 1.442695
      %v1090 = vpow.pop %v1089
      %v1091 = vmul.f32 %v1049, 1.442695
      %v1092 = vpow.pop %v1091
      %v1093 = vmul.f32 %v1050, 1.442695
      %v1094 = vpow.pop %v1093
      %v1095 = vmul.f32 %v1051, 1.442695
      %v1096 = vpow.pop %v1095
      %v1097 = vmul.f32 %v1052, 1.442695
      %v1098 = vpow.pop %v1097
      %v1099 = vmul.f32 %v1053, 1.442695
      %v1100 = vpow.pop %v1099
      %v1101 = vmul.f32 %v1054, 1.442695
      %v1102 = vpow.pop %v1101
      %v1103 = vmul.f32 %v1055, 1.442695
      %v1104 = vpow.pop %v1103
      %v1105 = vmul.f32 %v1056, 1.442695
      %v1106 = vpow.pop %v1105
      %v1107 = vmul.f32 %v1057, 1.442695
      %v1108 = vpow.pop %v1107
      %v1109 = vmul.f32 %v1058, 1.442695
      %v1110 = vpow.pop %v1109
      %v1111 = vmul.f32 %v1059, 1.442695
      %v1112 = vpow.pop %v1111
      %v1113 = vmul.f32 %v1060, 1.442695
      %v1114 = vpow.pop %v1113
      %v1115 = vmul.f32 %v1061, 1.442695
      %v1116 = vpow.pop %v1115
      %v1117 = vmul.f32 %v1062, 1.442695
      %v1118 = vpow.pop %v1117
      %v1119 = vmul.f32 %v1063, 1.442695
      %v1120 = vpow.pop %v1119
      %v1121 = vmul.f32 %v1064, 1.442695
      %v1122 = vpow.pop %v1121
      %v1123 = vmul.f32 %v1065, 1.442695
      %v1124 = vpow.pop %v1123
      %v1125 = vmul.f32 %v1066, 1.442695
      %v1126 = vpow.pop %v1125
      %v1127 = vmul.f32 %v1067, 1.442695
      %v1128 = vpow.pop %v1127
      %v1129 = vmul.f32 %v1068, 1.442695
      %v1130 = vpow.pop %v1129
      %v1131 = vmul.f32 %v1069, 1.442695
      %v1132 = vpow.pop %v1131
      %v1133 = vmul.f32 %v1070, 1.442695
      %v1134 = vpow.pop %v1133
      %v1135 = vsel %vm942, %v1072, 0.0
      %1136 = vadd.xlane.f32.xlu0 %v1135
      %v1137 = vpop.xlane.xlu0 %1136
      %v1138 = vsel %vm942, %v1074, 0.0
      %1139 = vadd.xlane.f32.xlu0 %v1138
      %v1140 = vpop.xlane.xlu0 %1139
      %v1141 = vsel %vm942, %v1076, 0.0
      %1142 = vadd.xlane.f32.xlu0 %v1141
      %v1143 = vpop.xlane.xlu0 %1142
      %v1144 = vsel %vm942, %v1078, 0.0
      %1145 = vadd.xlane.f32.xlu0 %v1144
      %v1146 = vpop.xlane.xlu0 %1145
      %v1147 = vsel %vm942, %v1080, 0.0
      %1148 = vadd.xlane.f32.xlu0 %v1147
      %v1149 = vpop.xlane.xlu0 %1148
      %v1150 = vsel %vm942, %v1082, 0.0
      %1151 = vadd.xlane.f32.xlu0 %v1150
      %v1152 = vpop.xlane.xlu0 %1151
      %v1153 = vsel %vm942, %v1084, 0.0
      %1154 = vadd.xlane.f32.xlu0 %v1153
      %v1155 = vpop.xlane.xlu0 %1154
      %v1156 = vsel %vm942, %v1086, 0.0
      %1157 = vadd.xlane.f32.xlu0 %v1156
      %v1158 = vpop.xlane.xlu0 %1157
      %v1159 = vsel %vm942, %v1088, 0.0
      %1160 = vadd.xlane.f32.xlu0 %v1159
      %v1161 = vpop.xlane.xlu0 %1160
      %v1162 = vsel %vm942, %v1090, 0.0
      %1163 = vadd.xlane.f32.xlu0 %v1162
      %v1164 = vpop.xlane.xlu0 %1163
      %v1165 = vsel %vm942, %v1092, 0.0
      %1166 = vadd.xlane.f32.xlu0 %v1165
      %v1167 = vpop.xlane.xlu0 %1166
      %v1168 = vsel %vm942, %v1094, 0.0
      %1169 = vadd.xlane.f32.xlu0 %v1168
      %v1170 = vpop.xlane.xlu0 %1169
      %v1171 = vsel %vm942, %v1096, 0.0
      %1172 = vadd.xlane.f32.xlu0 %v1171
      %v1173 = vpop.xlane.xlu0 %1172
      %v1174 = vsel %vm942, %v1098, 0.0
      %1175 = vadd.xlane.f32.xlu0 %v1174
      %v1176 = vpop.xlane.xlu0 %1175
      %v1177 = vsel %vm942, %v1100, 0.0
      %1178 = vadd.xlane.f32.xlu0 %v1177
      %v1179 = vpop.xlane.xlu0 %1178
      %v1180 = vsel %vm942, %v1102, 0.0
      %1181 = vadd.xlane.f32.xlu0 %v1180
      %v1182 = vpop.xlane.xlu0 %1181
      %v1183 = vsel %vm942, %v1104, 0.0
      %1184 = vadd.xlane.f32.xlu0 %v1183
      %v1185 = vpop.xlane.xlu0 %1184
      %v1186 = vsel %vm942, %v1106, 0.0
      %1187 = vadd.xlane.f32.xlu0 %v1186
      %v1188 = vpop.xlane.xlu0 %1187
      %v1189 = vsel %vm942, %v1108, 0.0
      %1190 = vadd.xlane.f32.xlu0 %v1189
      %v1191 = vpop.xlane.xlu0 %1190
      %v1192 = vsel %vm942, %v1110, 0.0
      %1193 = vadd.xlane.f32.xlu0 %v1192
      %v1194 = vpop.xlane.xlu0 %1193
      %v1195 = vsel %vm942, %v1112, 0.0
      %1196 = vadd.xlane.f32.xlu0 %v1195
      %v1197 = vpop.xlane.xlu0 %1196
      %v1198 = vsel %vm942, %v1114, 0.0
      %1199 = vadd.xlane.f32.xlu0 %v1198
      %v1200 = vpop.xlane.xlu0 %1199
      %v1201 = vsel %vm942, %v1116, 0.0
      %1202 = vadd.xlane.f32.xlu0 %v1201
      %v1203 = vpop.xlane.xlu0 %1202
      %v1204 = vsel %vm942, %v1118, 0.0
      %1205 = vadd.xlane.f32.xlu0 %v1204
      %v1206 = vpop.xlane.xlu0 %1205
      %v1207 = vsel %vm942, %v1120, 0.0
      %1208 = vadd.xlane.f32.xlu0 %v1207
      %v1209 = vpop.xlane.xlu0 %1208
      %v1210 = vsel %vm942, %v1122, 0.0
      %1211 = vadd.xlane.f32.xlu0 %v1210
      %v1212 = vpop.xlane.xlu0 %1211
      %v1213 = vsel %vm942, %v1124, 0.0
      %1214 = vadd.xlane.f32.xlu0 %v1213
      %v1215 = vpop.xlane.xlu0 %1214
      %v1216 = vsel %vm942, %v1126, 0.0
      %1217 = vadd.xlane.f32.xlu0 %v1216
      %v1218 = vpop.xlane.xlu0 %1217
      %v1219 = vsel %vm942, %v1128, 0.0
      %1220 = vadd.xlane.f32.xlu0 %v1219
      %v1221 = vpop.xlane.xlu0 %1220
      %v1222 = vsel %vm942, %v1130, 0.0
      %1223 = vadd.xlane.f32.xlu0 %v1222
      %v1224 = vpop.xlane.xlu0 %1223
      %v1225 = vsel %vm942, %v1132, 0.0
      %1226 = vadd.xlane.f32.xlu0 %v1225
      %v1227 = vpop.xlane.xlu0 %1226
      %v1228 = vsel %vm942, %v1134, 0.0
      %1229 = vadd.xlane.f32.xlu0 %v1228
      %v1230 = vpop.xlane.xlu0 %1229
      %v1231 = vrcp.pop %v1137
      %v1232 = vrcp.pop %v1140
      %v1233 = vrcp.pop %v1143
      %v1234 = vrcp.pop %v1146
      %v1235 = vrcp.pop %v1149
      %v1236 = vrcp.pop %v1152
      %v1237 = vrcp.pop %v1155
      %v1238 = vrcp.pop %v1158
      %v1239 = vrcp.pop %v1161
      %v1240 = vrcp.pop %v1164
      %v1241 = vrcp.pop %v1167
      %v1242 = vrcp.pop %v1170
      %v1243 = vrcp.pop %v1173
      %v1244 = vrcp.pop %v1176
      %v1245 = vrcp.pop %v1179
      %v1246 = vrcp.pop %v1182
      %v1247 = vrcp.pop %v1185
      %v1248 = vrcp.pop %v1188
      %v1249 = vrcp.pop %v1191
      %v1250 = vrcp.pop %v1194
      %v1251 = vrcp.pop %v1197
      %v1252 = vrcp.pop %v1200
      %v1253 = vrcp.pop %v1203
      %v1254 = vrcp.pop %v1206
      %v1255 = vrcp.pop %v1209
      %v1256 = vrcp.pop %v1212
      %v1257 = vrcp.pop %v1215
      %v1258 = vrcp.pop %v1218
      %v1259 = vrcp.pop %v1221
      %v1260 = vrcp.pop %v1224
      %v1261 = vrcp.pop %v1227
      %v1262 = vrcp.pop %v1230
      %v1263 = vmul.f32 %v1072, %v1231
      %v1264 = vmul.f32 %v1074, %v1232
      %v1265 = vmul.f32 %v1076, %v1233
      %v1266 = vmul.f32 %v1078, %v1234
      %v1267 = vmul.f32 %v1080, %v1235
      %v1268 = vmul.f32 %v1082, %v1236
      %v1269 = vmul.f32 %v1084, %v1237
      %v1270 = vmul.f32 %v1086, %v1238
      %v1271 = vmul.f32 %v1088, %v1239
      %v1272 = vmul.f32 %v1090, %v1240
      %v1273 = vmul.f32 %v1092, %v1241
      %v1274 = vmul.f32 %v1094, %v1242
      %v1275 = vmul.f32 %v1096, %v1243
      %v1276 = vmul.f32 %v1098, %v1244
      %v1277 = vmul.f32 %v1100, %v1245
      %v1278 = vmul.f32 %v1102, %v1246
      %v1279 = vmul.f32 %v1104, %v1247
      %v1280 = vmul.f32 %v1106, %v1248
      %v1281 = vmul.f32 %v1108, %v1249
      %v1282 = vmul.f32 %v1110, %v1250
      %v1283 = vmul.f32 %v1112, %v1251
      %v1284 = vmul.f32 %v1114, %v1252
      %v1285 = vmul.f32 %v1116, %v1253
      %v1286 = vmul.f32 %v1118, %v1254
      %v1287 = vmul.f32 %v1120, %v1255
      %v1288 = vmul.f32 %v1122, %v1256
      %v1289 = vmul.f32 %v1124, %v1257
      %v1290 = vmul.f32 %v1126, %v1258
      %v1291 = vmul.f32 %v1128, %v1259
      %v1292 = vmul.f32 %v1130, %v1260
      %v1293 = vmul.f32 %v1132, %v1261
      %v1294 = vmul.f32 %v1134, %v1262
      %v1295 = vpack.c.bf16 %v1264, %v1263
      %v1296 = vpack.c.bf16 %v1266, %v1265
      %v1297 = vpack.c.bf16 %v1268, %v1267
      %v1298 = vpack.c.bf16 %v1270, %v1269
      %1303 = vrot.lane.b32.xlu0 %v521, 64
      %v1304 = vpop.permute.xlu0 %1303
      %1305 = vrot.lane.b32.xlu0 %v522, 64
      %v1306 = vpop.permute.xlu0 %1305
      %1307 = vrot.lane.b32.xlu0 %v523, 64
      %v1308 = vpop.permute.xlu0 %1307
      %1309 = vrot.lane.b32.xlu0 %v524, 64
      %v1310 = vpop.permute.xlu0 %1309
      %v1316 = vsel %vm942, %v1295, 0
      %v1319 = vsel %vm942, %v1296, 0
      %v1322 = vsel %vm942, %v1297, 0
      %v1325 = vsel %vm942, %v1298, 0
      %1327 = vmatprep.subr.bf16.mxu0 0
      %1328 = vmatpush1.bf16.msra.mxu0 %v1304
      %1329 = vmatprep.subr.bf16.mxu0 0
      %1330 = vmatpush1.bf16.msra.mxu0 %v1306
      %1331 = vmatprep.subr.bf16.mxu0 0
      %1332 = vmatpush1.bf16.msra.mxu0 %v1308
      %1333 = vmatprep.subr.bf16.mxu0 0
      %1334 = vmatpush1.bf16.msra.mxu0 %v1310
      %1335 = vmatprep.subr.bf16.mxu0 0
      %1336 = vmatpush1.bf16.msra.mxu0 0
      %1337 = vmatprep.subr.bf16.mxu0 0
      %1338 = vmatpush1.bf16.msra.mxu0 0
      %1339 = vmatprep.subr.bf16.mxu0 0
      %1340 = vmatpush1.bf16.msra.mxu0 0
      %1341 = vmatprep.subr.bf16.mxu0 0
      %1342 = vmatpush1.bf16.msra.mxu0 0
      %1343 = vmatprep.subr.bf16.mxu0 0
      %1344 = vmatpush1.bf16.msra.mxu0 0
      %1345 = vmatprep.subr.bf16.mxu0 0
      %1346 = vmatpush1.bf16.msra.mxu0 0
      %1347 = vmatprep.subr.bf16.mxu0 0
      %1348 = vmatpush1.bf16.msra.mxu0 0
      %1349 = vmatprep.subr.bf16.mxu0 0
      %1350 = vmatpush1.bf16.msra.mxu0 0
      %1351 = vmatprep.subr.bf16.mxu0 0
      %1352 = vmatpush1.bf16.msra.mxu0 0
      %1353 = vmatprep.subr.bf16.mxu0 0
      %1354 = vmatpush1.bf16.msra.mxu0 0
      %1355 = vmatprep.subr.bf16.mxu0 0
      %1356 = vmatpush1.bf16.msra.mxu0 0
      %1357 = vmatprep.subr.bf16.mxu0 0
      %1358 = vmatpush1.bf16.msra.mxu0 0
      %1359 = vmatprep.mubr.bf16.mxu0 0
      %1360 = vmatmul.mubr.bf16.gmra.mrb[0].mxu0 %v1316
      %v1361 = vpop.f32.mrb[0].mxu0
      %v1362 = vadd.f32 0.0, %v1361
      %v1363 = vpop.f32.mrb[0].mxu0
      %v1364 = vpop.f32.mrb[0].mxu0
      %v1365 = vadd.f32 0.0, %v1364
      %v1366 = vpop.f32.mrb[0].mxu0
      %1367 = vmatprep.mubr.bf16.mxu0 0
      %1368 = vmatmul.mubr.bf16.gmra.mrb[0].mxu0 %v1319
      %v1369 = vpop.f32.mrb[0].mxu0
      %v1370 = vadd.f32 0.0, %v1369
      %v1371 = vpop.f32.mrb[0].mxu0
      %v1372 = vpop.f32.mrb[0].mxu0
      %v1373 = vadd.f32 0.0, %v1372
      %v1374 = vpop.f32.mrb[0].mxu0
      %1375 = vmatprep.mubr.bf16.mxu0 0
      %1376 = vmatmul.mubr.bf16.gmra.mrb[0].mxu0 %v1322
      %v1377 = vpop.f32.mrb[0].mxu0
      %v1378 = vadd.f32 0.0, %v1377
      %v1379 = vpop.f32.mrb[0].mxu0
      %v1380 = vpop.f32.mrb[0].mxu0
      %v1381 = vadd.f32 0.0, %v1380
      %v1382 = vpop.f32.mrb[0].mxu0
      %1383 = vmatprep.mubr.bf16.mxu0 0
      %1384 = vmatmul.mubr.bf16.gmra.mrb[0].mxu0 %v1325
      %v1385 = vpop.f32.mrb[0].mxu0
      %v1386 = vadd.f32 0.0, %v1385
      %v1387 = vpop.f32.mrb[0].mxu0
      %v1388 = vpop.f32.mrb[0].mxu0
      %v1389 = vadd.f32 0.0, %v1388
      %v1390 = vpop.f32.mrb[0].mxu0
      %1391 = vdwg.mxu0
      %1392 = vst.msk [vmem:[#allocation2] sm:$0xff] %vm537, %v1362
      %1393 = vst.msk [vmem:[#allocation2 + $0x8] sm:$0xff] %vm537, %v1365
      %1394 = vst.msk [vmem:[#allocation2 + $0x10] sm:$0xff] %vm537, %v1370
      %1395 = vst.msk [vmem:[#allocation2 + $0x18] sm:$0xff] %vm537, %v1373
      %1396 = vst.msk [vmem:[#allocation2 + $0x20] sm:$0xff] %vm537, %v1378
      %1397 = vst.msk [vmem:[#allocation2 + $0x28] sm:$0xff] %vm537, %v1381
      %1398 = vst.msk [vmem:[#allocation2 + $0x30] sm:$0xff] %vm537, %v1386
      %1399 = vst.msk [vmem:[#allocation2 + $0x38] sm:$0xff] %vm537, %v1389
      %v1400 = vpack.c.bf16 %v1272, %v1271
      %v1401 = vpack.c.bf16 %v1274, %v1273
      %v1402 = vpack.c.bf16 %v1276, %v1275
      %v1403 = vpack.c.bf16 %v1278, %v1277
      %1404 = vrot.lane.b32.xlu0 %v521, 56
      %v1405 = vpop.permute.xlu0 %1404
      %1406 = vrot.lane.b32.xlu0 %v522, 56
      %v1407 = vpop.permute.xlu0 %1406
      %1408 = vrot.lane.b32.xlu0 %v523, 56
      %v1409 = vpop.permute.xlu0 %1408
      %1410 = vrot.lane.b32.xlu0 %v524, 56
      %v1411 = vpop.permute.xlu0 %1410
      %v1417 = vsel %vm942, %v1400, 0
      %v1420 = vsel %vm942, %v1401, 0
      %v1423 = vsel %vm942, %v1402, 0
      %v1426 = vsel %vm942, %v1403, 0
      %1428 = vmatprep.subr.bf16.mxu0 0
      %1429 = vmatpush1.bf16.msra.mxu0 %v1405
      %1430 = vmatprep.subr.bf16.mxu0 0
      %1431 = vmatpush1.bf16.msra.mxu0 %v1407
      %1432 = vmatprep.subr.bf16.mxu0 0
      %1433 = vmatpush1.bf16.msra.mxu0 %v1409
      %1434 = vmatprep.subr.bf16.mxu0 0
      %1435 = vmatpush1.bf16.msra.mxu0 %v1411
      %1436 = vmatprep.subr.bf16.mxu0 0
      %1437 = vmatpush1.bf16.msra.mxu0 0
      %1438 = vmatprep.subr.bf16.mxu0 0
      %1439 = vmatpush1.bf16.msra.mxu0 0
      %1440 = vmatprep.subr.bf16.mxu0 0
      %1441 = vmatpush1.bf16.msra.mxu0 0
      %1442 = vmatprep.subr.bf16.mxu0 0
      %1443 = vmatpush1.bf16.msra.mxu0 0
      %1444 = vmatprep.subr.bf16.mxu0 0
      %1445 = vmatpush1.bf16.msra.mxu0 0
      %1446 = vmatprep.subr.bf16.mxu0 0
      %1447 = vmatpush1.bf16.msra.mxu0 0
      %1448 = vmatprep.subr.bf16.mxu0 0
      %1449 = vmatpush1.bf16.msra.mxu0 0
      %1450 = vmatprep.subr.bf16.mxu0 0
      %1451 = vmatpush1.bf16.msra.mxu0 0
      %1452 = vmatprep.subr.bf16.mxu0 0
      %1453 = vmatpush1.bf16.msra.mxu0 0
      %1454 = vmatprep.subr.bf16.mxu0 0
      %1455 = vmatpush1.bf16.msra.mxu0 0
      %1456 = vmatprep.subr.bf16.mxu0 0
      %1457 = vmatpush1.bf16.msra.mxu0 0
      %1458 = vmatprep.subr.bf16.mxu0 0
      %1459 = vmatpush1.bf16.msra.mxu0 0
      %1460 = vmatprep.mubr.bf16.mxu0 0
      %1461 = vmatmul.mubr.bf16.gmra.mrb[0].mxu0 %v1417
      %v1462 = vpop.f32.mrb[0].mxu0
      %v1463 = vadd.f32 0.0, %v1462
      %v1464 = vpop.f32.mrb[0].mxu0
      %v1465 = vpop.f32.mrb[0].mxu0
      %v1466 = vadd.f32 0.0, %v1465
      %v1467 = vpop.f32.mrb[0].mxu0
      %1468 = vmatprep.mubr.bf16.mxu0 0
      %1469 = vmatmul.mubr.bf16.gmra.mrb[0].mxu0 %v1420
      %v1470 = vpop.f32.mrb[0].mxu0
      %v1471 = vadd.f32 0.0, %v1470
      %v1472 = vpop.f32.mrb[0].mxu0
      %v1473 = vpop.f32.mrb[0].mxu0
      %v1474 = vadd.f32 0.0, %v1473
      %v1475 = vpop.f32.mrb[0].mxu0
      %1476 = vmatprep.mubr.bf16.mxu0 0
      %1477 = vmatmul.mubr.bf16.gmra.mrb[0].mxu0 %v1423
      %v1478 = vpop.f32.mrb[0].mxu0
      %v1479 = vadd.f32 0.0, %v1478
      %v1480 = vpop.f32.mrb[0].mxu0
      %v1481 = vpop.f32.mrb[0].mxu0
      %v1482 = vadd.f32 0.0, %v1481
      %v1483 = vpop.f32.mrb[0].mxu0
      %1484 = vmatprep.mubr.bf16.mxu0 0
      %1485 = vmatmul.mubr.bf16.gmra.mrb[0].mxu0 %v1426
      %v1486 = vpop.f32.mrb[0].mxu0
      %v1487 = vadd.f32 0.0, %v1486
      %v1488 = vpop.f32.mrb[0].mxu0
      %v1489 = vpop.f32.mrb[0].mxu0
      %v1490 = vadd.f32 0.0, %v1489
      %v1491 = vpop.f32.mrb[0].mxu0
      %1492 = vdwg.mxu0
      %1501 = vrot.lane.b32.xlu0 %v1463, 8
      %v1502 = vpop.permute.xlu0 %1501
      %1503 = vrot.lane.b32.xlu0 %v1466, 8
      %v1504 = vpop.permute.xlu0 %1503
      %1505 = vrot.lane.b32.xlu0 %v1471, 8
      %v1506 = vpop.permute.xlu0 %1505
      %1507 = vrot.lane.b32.xlu0 %v1474, 8
      %v1508 = vpop.permute.xlu0 %1507
      %1509 = vrot.lane.b32.xlu0 %v1479, 8
      %v1510 = vpop.permute.xlu0 %1509
      %1511 = vrot.lane.b32.xlu0 %v1482, 8
      %v1512 = vpop.permute.xlu0 %1511
      %1513 = vrot.lane.b32.xlu0 %v1487, 8
      %v1514 = vpop.permute.xlu0 %1513
      %1515 = vrot.lane.b32.xlu0 %v1490, 8
      %v1516 = vpop.permute.xlu0 %1515
      %vm1525 = vcmask 130112
      %1526 = vst.msk [vmem:[#allocation2] sm:$0xff] %vm1525, %v1502
      %1527 = vst.msk [vmem:[#allocation2 + $0x8] sm:$0xff] %vm1525, %v1504
      %1528 = vst.msk [vmem:[#allocation2 + $0x10] sm:$0xff] %vm1525, %v1506
      %1529 = vst.msk [vmem:[#allocation2 + $0x18] sm:$0xff] %vm1525, %v1508
      %1530 = vst.msk [vmem:[#allocation2 + $0x20] sm:$0xff] %vm1525, %v1510
      %1531 = vst.msk [vmem:[#allocation2 + $0x28] sm:$0xff] %vm1525, %v1512
      %1532 = vst.msk [vmem:[#allocation2 + $0x30] sm:$0xff] %vm1525, %v1514
      %1533 = vst.msk [vmem:[#allocation2 + $0x38] sm:$0xff] %vm1525, %v1516
      %v1534 = vpack.c.bf16 %v1280, %v1279
      %v1535 = vpack.c.bf16 %v1282, %v1281
      %v1536 = vpack.c.bf16 %v1284, %v1283
      %v1537 = vpack.c.bf16 %v1286, %v1285
      %1538 = vrot.lane.b32.xlu0 %v521, 48
      %v1539 = vpop.permute.xlu0 %1538
      %1540 = vrot.lane.b32.xlu0 %v522, 48
      %v1541 = vpop.permute.xlu0 %1540
      %1542 = vrot.lane.b32.xlu0 %v523, 48
      %v1543 = vpop.permute.xlu0 %1542
      %1544 = vrot.lane.b32.xlu0 %v524, 48
      %v1545 = vpop.permute.xlu0 %1544
      %v1551 = vsel %vm942, %v1534, 0
      %v1554 = vsel %vm942, %v1535, 0
      %v1557 = vsel %vm942, %v1536, 0
      %v1560 = vsel %vm942, %v1537, 0
      %1562 = vmatprep.subr.bf16.mxu0 0
      %1563 = vmatpush1.bf16.msra.mxu0 %v1539
      %1564 = vmatprep.subr.bf16.mxu0 0
      %1565 = vmatpush1.bf16.msra.mxu0 %v1541
      %1566 = vmatprep.subr.bf16.mxu0 0
      %1567 = vmatpush1.bf16.msra.mxu0 %v1543
      %1568 = vmatprep.subr.bf16.mxu0 0
      %1569 = vmatpush1.bf16.msra.mxu0 %v1545
      %1570 = vmatprep.subr.bf16.mxu0 0
      %1571 = vmatpush1.bf16.msra.mxu0 0
      %1572 = vmatprep.subr.bf16.mxu0 0
      %1573 = vmatpush1.bf16.msra.mxu0 0
      %1574 = vmatprep.subr.bf16.mxu0 0
      %1575 = vmatpush1.bf16.msra.mxu0 0
      %1576 = vmatprep.subr.bf16.mxu0 0
      %1577 = vmatpush1.bf16.msra.mxu0 0
      %1578 = vmatprep.subr.bf16.mxu0 0
      %1579 = vmatpush1.bf16.msra.mxu0 0
      %1580 = vmatprep.subr.bf16.mxu0 0
      %1581 = vmatpush1.bf16.msra.mxu0 0
      %1582 = vmatprep.subr.bf16.mxu0 0
      %1583 = vmatpush1.bf16.msra.mxu0 0
      %1584 = vmatprep.subr.bf16.mxu0 0
      %1585 = vmatpush1.bf16.msra.mxu0 0
      %1586 = vmatprep.subr.bf16.mxu0 0
      %1587 = vmatpush1.bf16.msra.mxu0 0
      %1588 = vmatprep.subr.bf16.mxu0 0
      %1589 = vmatpush1.bf16.msra.mxu0 0
      %1590 = vmatprep.subr.bf16.mxu0 0
      %1591 = vmatpush1.bf16.msra.mxu0 0
      %1592 = vmatprep.subr.bf16.mxu0 0
      %1593 = vmatpush1.bf16.msra.mxu0 0
      %1594 = vmatprep.mubr.bf16.mxu0 0
      %1595 = vmatmul.mubr.bf16.gmra.mrb[0].mxu0 %v1551
      %v1596 = vpop.f32.mrb[0].mxu0
      %v1597 = vadd.f32 0.0, %v1596
      %v1598 = vpop.f32.mrb[0].mxu0
      %v1599 = vpop.f32.mrb[0].mxu0
      %v1600 = vadd.f32 0.0, %v1599
      %v1601 = vpop.f32.mrb[0].mxu0
      %1602 = vmatprep.mubr.bf16.mxu0 0
      %1603 = vmatmul.mubr.bf16.gmra.mrb[0].mxu0 %v1554
      %v1604 = vpop.f32.mrb[0].mxu0
      %v1605 = vadd.f32 0.0, %v1604
      %v1606 = vpop.f32.mrb[0].mxu0
      %v1607 = vpop.f32.mrb[0].mxu0
      %v1608 = vadd.f32 0.0, %v1607
      %v1609 = vpop.f32.mrb[0].mxu0
      %1610 = vmatprep.mubr.bf16.mxu0 0
      %1611 = vmatmul.mubr.bf16.gmra.mrb[0].mxu0 %v1557
      %v1612 = vpop.f32.mrb[0].mxu0
      %v1613 = vadd.f32 0.0, %v1612
      %v1614 = vpop.f32.mrb[0].mxu0
      %v1615 = vpop.f32.mrb[0].mxu0
      %v1616 = vadd.f32 0.0, %v1615
      %v1617 = vpop.f32.mrb[0].mxu0
      %1618 = vmatprep.mubr.bf16.mxu0 0
      %1619 = vmatmul.mubr.bf16.gmra.mrb[0].mxu0 %v1560
      %v1620 = vpop.f32.mrb[0].mxu0
      %v1621 = vadd.f32 0.0, %v1620
      %v1622 = vpop.f32.mrb[0].mxu0
      %v1623 = vpop.f32.mrb[0].mxu0
      %v1624 = vadd.f32 0.0, %v1623
      %v1625 = vpop.f32.mrb[0].mxu0
      %1626 = vdwg.mxu0
      %1635 = vrot.lane.b32.xlu0 %v1597, 16
      %v1636 = vpop.permute.xlu0 %1635
      %1637 = vrot.lane.b32.xlu0 %v1600, 16
      %v1638 = vpop.permute.xlu0 %1637
      %1639 = vrot.lane.b32.xlu0 %v1605, 16
      %v1640 = vpop.permute.xlu0 %1639
      %1641 = vrot.lane.b32.xlu0 %v1608, 16
      %v1642 = vpop.permute.xlu0 %1641
      %1643 = vrot.lane.b32.xlu0 %v1613, 16
      %v1644 = vpop.permute.xlu0 %1643
      %1645 = vrot.lane.b32.xlu0 %v1616, 16
      %v1646 = vpop.permute.xlu0 %1645
      %1647 = vrot.lane.b32.xlu0 %v1621, 16
      %v1648 = vpop.permute.xlu0 %1647
      %1649 = vrot.lane.b32.xlu0 %v1624, 16
      %v1650 = vpop.permute.xlu0 %1649
      %vm1659 = vcmask 195712
      %1660 = vst.msk [vmem:[#allocation2] sm:$0xff] %vm1659, %v1636
      %1661 = vst.msk [vmem:[#allocation2 + $0x8] sm:$0xff] %vm1659, %v1638
      %1662 = vst.msk [vmem:[#allocation2 + $0x10] sm:$0xff] %vm1659, %v1640
      %1663 = vst.msk [vmem:[#allocation2 + $0x18] sm:$0xff] %vm1659, %v1642
      %1664 = vst.msk [vmem:[#allocation2 + $0x20] sm:$0xff] %vm1659, %v1644
      %1665 = vst.msk [vmem:[#allocation2 + $0x28] sm:$0xff] %vm1659, %v1646
      %1666 = vst.msk [vmem:[#allocation2 + $0x30] sm:$0xff] %vm1659, %v1648
      %1667 = vst.msk [vmem:[#allocation2 + $0x38] sm:$0xff] %vm1659, %v1650
      %v1668 = vpack.c.bf16 %v1288, %v1287
      %v1669 = vpack.c.bf16 %v1290, %v1289
      %v1670 = vpack.c.bf16 %v1292, %v1291
      %v1671 = vpack.c.bf16 %v1294, %v1293
      %1672 = vrot.lane.b32.xlu0 %v521, 40
      %v1673 = vpop.permute.xlu0 %1672
      %1674 = vrot.lane.b32.xlu0 %v522, 40
      %v1675 = vpop.permute.xlu0 %1674
      %1676 = vrot.lane.b32.xlu0 %v523, 40
      %v1677 = vpop.permute.xlu0 %1676
      %1678 = vrot.lane.b32.xlu0 %v524, 40
      %v1679 = vpop.permute.xlu0 %1678
      %v1685 = vsel %vm942, %v1668, 0
      %v1688 = vsel %vm942, %v1669, 0
      %v1691 = vsel %vm942, %v1670, 0
      %v1694 = vsel %vm942, %v1671, 0
      %1696 = vmatprep.subr.bf16.mxu0 0
      %1697 = vmatpush1.bf16.msra.mxu0 %v1673
      %1698 = vmatprep.subr.bf16.mxu0 0
      %1699 = vmatpush1.bf16.msra.mxu0 %v1675
      %1700 = vmatprep.subr.bf16.mxu0 0
      %1701 = vmatpush1.bf16.msra.mxu0 %v1677
      %1702 = vmatprep.subr.bf16.mxu0 0
      %1703 = vmatpush1.bf16.msra.mxu0 %v1679
      %1704 = vmatprep.subr.bf16.mxu0 0
      %1705 = vmatpush1.bf16.msra.mxu0 0
      %1706 = vmatprep.subr.bf16.mxu0 0
      %1707 = vmatpush1.bf16.msra.mxu0 0
      %1708 = vmatprep.subr.bf16.mxu0 0
      %1709 = vmatpush1.bf16.msra.mxu0 0
      %1710 = vmatprep.subr.bf16.mxu0 0
      %1711 = vmatpush1.bf16.msra.mxu0 0
      %1712 = vmatprep.subr.bf16.mxu0 0
      %1713 = vmatpush1.bf16.msra.mxu0 0
      %1714 = vmatprep.subr.bf16.mxu0 0
      %1715 = vmatpush1.bf16.msra.mxu0 0
      %1716 = vmatprep.subr.bf16.mxu0 0
      %1717 = vmatpush1.bf16.msra.mxu0 0
      %1718 = vmatprep.subr.bf16.mxu0 0
      %1719 = vmatpush1.bf16.msra.mxu0 0
      %1720 = vmatprep.subr.bf16.mxu0 0
      %1721 = vmatpush1.bf16.msra.mxu0 0
      %1722 = vmatprep.subr.bf16.mxu0 0
      %1723 = vmatpush1.bf16.msra.mxu0 0
      %1724 = vmatprep.subr.bf16.mxu0 0
      %1725 = vmatpush1.bf16.msra.mxu0 0
      %1726 = vmatprep.subr.bf16.mxu0 0
      %1727 = vmatpush1.bf16.msra.mxu0 0
      %1728 = vmatprep.mubr.bf16.mxu0 0
      %1729 = vmatmul.mubr.bf16.gmra.mrb[0].mxu0 %v1685
      %v1730 = vpop.f32.mrb[0].mxu0
      %v1731 = vadd.f32 0.0, %v1730
      %v1732 = vpop.f32.mrb[0].mxu0
      %v1733 = vpop.f32.mrb[0].mxu0
      %v1734 = vadd.f32 0.0, %v1733
      %v1735 = vpop.f32.mrb[0].mxu0
      %1736 = vmatprep.mubr.bf16.mxu0 0
      %1737 = vmatmul.mubr.bf16.gmra.mrb[0].mxu0 %v1688
      %v1738 = vpop.f32.mrb[0].mxu0
      %v1739 = vadd.f32 0.0, %v1738
      %v1740 = vpop.f32.mrb[0].mxu0
      %v1741 = vpop.f32.mrb[0].mxu0
      %v1742 = vadd.f32 0.0, %v1741
      %v1743 = vpop.f32.mrb[0].mxu0
      %1744 = vmatprep.mubr.bf16.mxu0 0
      %1745 = vmatmul.mubr.bf16.gmra.mrb[0].mxu0 %v1691
      %v1746 = vpop.f32.mrb[0].mxu0
      %v1747 = vadd.f32 0.0, %v1746
      %v1748 = vpop.f32.mrb[0].mxu0
      %v1749 = vpop.f32.mrb[0].mxu0
      %v1750 = vadd.f32 0.0, %v1749
      %v1751 = vpop.f32.mrb[0].mxu0
      %1752 = vmatprep.mubr.bf16.mxu0 0
      %1753 = vmatmul.mubr.bf16.gmra.mrb[0].mxu0 %v1694
      %v1754 = vpop.f32.mrb[0].mxu0
      %v1755 = vadd.f32 0.0, %v1754
      %v1756 = vpop.f32.mrb[0].mxu0
      %v1757 = vpop.f32.mrb[0].mxu0
      %v1758 = vadd.f32 0.0, %v1757
      %v1759 = vpop.f32.mrb[0].mxu0
      %1760 = vdwg.mxu0
      %1769 = vrot.lane.b32.xlu0 %v1731, 24
      %v1770 = vpop.permute.xlu0 %1769
      %1771 = vrot.lane.b32.xlu0 %v1734, 24
      %v1772 = vpop.permute.xlu0 %1771
      %1773 = vrot.lane.b32.xlu0 %v1739, 24
      %v1774 = vpop.permute.xlu0 %1773
      %1775 = vrot.lane.b32.xlu0 %v1742, 24
      %v1776 = vpop.permute.xlu0 %1775
      %1777 = vrot.lane.b32.xlu0 %v1747, 24
      %v1778 = vpop.permute.xlu0 %1777
      %1779 = vrot.lane.b32.xlu0 %v1750, 24
      %v1780 = vpop.permute.xlu0 %1779
      %1781 = vrot.lane.b32.xlu0 %v1755, 24
      %v1782 = vpop.permute.xlu0 %1781
      %1783 = vrot.lane.b32.xlu0 %v1758, 24
      %v1784 = vpop.permute.xlu0 %1783
      %vm1793 = vcmask 261312
      %1794 = vst.msk [vmem:[#allocation2] sm:$0xff] %vm1793, %v1770
      %1795 = vst.msk [vmem:[#allocation2 + $0x8] sm:$0xff] %vm1793, %v1772
      %1796 = vst.msk [vmem:[#allocation2 + $0x10] sm:$0xff] %vm1793, %v1774
      %1797 = vst.msk [vmem:[#allocation2 + $0x18] sm:$0xff] %vm1793, %v1776
      %1798 = vst.msk [vmem:[#allocation2 + $0x20] sm:$0xff] %vm1793, %v1778
      %1799 = vst.msk [vmem:[#allocation2 + $0x28] sm:$0xff] %vm1793, %v1780
      %1800 = vst.msk [vmem:[#allocation2 + $0x30] sm:$0xff] %vm1793, %v1782
      %1801 = vst.msk [vmem:[#allocation2 + $0x38] sm:$0xff] %vm1793, %v1784
      %v1802 = vld [vmem:[#allocation2] sm:$0xff]
      %v1803 = vld [vmem:[#allocation2 + $0x8] sm:$0xff]
      %v1804 = vld [vmem:[#allocation2 + $0x10] sm:$0xff]
      %v1805 = vld [vmem:[#allocation2 + $0x18] sm:$0xff]
      %v1806 = vld [vmem:[#allocation2 + $0x20] sm:$0xff]
      %v1807 = vld [vmem:[#allocation2 + $0x28] sm:$0xff]
      %v1808 = vld [vmem:[#allocation2 + $0x30] sm:$0xff]
      %v1809 = vld [vmem:[#allocation2 + $0x38] sm:$0xff]
      %v1810 = vld [vmem:[%s1 + $0x20] sm:$0xf]
      %v1811 = vld [vmem:[%s1 + $0x24] sm:$0xf]
      %v1812 = vld [vmem:[%s1 + $0x28] sm:$0xf]
      %v1813 = vld [vmem:[%s1 + $0x2c] sm:$0xf]
      %v1814 = vpack.c.bf16 %v1803, %v1802
      %v1815 = vpack.c.bf16 %v1805, %v1804
      %v1816 = vpack.c.bf16 %v1807, %v1806
      %v1817 = vpack.c.bf16 %v1809, %v1808
      %v1818 = vlaneseq
      %v1819 = vshrl.u32 %v1818, 7
      %v1820 = vsub.s32 3, %v1819
      %v1821 = vrot.slane %v170, %v1820
      %v1826 = vunpack.c.l.b16 %v1810
      %v1827 = vunpack.c.l.b16 %v1811
      %v1828 = vunpack.c.l.b16 %v1812
      %v1829 = vunpack.c.l.b16 %v1813
      %v1830 = vpack.c.b16 %v1827, %v1826
      %v1831 = vpack.c.b16 %v1829, %v1828
      %v1835 = vsel %vm399, %v1814, 0
      %v1838 = vsel %vm399, %v1815, 0
      %v1841 = vsel %vm399, %v1816, 0
      %v1844 = vsel %vm399, %v1817, 0
      %1846 = vmatprep.subr.bf16.mxu0 0
      %1847 = vmatpush1.bf16.msra.mxu0 %v1830
      %1848 = vmatprep.subr.bf16.mxu0 0
      %1849 = vmatpush1.bf16.msra.mxu0 %v1831
      %1850 = vmatprep.subr.bf16.mxu0 0
      %1851 = vmatpush1.bf16.msra.mxu0 0
      %1852 = vmatprep.subr.bf16.mxu0 0
      %1853 = vmatpush1.bf16.msra.mxu0 0
      %1854 = vmatprep.subr.bf16.mxu0 0
      %1855 = vmatpush1.bf16.msra.mxu0 0
      %1856 = vmatprep.subr.bf16.mxu0 0
      %1857 = vmatpush1.bf16.msra.mxu0 0
      %1858 = vmatprep.subr.bf16.mxu0 0
      %1859 = vmatpush1.bf16.msra.mxu0 0
      %1860 = vmatprep.subr.bf16.mxu0 0
      %1861 = vmatpush1.bf16.msra.mxu0 0
      %1862 = vmatprep.subr.bf16.mxu0 0
      %1863 = vmatpush1.bf16.msra.mxu0 0
      %1864 = vmatprep.subr.bf16.mxu0 0
      %1865 = vmatpush1.bf16.msra.mxu0 0
      %1866 = vmatprep.subr.bf16.mxu0 0
      %1867 = vmatpush1.bf16.msra.mxu0 0
      %1868 = vmatprep.subr.bf16.mxu0 0
      %1869 = vmatpush1.bf16.msra.mxu0 0
      %1870 = vmatprep.subr.bf16.mxu0 0
      %1871 = vmatpush1.bf16.msra.mxu0 0
      %1872 = vmatprep.subr.bf16.mxu0 0
      %1873 = vmatpush1.bf16.msra.mxu0 0
      %1874 = vmatprep.subr.bf16.mxu0 0
      %1875 = vmatpush1.bf16.msra.mxu0 0
      %1876 = vmatprep.subr.bf16.mxu0 0
      %1877 = vmatpush1.bf16.msra.mxu0 0
      %1878 = vmatprep.mubr.bf16.mxu0 0
      %1879 = vmatmul.mubr.bf16.gmra.mrb[0].mxu0 %v1835
      %v1880 = vpop.f32.mrb[0].mxu0
      %v1881 = vadd.f32 %v1821, %v1880
      %v1882 = vpop.f32.mrb[0].mxu0
      %v1883 = vpop.f32.mrb[0].mxu0
      %v1884 = vadd.f32 %v1821, %v1883
      %v1885 = vpop.f32.mrb[0].mxu0
      %1886 = vmatprep.mubr.bf16.mxu0 0
      %1887 = vmatmul.mubr.bf16.gmra.mrb[0].mxu0 %v1838
      %v1888 = vpop.f32.mrb[0].mxu0
      %v1889 = vadd.f32 %v1821, %v1888
      %v1890 = vpop.f32.mrb[0].mxu0
      %v1891 = vpop.f32.mrb[0].mxu0
      %v1892 = vadd.f32 %v1821, %v1891
      %v1893 = vpop.f32.mrb[0].mxu0
      %1894 = vmatprep.mubr.bf16.mxu0 0
      %1895 = vmatmul.mubr.bf16.gmra.mrb[0].mxu0 %v1841
      %v1896 = vpop.f32.mrb[0].mxu0
      %v1897 = vadd.f32 %v1821, %v1896
      %v1898 = vpop.f32.mrb[0].mxu0
      %v1899 = vpop.f32.mrb[0].mxu0
      %v1900 = vadd.f32 %v1821, %v1899
      %v1901 = vpop.f32.mrb[0].mxu0
      %1902 = vmatprep.mubr.bf16.mxu0 0
      %1903 = vmatmul.mubr.bf16.gmra.mrb[0].mxu0 %v1844
      %v1904 = vpop.f32.mrb[0].mxu0
      %v1905 = vadd.f32 %v1821, %v1904
      %v1906 = vpop.f32.mrb[0].mxu0
      %v1907 = vpop.f32.mrb[0].mxu0
      %v1908 = vadd.f32 %v1821, %v1907
      %v1909 = vpop.f32.mrb[0].mxu0
      %1910 = vdwg.mxu0
      %v1911 = vadd.f32 %v345, %v1881
      %v1912 = vadd.f32 %v348, %v1884
      %v1913 = vadd.f32 %v353, %v1889
      %v1914 = vadd.f32 %v356, %v1892
      %v1915 = vadd.f32 %v361, %v1897
      %v1916 = vadd.f32 %v364, %v1900
      %v1917 = vadd.f32 %v369, %v1905
      %v1918 = vadd.f32 %v372, %v1908
      %v1919 = vsel %vm399, %v1911, 0.0
      %1920 = vadd.xlane.f32.xlu0 %v1919
      %v1921 = vpop.xlane.xlu0 %1920
      %v1922 = vsel %vm399, %v1912, 0.0
      %1923 = vadd.xlane.f32.xlu0 %v1922
      %v1924 = vpop.xlane.xlu0 %1923
      %v1925 = vsel %vm399, %v1913, 0.0
      %1926 = vadd.xlane.f32.xlu0 %v1925
      %v1927 = vpop.xlane.xlu0 %1926
      %v1928 = vsel %vm399, %v1914, 0.0
      %1929 = vadd.xlane.f32.xlu0 %v1928
      %v1930 = vpop.xlane.xlu0 %1929
      %v1931 = vsel %vm399, %v1915, 0.0
      %1932 = vadd.xlane.f32.xlu0 %v1931
      %v1933 = vpop.xlane.xlu0 %1932
      %v1934 = vsel %vm399, %v1916, 0.0
      %1935 = vadd.xlane.f32.xlu0 %v1934
      %v1936 = vpop.xlane.xlu0 %1935
      %v1937 = vsel %vm399, %v1917, 0.0
      %1938 = vadd.xlane.f32.xlu0 %v1937
      %v1939 = vpop.xlane.xlu0 %1938
      %v1940 = vsel %vm399, %v1918, 0.0
      %1941 = vadd.xlane.f32.xlu0 %v1940
      %v1942 = vpop.xlane.xlu0 %1941
      %v1943 = vrcp.pop 32.0
      %v1944 = vmul.f32 %v1921, %v1943
      %v1945 = vmul.f32 %v1924, %v1943
      %v1946 = vmul.f32 %v1927, %v1943
      %v1947 = vmul.f32 %v1930, %v1943
      %v1948 = vmul.f32 %v1933, %v1943
      %v1949 = vmul.f32 %v1936, %v1943
      %v1950 = vmul.f32 %v1939, %v1943
      %v1951 = vmul.f32 %v1942, %v1943
      %v1952 = vsub.f32 %v1911, %v1944
      %v1953 = vsub.f32 %v1912, %v1945
      %v1954 = vsub.f32 %v1913, %v1946
      %v1955 = vsub.f32 %v1914, %v1947
      %v1956 = vsub.f32 %v1915, %v1948
      %v1957 = vsub.f32 %v1916, %v1949
      %v1958 = vsub.f32 %v1917, %v1950
      %v1959 = vsub.f32 %v1918, %v1951
      %v1960 = vmul.f32 %v1952, %v1952
      %v1961 = vmul.f32 %v1953, %v1953
      %v1962 = vmul.f32 %v1954, %v1954
      %v1963 = vmul.f32 %v1955, %v1955
      %v1964 = vmul.f32 %v1956, %v1956
      %v1965 = vmul.f32 %v1957, %v1957
      %v1966 = vmul.f32 %v1958, %v1958
      %v1967 = vmul.f32 %v1959, %v1959
      %v1968 = vsel %vm399, %v1960, 0.0
      %1969 = vadd.xlane.f32.xlu0 %v1968
      %v1970 = vpop.xlane.xlu0 %1969
      %v1971 = vsel %vm399, %v1961, 0.0
      %1972 = vadd.xlane.f32.xlu0 %v1971
      %v1973 = vpop.xlane.xlu0 %1972
      %v1974 = vsel %vm399, %v1962, 0.0
      %1975 = vadd.xlane.f32.xlu0 %v1974
      %v1976 = vpop.xlane.xlu0 %1975
      %v1977 = vsel %vm399, %v1963, 0.0
      %1978 = vadd.xlane.f32.xlu0 %v1977
      %v1979 = vpop.xlane.xlu0 %1978
      %v1980 = vsel %vm399, %v1964, 0.0
      %1981 = vadd.xlane.f32.xlu0 %v1980
      %v1982 = vpop.xlane.xlu0 %1981
      %v1983 = vsel %vm399, %v1965, 0.0
      %1984 = vadd.xlane.f32.xlu0 %v1983
      %v1985 = vpop.xlane.xlu0 %1984
      %v1986 = vsel %vm399, %v1966, 0.0
      %1987 = vadd.xlane.f32.xlu0 %v1986
      %v1988 = vpop.xlane.xlu0 %1987
      %v1989 = vsel %vm399, %v1967, 0.0
      %1990 = vadd.xlane.f32.xlu0 %v1989
      %v1991 = vpop.xlane.xlu0 %1990
      %v1992 = vmul.f32 %v1970, %v1943
      %v1993 = vmul.f32 %v1973, %v1943
      %v1994 = vmul.f32 %v1976, %v1943
      %v1995 = vmul.f32 %v1979, %v1943
      %v1996 = vmul.f32 %v1982, %v1943
      %v1997 = vmul.f32 %v1985, %v1943
      %v1998 = vmul.f32 %v1988, %v1943
      %v1999 = vmul.f32 %v1991, %v1943
      %v2000 = vadd.f32 %v1992, 1e-05
      %v2001 = vadd.f32 %v1993, 1e-05
      %v2002 = vadd.f32 %v1994, 1e-05
      %v2003 = vadd.f32 %v1995, 1e-05
      %v2004 = vadd.f32 %v1996, 1e-05
      %v2005 = vadd.f32 %v1997, 1e-05
      %v2006 = vadd.f32 %v1998, 1e-05
      %v2007 = vadd.f32 %v1999, 1e-05
      %v2008 = vrsqrt.pop %v2000
      %v2009 = vrsqrt.pop %v2001
      %v2010 = vrsqrt.pop %v2002
      %v2011 = vrsqrt.pop %v2003
      %v2012 = vrsqrt.pop %v2004
      %v2013 = vrsqrt.pop %v2005
      %v2014 = vrsqrt.pop %v2006
      %v2015 = vrsqrt.pop %v2007
      %v2016 = vmul.f32 %v1952, %v2008
      %v2017 = vmul.f32 %v1953, %v2009
      %v2018 = vmul.f32 %v1954, %v2010
      %v2019 = vmul.f32 %v1955, %v2011
      %v2020 = vmul.f32 %v1956, %v2012
      %v2021 = vmul.f32 %v1957, %v2013
      %v2022 = vmul.f32 %v1958, %v2014
      %v2023 = vmul.f32 %v1959, %v2015
      %v2024 = vlaneseq
      %v2025 = vshrl.u32 %v2024, 7
      %v2026 = vsub.s32 4, %v2025
      %v2027 = vrot.slane %v170, %v2026
      %v2028 = vmul.f32 %v2016, %v2027
      %v2029 = vmul.f32 %v2017, %v2027
      %v2030 = vmul.f32 %v2018, %v2027
      %v2031 = vmul.f32 %v2019, %v2027
      %v2032 = vmul.f32 %v2020, %v2027
      %v2033 = vmul.f32 %v2021, %v2027
      %v2034 = vmul.f32 %v2022, %v2027
      %v2035 = vmul.f32 %v2023, %v2027
      %v2036 = vlaneseq
      %v2037 = vshrl.u32 %v2036, 7
      %v2038 = vsub.s32 5, %v2037
      %v2039 = vrot.slane %v170, %v2038
      %v2040 = vadd.f32 %v2028, %v2039
      %v2041 = vadd.f32 %v2029, %v2039
      %v2042 = vadd.f32 %v2030, %v2039
      %v2043 = vadd.f32 %v2031, %v2039
      %v2044 = vadd.f32 %v2032, %v2039
      %v2045 = vadd.f32 %v2033, %v2039
      %v2046 = vadd.f32 %v2034, %v2039
      %v2047 = vadd.f32 %v2035, %v2039
      %v2048 = vld [vmem:[%s1 + $0x30] sm:$0xf]
      %v2049 = vld [vmem:[%s1 + $0x34] sm:$0xf]
      %v2050 = vld [vmem:[%s1 + $0x38] sm:$0xf]
      %v2051 = vld [vmem:[%s1 + $0x3c] sm:$0xf]
      %v2052 = vpack.c.bf16 %v2041, %v2040
      %v2053 = vpack.c.bf16 %v2043, %v2042
      %v2054 = vpack.c.bf16 %v2045, %v2044
      %v2055 = vpack.c.bf16 %v2047, %v2046
      %v2056 = vlaneseq
      %v2057 = vshrl.u32 %v2056, 7
      %v2058 = vsub.s32 6, %v2057
      %v2059 = vrot.slane %v170, %v2058
      %v2064 = vunpack.c.l.b16 %v2048
      %v2065 = vunpack.c.l.b16 %v2049
      %v2066 = vunpack.c.l.b16 %v2050
      %v2067 = vunpack.c.l.b16 %v2051
      %v2068 = vpack.c.b16 %v2065, %v2064
      %v2069 = vpack.c.b16 %v2067, %v2066
      %v2073 = vsel %vm399, %v2052, 0
      %v2076 = vsel %vm399, %v2053, 0
      %v2079 = vsel %vm399, %v2054, 0
      %v2082 = vsel %vm399, %v2055, 0
      %2084 = vmatprep.subr.bf16.mxu0 0
      %2085 = vmatpush1.bf16.msra.mxu0 %v2068
      %2086 = vmatprep.subr.bf16.mxu0 0
      %2087 = vmatpush1.bf16.msra.mxu0 %v2069
      %2088 = vmatprep.subr.bf16.mxu0 0
      %2089 = vmatpush1.bf16.msra.mxu0 0
      %2090 = vmatprep.subr.bf16.mxu0 0
      %2091 = vmatpush1.bf16.msra.mxu0 0
      %2092 = vmatprep.subr.bf16.mxu0 0
      %2093 = vmatpush1.bf16.msra.mxu0 0
      %2094 = vmatprep.subr.bf16.mxu0 0
      %2095 = vmatpush1.bf16.msra.mxu0 0
      %2096 = vmatprep.subr.bf16.mxu0 0
      %2097 = vmatpush1.bf16.msra.mxu0 0
      %2098 = vmatprep.subr.bf16.mxu0 0
      %2099 = vmatpush1.bf16.msra.mxu0 0
      %2100 = vmatprep.subr.bf16.mxu0 0
      %2101 = vmatpush1.bf16.msra.mxu0 0
      %2102 = vmatprep.subr.bf16.mxu0 0
      %2103 = vmatpush1.bf16.msra.mxu0 0
      %2104 = vmatprep.subr.bf16.mxu0 0
      %2105 = vmatpush1.bf16.msra.mxu0 0
      %2106 = vmatprep.subr.bf16.mxu0 0
      %2107 = vmatpush1.bf16.msra.mxu0 0
      %2108 = vmatprep.subr.bf16.mxu0 0
      %2109 = vmatpush1.bf16.msra.mxu0 0
      %2110 = vmatprep.subr.bf16.mxu0 0
      %2111 = vmatpush1.bf16.msra.mxu0 0
      %2112 = vmatprep.subr.bf16.mxu0 0
      %2113 = vmatpush1.bf16.msra.mxu0 0
      %2114 = vmatprep.subr.bf16.mxu0 0
      %2115 = vmatpush1.bf16.msra.mxu0 0
      %2116 = vmatprep.mubr.bf16.mxu0 0
      %2117 = vmatmul.mubr.bf16.gmra.mrb[0].mxu0 %v2073
      %v2118 = vpop.f32.mrb[0].mxu0
      %v2119 = vadd.f32 %v2059, %v2118
      %v2120 = vpop.f32.mrb[0].mxu0
      %v2121 = vpop.f32.mrb[0].mxu0
      %v2122 = vadd.f32 %v2059, %v2121
      %v2123 = vpop.f32.mrb[0].mxu0
      %2124 = vmatprep.mubr.bf16.mxu0 0
      %2125 = vmatmul.mubr.bf16.gmra.mrb[0].mxu0 %v2076
      %v2126 = vpop.f32.mrb[0].mxu0
      %v2127 = vadd.f32 %v2059, %v2126
      %v2128 = vpop.f32.mrb[0].mxu0
      %v2129 = vpop.f32.mrb[0].mxu0
      %v2130 = vadd.f32 %v2059, %v2129
      %v2131 = vpop.f32.mrb[0].mxu0
      %2132 = vmatprep.mubr.bf16.mxu0 0
      %2133 = vmatmul.mubr.bf16.gmra.mrb[0].mxu0 %v2079
      %v2134 = vpop.f32.mrb[0].mxu0
      %v2135 = vadd.f32 %v2059, %v2134
      %v2136 = vpop.f32.mrb[0].mxu0
      %v2137 = vpop.f32.mrb[0].mxu0
      %v2138 = vadd.f32 %v2059, %v2137
      %v2139 = vpop.f32.mrb[0].mxu0
      %2140 = vmatprep.mubr.bf16.mxu0 0
      %2141 = vmatmul.mubr.bf16.gmra.mrb[0].mxu0 %v2082
      %v2142 = vpop.f32.mrb[0].mxu0
      %v2143 = vadd.f32 %v2059, %v2142
      %v2144 = vpop.f32.mrb[0].mxu0
      %v2145 = vpop.f32.mrb[0].mxu0
      %v2146 = vadd.f32 %v2059, %v2145
      %v2147 = vpop.f32.mrb[0].mxu0
      %2148 = vdwg.mxu0
      %v2149 = vmax.f32 %v2119, 0.0
      %v2150 = vmax.f32 %v2122, 0.0
      %v2151 = vmax.f32 %v2127, 0.0
      %v2152 = vmax.f32 %v2130, 0.0
      %v2153 = vmax.f32 %v2135, 0.0
      %v2154 = vmax.f32 %v2138, 0.0
      %v2155 = vmax.f32 %v2143, 0.0
      %v2156 = vmax.f32 %v2146, 0.0
      %v2157 = vld [vmem:[%s1 + $0x40] sm:$0xf]
      %v2158 = vld [vmem:[%s1 + $0x44] sm:$0xf]
      %v2159 = vld [vmem:[%s1 + $0x48] sm:$0xf]
      %v2160 = vld [vmem:[%s1 + $0x4c] sm:$0xf]
      %v2161 = vld [vmem:[%s1 + $0x50] sm:$0xf]
      %v2162 = vld [vmem:[%s1 + $0x54] sm:$0xf]
      %v2163 = vld [vmem:[%s1 + $0x58] sm:$0xf]
      %v2164 = vld [vmem:[%s1 + $0x5c] sm:$0xf]
      %v2165 = vpack.c.bf16 %v2150, %v2149
      %v2166 = vpack.c.bf16 %v2152, %v2151
      %v2167 = vpack.c.bf16 %v2154, %v2153
      %v2168 = vpack.c.bf16 %v2156, %v2155
      %v2169 = vlaneseq
      %v2170 = vshrl.u32 %v2169, 7
      %v2171 = vsub.s32 7, %v2170
      %v2172 = vrot.slane %v170, %v2171
      %v2181 = vunpack.c.l.b16 %v2157
      %v2182 = vunpack.c.l.b16 %v2158
      %v2183 = vunpack.c.l.b16 %v2159
      %v2184 = vunpack.c.l.b16 %v2160
      %v2185 = vunpack.c.l.b16 %v2161
      %v2186 = vunpack.c.l.b16 %v2162
      %v2187 = vunpack.c.l.b16 %v2163
      %v2188 = vunpack.c.l.b16 %v2164
      %v2189 = vpack.c.b16 %v2182, %v2181
      %v2190 = vpack.c.b16 %v2184, %v2183
      %v2191 = vpack.c.b16 %v2186, %v2185
      %v2192 = vpack.c.b16 %v2188, %v2187
      %v2198 = vsel %vm942, %v2165, 0
      %v2201 = vsel %vm942, %v2166, 0
      %v2204 = vsel %vm942, %v2167, 0
      %v2207 = vsel %vm942, %v2168, 0
      %2209 = vmatprep.subr.bf16.mxu0 0
      %2210 = vmatpush1.bf16.msra.mxu0 %v2189
      %2211 = vmatprep.subr.bf16.mxu0 0
      %2212 = vmatpush1.bf16.msra.mxu0 %v2190
      %2213 = vmatprep.subr.bf16.mxu0 0
      %2214 = vmatpush1.bf16.msra.mxu0 %v2191
      %2215 = vmatprep.subr.bf16.mxu0 0
      %2216 = vmatpush1.bf16.msra.mxu0 %v2192
      %2217 = vmatprep.subr.bf16.mxu0 0
      %2218 = vmatpush1.bf16.msra.mxu0 0
      %2219 = vmatprep.subr.bf16.mxu0 0
      %2220 = vmatpush1.bf16.msra.mxu0 0
      %2221 = vmatprep.subr.bf16.mxu0 0
      %2222 = vmatpush1.bf16.msra.mxu0 0
      %2223 = vmatprep.subr.bf16.mxu0 0
      %2224 = vmatpush1.bf16.msra.mxu0 0
      %2225 = vmatprep.subr.bf16.mxu0 0
      %2226 = vmatpush1.bf16.msra.mxu0 0
      %2227 = vmatprep.subr.bf16.mxu0 0
      %2228 = vmatpush1.bf16.msra.mxu0 0
      %2229 = vmatprep.subr.bf16.mxu0 0
      %2230 = vmatpush1.bf16.msra.mxu0 0
      %2231 = vmatprep.subr.bf16.mxu0 0
      %2232 = vmatpush1.bf16.msra.mxu0 0
      %2233 = vmatprep.subr.bf16.mxu0 0
      %2234 = vmatpush1.bf16.msra.mxu0 0
      %2235 = vmatprep.subr.bf16.mxu0 0
      %2236 = vmatpush1.bf16.msra.mxu0 0
      %2237 = vmatprep.subr.bf16.mxu0 0
      %2238 = vmatpush1.bf16.msra.mxu0 0
      %2239 = vmatprep.subr.bf16.mxu0 0
      %2240 = vmatpush1.bf16.msra.mxu0 0
      %2241 = vmatprep.mubr.bf16.mxu0 0
      %2242 = vmatmul.mubr.bf16.gmra.mrb[0].mxu0 %v2198
      %v2243 = vpop.f32.mrb[0].mxu0
      %v2244 = vadd.f32 %v2172, %v2243
      %v2245 = vpop.f32.mrb[0].mxu0
      %v2246 = vpop.f32.mrb[0].mxu0
      %v2247 = vadd.f32 %v2172, %v2246
      %v2248 = vpop.f32.mrb[0].mxu0
      %2249 = vmatprep.mubr.bf16.mxu0 0
      %2250 = vmatmul.mubr.bf16.gmra.mrb[0].mxu0 %v2201
      %v2251 = vpop.f32.mrb[0].mxu0
      %v2252 = vadd.f32 %v2172, %v2251
      %v2253 = vpop.f32.mrb[0].mxu0
      %v2254 = vpop.f32.mrb[0].mxu0
      %v2255 = vadd.f32 %v2172, %v2254
      %v2256 = vpop.f32.mrb[0].mxu0
      %2257 = vmatprep.mubr.bf16.mxu0 0
      %2258 = vmatmul.mubr.bf16.gmra.mrb[0].mxu0 %v2204
      %v2259 = vpop.f32.mrb[0].mxu0
      %v2260 = vadd.f32 %v2172, %v2259
      %v2261 = vpop.f32.mrb[0].mxu0
      %v2262 = vpop.f32.mrb[0].mxu0
      %v2263 = vadd.f32 %v2172, %v2262
      %v2264 = vpop.f32.mrb[0].mxu0
      %2265 = vmatprep.mubr.bf16.mxu0 0
      %2266 = vmatmul.mubr.bf16.gmra.mrb[0].mxu0 %v2207
      %v2267 = vpop.f32.mrb[0].mxu0
      %v2268 = vadd.f32 %v2172, %v2267
      %v2269 = vpop.f32.mrb[0].mxu0
      %v2270 = vpop.f32.mrb[0].mxu0
      %v2271 = vadd.f32 %v2172, %v2270
      %v2272 = vpop.f32.mrb[0].mxu0
      %2273 = vdwg.mxu0
      %v2274 = vadd.f32 %v2040, %v2244
      %v2275 = vadd.f32 %v2041, %v2247
      %v2276 = vadd.f32 %v2042, %v2252
      %v2277 = vadd.f32 %v2043, %v2255
      %v2278 = vadd.f32 %v2044, %v2260
      %v2279 = vadd.f32 %v2045, %v2263
      %v2280 = vadd.f32 %v2046, %v2268
      %v2281 = vadd.f32 %v2047, %v2271
      %v2282 = vsel %vm399, %v2274, 0.0
      %2283 = vadd.xlane.f32.xlu0 %v2282
      %v2284 = vpop.xlane.xlu0 %2283
      %v2285 = vsel %vm399, %v2275, 0.0
      %2286 = vadd.xlane.f32.xlu0 %v2285
      %v2287 = vpop.xlane.xlu0 %2286
      %v2288 = vsel %vm399, %v2276, 0.0
      %2289 = vadd.xlane.f32.xlu0 %v2288
      %v2290 = vpop.xlane.xlu0 %2289
      %v2291 = vsel %vm399, %v2277, 0.0
      %2292 = vadd.xlane.f32.xlu0 %v2291
      %v2293 = vpop.xlane.xlu0 %2292
      %v2294 = vsel %vm399, %v2278, 0.0
      %2295 = vadd.xlane.f32.xlu0 %v2294
      %v2296 = vpop.xlane.xlu0 %2295
      %v2297 = vsel %vm399, %v2279, 0.0
      %2298 = vadd.xlane.f32.xlu0 %v2297
      %v2299 = vpop.xlane.xlu0 %2298
      %v2300 = vsel %vm399, %v2280, 0.0
      %2301 = vadd.xlane.f32.xlu0 %v2300
      %v2302 = vpop.xlane.xlu0 %2301
      %v2303 = vsel %vm399, %v2281, 0.0
      %2304 = vadd.xlane.f32.xlu0 %v2303
      %v2305 = vpop.xlane.xlu0 %2304
      %v2306 = vmul.f32 %v2284, %v1943
      %v2307 = vmul.f32 %v2287, %v1943
      %v2308 = vmul.f32 %v2290, %v1943
      %v2309 = vmul.f32 %v2293, %v1943
      %v2310 = vmul.f32 %v2296, %v1943
      %v2311 = vmul.f32 %v2299, %v1943
      %v2312 = vmul.f32 %v2302, %v1943
      %v2313 = vmul.f32 %v2305, %v1943
      %v2314 = vsub.f32 %v2274, %v2306
      %v2315 = vsub.f32 %v2275, %v2307
      %v2316 = vsub.f32 %v2276, %v2308
      %v2317 = vsub.f32 %v2277, %v2309
      %v2318 = vsub.f32 %v2278, %v2310
      %v2319 = vsub.f32 %v2279, %v2311
      %v2320 = vsub.f32 %v2280, %v2312
      %v2321 = vsub.f32 %v2281, %v2313
      %v2322 = vmul.f32 %v2314, %v2314
      %v2323 = vmul.f32 %v2315, %v2315
      %v2324 = vmul.f32 %v2316, %v2316
      %v2325 = vmul.f32 %v2317, %v2317
      %v2326 = vmul.f32 %v2318, %v2318
      %v2327 = vmul.f32 %v2319, %v2319
      %v2328 = vmul.f32 %v2320, %v2320
      %v2329 = vmul.f32 %v2321, %v2321
      %v2330 = vsel %vm399, %v2322, 0.0
      %2331 = vadd.xlane.f32.xlu0 %v2330
      %v2332 = vpop.xlane.xlu0 %2331
      %v2333 = vsel %vm399, %v2323, 0.0
      %2334 = vadd.xlane.f32.xlu0 %v2333
      %v2335 = vpop.xlane.xlu0 %2334
      %v2336 = vsel %vm399, %v2324, 0.0
      %2337 = vadd.xlane.f32.xlu0 %v2336
      %v2338 = vpop.xlane.xlu0 %2337
      %v2339 = vsel %vm399, %v2325, 0.0
      %2340 = vadd.xlane.f32.xlu0 %v2339
      %v2341 = vpop.xlane.xlu0 %2340
      %v2342 = vsel %vm399, %v2326, 0.0
      %2343 = vadd.xlane.f32.xlu0 %v2342
      %v2344 = vpop.xlane.xlu0 %2343
      %v2345 = vsel %vm399, %v2327, 0.0
      %2346 = vadd.xlane.f32.xlu0 %v2345
      %v2347 = vpop.xlane.xlu0 %2346
      %v2348 = vsel %vm399, %v2328, 0.0
      %2349 = vadd.xlane.f32.xlu0 %v2348
      %v2350 = vpop.xlane.xlu0 %2349
      %v2351 = vsel %vm399, %v2329, 0.0
      %2352 = vadd.xlane.f32.xlu0 %v2351
      %v2353 = vpop.xlane.xlu0 %2352
      %v2354 = vmul.f32 %v2332, %v1943
      %v2355 = vmul.f32 %v2335, %v1943
      %v2356 = vmul.f32 %v2338, %v1943
      %v2357 = vmul.f32 %v2341, %v1943
      %v2358 = vmul.f32 %v2344, %v1943
      %v2359 = vmul.f32 %v2347, %v1943
      %v2360 = vmul.f32 %v2350, %v1943
      %v2361 = vmul.f32 %v2353, %v1943
      %v2362 = vadd.f32 %v2354, 1e-05
      %v2363 = vadd.f32 %v2355, 1e-05
      %v2364 = vadd.f32 %v2356, 1e-05
      %v2365 = vadd.f32 %v2357, 1e-05
      %v2366 = vadd.f32 %v2358, 1e-05
      %v2367 = vadd.f32 %v2359, 1e-05
      %v2368 = vadd.f32 %v2360, 1e-05
      %v2369 = vadd.f32 %v2361, 1e-05
      %v2370 = vrsqrt.pop %v2362
      %v2371 = vrsqrt.pop %v2363
      %v2372 = vrsqrt.pop %v2364
      %v2373 = vrsqrt.pop %v2365
      %v2374 = vrsqrt.pop %v2366
      %v2375 = vrsqrt.pop %v2367
      %v2376 = vrsqrt.pop %v2368
      %v2377 = vrsqrt.pop %v2369
      %v2378 = vmul.f32 %v2314, %v2370
      %v2379 = vmul.f32 %v2315, %v2371
      %v2380 = vmul.f32 %v2316, %v2372
      %v2381 = vmul.f32 %v2317, %v2373
      %v2382 = vmul.f32 %v2318, %v2374
      %v2383 = vmul.f32 %v2319, %v2375
      %v2384 = vmul.f32 %v2320, %v2376
      %v2385 = vmul.f32 %v2321, %v2377
      %v2386 = vlaneseq
      %v2387 = vshrl.u32 %v2386, 7
      %v2388 = vsub.s32 0, %v2387
      %v2389 = vrot.slane %v171, %v2388
      %v2390 = vmul.f32 %v2378, %v2389
      %v2391 = vmul.f32 %v2379, %v2389
      %v2392 = vmul.f32 %v2380, %v2389
      %v2393 = vmul.f32 %v2381, %v2389
      %v2394 = vmul.f32 %v2382, %v2389
      %v2395 = vmul.f32 %v2383, %v2389
      %v2396 = vmul.f32 %v2384, %v2389
      %v2397 = vmul.f32 %v2385, %v2389
      %v2398 = vlaneseq
      %v2399 = vshrl.u32 %v2398, 7
      %v2400 = vsub.s32 1, %v2399
      %v2401 = vrot.slane %v171, %v2400
      %v2402 = vadd.f32 %v2390, %v2401
      %v2403 = vadd.f32 %v2391, %v2401
      %v2404 = vadd.f32 %v2392, %v2401
      %v2405 = vadd.f32 %v2393, %v2401
      %v2406 = vadd.f32 %v2394, %v2401
      %v2407 = vadd.f32 %v2395, %v2401
      %v2408 = vadd.f32 %v2396, %v2401
      %v2409 = vadd.f32 %v2397, %v2401
      %v2410 = vld [vmem:[%s1 + $0x60] sm:$0xf]
      %v2411 = vld [vmem:[%s1 + $0x64] sm:$0xf]
      %v2412 = vld [vmem:[%s1 + $0x68] sm:$0xf]
      %v2413 = vld [vmem:[%s1 + $0x6c] sm:$0xf]
      %v2414 = vpack.c.bf16 %v2403, %v2402
      %v2415 = vpack.c.bf16 %v2405, %v2404
      %v2416 = vpack.c.bf16 %v2407, %v2406
      %v2417 = vpack.c.bf16 %v2409, %v2408
      %v2418 = vlaneseq
      %v2419 = vshrl.u32 %v2418, 7
      %v2420 = vsub.s32 2, %v2419
      %v2421 = vrot.slane %v171, %v2420
      %v2426 = vunpack.c.l.b16 %v2410
      %v2427 = vunpack.c.l.b16 %v2411
      %v2428 = vunpack.c.l.b16 %v2412
      %v2429 = vunpack.c.l.b16 %v2413
      %v2430 = vpack.c.b16 %v2427, %v2426
      %v2431 = vpack.c.b16 %v2429, %v2428
      %v2435 = vsel %vm399, %v2414, 0
      %v2438 = vsel %vm399, %v2415, 0
      %v2441 = vsel %vm399, %v2416, 0
      %v2444 = vsel %vm399, %v2417, 0
      %2446 = vmatprep.subr.bf16.mxu0 0
      %2447 = vmatpush1.bf16.msra.mxu0 %v2430
      %2448 = vmatprep.subr.bf16.mxu0 0
      %2449 = vmatpush1.bf16.msra.mxu0 %v2431
      %2450 = vmatprep.subr.bf16.mxu0 0
      %2451 = vmatpush1.bf16.msra.mxu0 0
      %2452 = vmatprep.subr.bf16.mxu0 0
      %2453 = vmatpush1.bf16.msra.mxu0 0
      %2454 = vmatprep.subr.bf16.mxu0 0
      %2455 = vmatpush1.bf16.msra.mxu0 0
      %2456 = vmatprep.subr.bf16.mxu0 0
      %2457 = vmatpush1.bf16.msra.mxu0 0
      %2458 = vmatprep.subr.bf16.mxu0 0
      %2459 = vmatpush1.bf16.msra.mxu0 0
      %2460 = vmatprep.subr.bf16.mxu0 0
      %2461 = vmatpush1.bf16.msra.mxu0 0
      %2462 = vmatprep.subr.bf16.mxu0 0
      %2463 = vmatpush1.bf16.msra.mxu0 0
      %2464 = vmatprep.subr.bf16.mxu0 0
      %2465 = vmatpush1.bf16.msra.mxu0 0
      %2466 = vmatprep.subr.bf16.mxu0 0
      %2467 = vmatpush1.bf16.msra.mxu0 0
      %2468 = vmatprep.subr.bf16.mxu0 0
      %2469 = vmatpush1.bf16.msra.mxu0 0
      %2470 = vmatprep.subr.bf16.mxu0 0
      %2471 = vmatpush1.bf16.msra.mxu0 0
      %2472 = vmatprep.subr.bf16.mxu0 0
      %2473 = vmatpush1.bf16.msra.mxu0 0
      %2474 = vmatprep.subr.bf16.mxu0 0
      %2475 = vmatpush1.bf16.msra.mxu0 0
      %2476 = vmatprep.subr.bf16.mxu0 0
      %2477 = vmatpush1.bf16.msra.mxu0 0
      %2478 = vmatprep.mubr.bf16.mxu0 0
      %2479 = vmatmul.mubr.bf16.gmra.mrb[0].mxu0 %v2435
      %v2480 = vpop.f32.mrb[0].mxu0
      %v2481 = vadd.f32 %v2421, %v2480
      %v2482 = vpop.f32.mrb[0].mxu0
      %v2483 = vpop.f32.mrb[0].mxu0
      %v2484 = vadd.f32 %v2421, %v2483
      %v2485 = vpop.f32.mrb[0].mxu0
      %2486 = vmatprep.mubr.bf16.mxu0 0
      %2487 = vmatmul.mubr.bf16.gmra.mrb[0].mxu0 %v2438
      %v2488 = vpop.f32.mrb[0].mxu0
      %v2489 = vadd.f32 %v2421, %v2488
      %v2490 = vpop.f32.mrb[0].mxu0
      %v2491 = vpop.f32.mrb[0].mxu0
      %v2492 = vadd.f32 %v2421, %v2491
      %v2493 = vpop.f32.mrb[0].mxu0
      %2494 = vmatprep.mubr.bf16.mxu0 0
      %2495 = vmatmul.mubr.bf16.gmra.mrb[0].mxu0 %v2441
      %v2496 = vpop.f32.mrb[0].mxu0
      %v2497 = vadd.f32 %v2421, %v2496
      %v2498 = vpop.f32.mrb[0].mxu0
      %v2499 = vpop.f32.mrb[0].mxu0
      %v2500 = vadd.f32 %v2421, %v2499
      %v2501 = vpop.f32.mrb[0].mxu0
      %2502 = vmatprep.mubr.bf16.mxu0 0
      %2503 = vmatmul.mubr.bf16.gmra.mrb[0].mxu0 %v2444
      %v2504 = vpop.f32.mrb[0].mxu0
      %v2505 = vadd.f32 %v2421, %v2504
      %v2506 = vpop.f32.mrb[0].mxu0
      %v2507 = vpop.f32.mrb[0].mxu0
      %v2508 = vadd.f32 %v2421, %v2507
      %v2509 = vpop.f32.mrb[0].mxu0
      %2510 = vdwg.mxu0
      %2511 = vrot.lane.b32.xlu0 %v174, 32
      %v2512 = vpop.permute.xlu0 %2511
      %2513 = vrot.lane.b32.xlu0 %v175, 32
      %v2514 = vpop.permute.xlu0 %2513
      %2515 = vrot.lane.b32.xlu0 %v176, 32
      %v2516 = vpop.permute.xlu0 %2515
      %2517 = vrot.lane.b32.xlu0 %v177, 32
      %v2518 = vpop.permute.xlu0 %2517
      %2519 = vrot.lane.b32.xlu0 %v178, 32
      %v2520 = vpop.permute.xlu0 %2519
      %2521 = vrot.lane.b32.xlu0 %v179, 32
      %v2522 = vpop.permute.xlu0 %2521
      %2523 = vrot.lane.b32.xlu0 %v180, 32
      %v2524 = vpop.permute.xlu0 %2523
      %2525 = vrot.lane.b32.xlu0 %v181, 32
      %v2526 = vpop.permute.xlu0 %2525
      %v2535 = vadd.f32 %v2481, %v2512
      %v2536 = vadd.f32 %v2484, %v2514
      %v2537 = vadd.f32 %v2489, %v2516
      %v2538 = vadd.f32 %v2492, %v2518
      %v2539 = vadd.f32 %v2497, %v2520
      %v2540 = vadd.f32 %v2500, %v2522
      %v2541 = vadd.f32 %v2505, %v2524
      %v2542 = vadd.f32 %v2508, %v2526
      %v2543 = vpack.c.bf16 %v173, %v173
      %v2544 = vpack.c.bf16 %v2536, %v2535
      %v2545 = vpack.c.bf16 %v2538, %v2537
      %v2546 = vpack.c.bf16 %v2540, %v2539
      %v2547 = vpack.c.bf16 %v2542, %v2541
      %v2548 = vpack.c.bf16 %v2484, %v2481
      %v2549 = vpack.c.bf16 %v2492, %v2489
      %v2550 = vpack.c.bf16 %v2500, %v2497
      %v2551 = vpack.c.bf16 %v2508, %v2505
      %v2553 = vsel %vm537, %v2543, 0
      %v2556 = vsel %vm537, %v2544, 0
      %v2559 = vsel %vm537, %v2545, 0
      %v2562 = vsel %vm537, %v2546, 0
      %v2565 = vsel %vm537, %v2547, 0
      %2567 = vmatprep.subr.bf16.mxu0 0
      %2568 = vmatpush1.bf16.xpose.msra.mxu0 %v2556
      %2569 = vmatprep.subr.bf16.mxu0 0
      %2570 = vmatpush1.bf16.xpose.msra.mxu0 %v2559
      %2571 = vmatprep.subr.bf16.mxu0 0
      %2572 = vmatpush1.bf16.xpose.msra.mxu0 %v2562
      %2573 = vmatprep.subr.bf16.mxu0 0
      %2574 = vmatpush1.bf16.xpose.msra.mxu0 %v2565
      %2575 = vmatprep.subr.bf16.mxu0 0
      %2576 = vmatpush1.bf16.xpose.msra.mxu0 0
      %2577 = vmatprep.subr.bf16.mxu0 0
      %2578 = vmatpush1.bf16.xpose.msra.mxu0 0
      %2579 = vmatprep.subr.bf16.mxu0 0
      %2580 = vmatpush1.bf16.xpose.msra.mxu0 0
      %2581 = vmatprep.subr.bf16.mxu0 0
      %2582 = vmatpush1.bf16.xpose.msra.mxu0 0
      %2583 = vmatprep.subr.bf16.mxu0 0
      %2584 = vmatpush1.bf16.xpose.msra.mxu0 0
      %2585 = vmatprep.subr.bf16.mxu0 0
      %2586 = vmatpush1.bf16.xpose.msra.mxu0 0
      %2587 = vmatprep.subr.bf16.mxu0 0
      %2588 = vmatpush1.bf16.xpose.msra.mxu0 0
      %2589 = vmatprep.subr.bf16.mxu0 0
      %2590 = vmatpush1.bf16.xpose.msra.mxu0 0
      %2591 = vmatprep.subr.bf16.mxu0 0
      %2592 = vmatpush1.bf16.xpose.msra.mxu0 0
      %2593 = vmatprep.subr.bf16.mxu0 0
      %2594 = vmatpush1.bf16.xpose.msra.mxu0 0
      %2595 = vmatprep.subr.bf16.mxu0 0
      %2596 = vmatpush1.bf16.xpose.msra.mxu0 0
      %2597 = vmatprep.subr.bf16.mxu0 0
      %2598 = vmatpush1.bf16.xpose.msra.mxu0 0
      %2599 = vmatprep.mubr.bf16.mxu0 0
      %2600 = vmatmul.mubr.bf16.gmra.mrb[0].mxu0 %v2553
      %v2601 = vpop.f32.mrb[0].mxu0
      %v2602 = vadd.f32 0.0, %v2601
      %v2603 = vpop.f32.mrb[0].mxu0
      %v2604 = vpop.f32.mrb[0].mxu0
      %v2605 = vpop.f32.mrb[0].mxu0
      %2606 = vdwg.mxu0
      %2608 = vrot.lane.b32.xlu0 %v2543, 120
      %v2609 = vpop.permute.xlu0 %2608
      %2614 = vrot.lane.b32.xlu0 %v2544, 120
      %v2615 = vpop.permute.xlu0 %2614
      %2616 = vrot.lane.b32.xlu0 %v2545, 120
      %v2617 = vpop.permute.xlu0 %2616
      %2618 = vrot.lane.b32.xlu0 %v2546, 120
      %v2619 = vpop.permute.xlu0 %2618
      %2620 = vrot.lane.b32.xlu0 %v2547, 120
      %v2621 = vpop.permute.xlu0 %2620
      %v2623 = vsel %vm537, %v2609, 0
      %v2626 = vsel %vm537, %v2615, 0
      %v2629 = vsel %vm537, %v2617, 0
      %v2632 = vsel %vm537, %v2619, 0
      %v2635 = vsel %vm537, %v2621, 0
      %2637 = vmatprep.subr.bf16.mxu0 0
      %2638 = vmatpush1.bf16.xpose.msra.mxu0 %v2626
      %2639 = vmatprep.subr.bf16.mxu0 0
      %2640 = vmatpush1.bf16.xpose.msra.mxu0 %v2629
      %2641 = vmatprep.subr.bf16.mxu0 0
      %2642 = vmatpush1.bf16.xpose.msra.mxu0 %v2632
      %2643 = vmatprep.subr.bf16.mxu0 0
      %2644 = vmatpush1.bf16.xpose.msra.mxu0 %v2635
      %2645 = vmatprep.subr.bf16.mxu0 0
      %2646 = vmatpush1.bf16.xpose.msra.mxu0 0
      %2647 = vmatprep.subr.bf16.mxu0 0
      %2648 = vmatpush1.bf16.xpose.msra.mxu0 0
      %2649 = vmatprep.subr.bf16.mxu0 0
      %2650 = vmatpush1.bf16.xpose.msra.mxu0 0
      %2651 = vmatprep.subr.bf16.mxu0 0
      %2652 = vmatpush1.bf16.xpose.msra.mxu0 0
      %2653 = vmatprep.subr.bf16.mxu0 0
      %2654 = vmatpush1.bf16.xpose.msra.mxu0 0
      %2655 = vmatprep.subr.bf16.mxu0 0
      %2656 = vmatpush1.bf16.xpose.msra.mxu0 0
      %2657 = vmatprep.subr.bf16.mxu0 0
      %2658 = vmatpush1.bf16.xpose.msra.mxu0 0
      %2659 = vmatprep.subr.bf16.mxu0 0
      %2660 = vmatpush1.bf16.xpose.msra.mxu0 0
      %2661 = vmatprep.subr.bf16.mxu0 0
      %2662 = vmatpush1.bf16.xpose.msra.mxu0 0
      %2663 = vmatprep.subr.bf16.mxu0 0
      %2664 = vmatpush1.bf16.xpose.msra.mxu0 0
      %2665 = vmatprep.subr.bf16.mxu0 0
      %2666 = vmatpush1.bf16.xpose.msra.mxu0 0
      %2667 = vmatprep.subr.bf16.mxu0 0
      %2668 = vmatpush1.bf16.xpose.msra.mxu0 0
      %2669 = vmatprep.mubr.bf16.mxu0 0
      %2670 = vmatmul.mubr.bf16.gmra.mrb[0].mxu0 %v2623
      %v2671 = vpop.f32.mrb[0].mxu0
      %v2672 = vadd.f32 0.0, %v2671
      %v2673 = vpop.f32.mrb[0].mxu0
      %v2674 = vpop.f32.mrb[0].mxu0
      %v2675 = vpop.f32.mrb[0].mxu0
      %2676 = vdwg.mxu0
      %2677 = vrot.lane.b32.xlu0 %v2543, 112
      %v2678 = vpop.permute.xlu0 %2677
      %2679 = vrot.lane.b32.xlu0 %v2544, 112
      %v2680 = vpop.permute.xlu0 %2679
      %2681 = vrot.lane.b32.xlu0 %v2545, 112
      %v2682 = vpop.permute.xlu0 %2681
      %2683 = vrot.lane.b32.xlu0 %v2546, 112
      %v2684 = vpop.permute.xlu0 %2683
      %2685 = vrot.lane.b32.xlu0 %v2547, 112
      %v2686 = vpop.permute.xlu0 %2685
      %v2688 = vsel %vm537, %v2678, 0
      %v2691 = vsel %vm537, %v2680, 0
      %v2694 = vsel %vm537, %v2682, 0
      %v2697 = vsel %vm537, %v2684, 0
      %v2700 = vsel %vm537, %v2686, 0
      %2702 = vmatprep.subr.bf16.mxu0 0
      %2703 = vmatpush1.bf16.xpose.msra.mxu0 %v2691
      %2704 = vmatprep.subr.bf16.mxu0 0
      %2705 = vmatpush1.bf16.xpose.msra.mxu0 %v2694
      %2706 = vmatprep.subr.bf16.mxu0 0
      %2707 = vmatpush1.bf16.xpose.msra.mxu0 %v2697
      %2708 = vmatprep.subr.bf16.mxu0 0
      %2709 = vmatpush1.bf16.xpose.msra.mxu0 %v2700
      %2710 = vmatprep.subr.bf16.mxu0 0
      %2711 = vmatpush1.bf16.xpose.msra.mxu0 0
      %2712 = vmatprep.subr.bf16.mxu0 0
      %2713 = vmatpush1.bf16.xpose.msra.mxu0 0
      %2714 = vmatprep.subr.bf16.mxu0 0
      %2715 = vmatpush1.bf16.xpose.msra.mxu0 0
      %2716 = vmatprep.subr.bf16.mxu0 0
      %2717 = vmatpush1.bf16.xpose.msra.mxu0 0
      %2718 = vmatprep.subr.bf16.mxu0 0
      %2719 = vmatpush1.bf16.xpose.msra.mxu0 0
      %2720 = vmatprep.subr.bf16.mxu0 0
      %2721 = vmatpush1.bf16.xpose.msra.mxu0 0
      %2722 = vmatprep.subr.bf16.mxu0 0
      %2723 = vmatpush1.bf16.xpose.msra.mxu0 0
      %2724 = vmatprep.subr.bf16.mxu0 0
      %2725 = vmatpush1.bf16.xpose.msra.mxu0 0
      %2726 = vmatprep.subr.bf16.mxu0 0
      %2727 = vmatpush1.bf16.xpose.msra.mxu0 0
      %2728 = vmatprep.subr.bf16.mxu0 0
      %2729 = vmatpush1.bf16.xpose.msra.mxu0 0
      %2730 = vmatprep.subr.bf16.mxu0 0
      %2731 = vmatpush1.bf16.xpose.msra.mxu0 0
      %2732 = vmatprep.subr.bf16.mxu0 0
      %2733 = vmatpush1.bf16.xpose.msra.mxu0 0
      %2734 = vmatprep.mubr.bf16.mxu0 0
      %2735 = vmatmul.mubr.bf16.gmra.mrb[0].mxu0 %v2688
      %v2736 = vpop.f32.mrb[0].mxu0
      %v2737 = vadd.f32 0.0, %v2736
      %v2738 = vpop.f32.mrb[0].mxu0
      %v2739 = vpop.f32.mrb[0].mxu0
      %v2740 = vpop.f32.mrb[0].mxu0
      %2741 = vdwg.mxu0
      %2742 = vrot.lane.b32.xlu0 %v2543, 104
      %v2743 = vpop.permute.xlu0 %2742
      %2744 = vrot.lane.b32.xlu0 %v2544, 104
      %v2745 = vpop.permute.xlu0 %2744
      %2746 = vrot.lane.b32.xlu0 %v2545, 104
      %v2747 = vpop.permute.xlu0 %2746
      %2748 = vrot.lane.b32.xlu0 %v2546, 104
      %v2749 = vpop.permute.xlu0 %2748
      %2750 = vrot.lane.b32.xlu0 %v2547, 104
      %v2751 = vpop.permute.xlu0 %2750
      %v2753 = vsel %vm537, %v2743, 0
      %v2756 = vsel %vm537, %v2745, 0
      %v2759 = vsel %vm537, %v2747, 0
      %v2762 = vsel %vm537, %v2749, 0
      %v2765 = vsel %vm537, %v2751, 0
      %2767 = vmatprep.subr.bf16.mxu0 0
      %2768 = vmatpush1.bf16.xpose.msra.mxu0 %v2756
      %2769 = vmatprep.subr.bf16.mxu0 0
      %2770 = vmatpush1.bf16.xpose.msra.mxu0 %v2759
      %2771 = vmatprep.subr.bf16.mxu0 0
      %2772 = vmatpush1.bf16.xpose.msra.mxu0 %v2762
      %2773 = vmatprep.subr.bf16.mxu0 0
      %2774 = vmatpush1.bf16.xpose.msra.mxu0 %v2765
      %2775 = vmatprep.subr.bf16.mxu0 0
      %2776 = vmatpush1.bf16.xpose.msra.mxu0 0
      %2777 = vmatprep.subr.bf16.mxu0 0
      %2778 = vmatpush1.bf16.xpose.msra.mxu0 0
      %2779 = vmatprep.subr.bf16.mxu0 0
      %2780 = vmatpush1.bf16.xpose.msra.mxu0 0
      %2781 = vmatprep.subr.bf16.mxu0 0
      %2782 = vmatpush1.bf16.xpose.msra.mxu0 0
      %2783 = vmatprep.subr.bf16.mxu0 0
      %2784 = vmatpush1.bf16.xpose.msra.mxu0 0
      %2785 = vmatprep.subr.bf16.mxu0 0
      %2786 = vmatpush1.bf16.xpose.msra.mxu0 0
      %2787 = vmatprep.subr.bf16.mxu0 0
      %2788 = vmatpush1.bf16.xpose.msra.mxu0 0
      %2789 = vmatprep.subr.bf16.mxu0 0
      %2790 = vmatpush1.bf16.xpose.msra.mxu0 0
      %2791 = vmatprep.subr.bf16.mxu0 0
      %2792 = vmatpush1.bf16.xpose.msra.mxu0 0
      %2793 = vmatprep.subr.bf16.mxu0 0
      %2794 = vmatpush1.bf16.xpose.msra.mxu0 0
      %2795 = vmatprep.subr.bf16.mxu0 0
      %2796 = vmatpush1.bf16.xpose.msra.mxu0 0
      %2797 = vmatprep.subr.bf16.mxu0 0
      %2798 = vmatpush1.bf16.xpose.msra.mxu0 0
      %2799 = vmatprep.mubr.bf16.mxu0 0
      %2800 = vmatmul.mubr.bf16.gmra.mrb[0].mxu0 %v2753
      %v2801 = vpop.f32.mrb[0].mxu0
      %v2802 = vadd.f32 0.0, %v2801
      %v2803 = vpop.f32.mrb[0].mxu0
      %v2804 = vpop.f32.mrb[0].mxu0
      %v2805 = vpop.f32.mrb[0].mxu0
      %2806 = vdwg.mxu0
      %v2807 = vsel %vm942, %v2602, -inf
      %2808 = vmax.xlane.f32.xlu0 %v2807
      %v2809 = vpop.xlane.xlu0 %2808
      %v2810 = vsel %vm942, %v2672, -inf
      %2811 = vmax.xlane.f32.xlu0 %v2810
      %v2812 = vpop.xlane.xlu0 %2811
      %v2813 = vsel %vm942, %v2737, -inf
      %2814 = vmax.xlane.f32.xlu0 %v2813
      %v2815 = vpop.xlane.xlu0 %2814
      %v2816 = vsel %vm942, %v2802, -inf
      %2817 = vmax.xlane.f32.xlu0 %v2816
      %v2818 = vpop.xlane.xlu0 %2817
      %v2819 = vsub.f32 %v2602, %v2809
      %v2820 = vsub.f32 %v2672, %v2812
      %v2821 = vsub.f32 %v2737, %v2815
      %v2822 = vsub.f32 %v2802, %v2818
      %v2823 = vmul.f32 %v2819, 1.442695
      %v2824 = vpow.pop %v2823
      %v2825 = vmul.f32 %v2820, 1.442695
      %v2826 = vpow.pop %v2825
      %v2827 = vmul.f32 %v2821, 1.442695
      %v2828 = vpow.pop %v2827
      %v2829 = vmul.f32 %v2822, 1.442695
      %v2830 = vpow.pop %v2829
      %v2831 = vsel %vm942, %v2824, 0.0
      %2832 = vadd.xlane.f32.xlu0 %v2831
      %v2833 = vpop.xlane.xlu0 %2832
      %v2834 = vsel %vm942, %v2826, 0.0
      %2835 = vadd.xlane.f32.xlu0 %v2834
      %v2836 = vpop.xlane.xlu0 %2835
      %v2837 = vsel %vm942, %v2828, 0.0
      %2838 = vadd.xlane.f32.xlu0 %v2837
      %v2839 = vpop.xlane.xlu0 %2838
      %v2840 = vsel %vm942, %v2830, 0.0
      %2841 = vadd.xlane.f32.xlu0 %v2840
      %v2842 = vpop.xlane.xlu0 %2841
      %v2843 = vrcp.pop %v2833
      %v2844 = vrcp.pop %v2836
      %v2845 = vrcp.pop %v2839
      %v2846 = vrcp.pop %v2842
      %v2847 = vmul.f32 %v2824, %v2843
      %v2848 = vmul.f32 %v2826, %v2844
      %v2849 = vmul.f32 %v2828, %v2845
      %v2850 = vmul.f32 %v2830, %v2846
      %v2851 = vpack.c.bf16 %v2847, %v2847
      %2856 = vrot.lane.b32.xlu0 %v2548, 96
      %v2857 = vpop.permute.xlu0 %2856
      %2858 = vrot.lane.b32.xlu0 %v2549, 96
      %v2859 = vpop.permute.xlu0 %2858
      %2860 = vrot.lane.b32.xlu0 %v2550, 96
      %v2861 = vpop.permute.xlu0 %2860
      %2862 = vrot.lane.b32.xlu0 %v2551, 96
      %v2863 = vpop.permute.xlu0 %2862
      %v2869 = vsel %vm942, %v2851, 0
      %2871 = vmatprep.subr.bf16.mxu0 0
      %2872 = vmatpush1.bf16.msra.mxu0 %v2857
      %2873 = vmatprep.subr.bf16.mxu0 0
      %2874 = vmatpush1.bf16.msra.mxu0 %v2859
      %2875 = vmatprep.subr.bf16.mxu0 0
      %2876 = vmatpush1.bf16.msra.mxu0 %v2861
      %2877 = vmatprep.subr.bf16.mxu0 0
      %2878 = vmatpush1.bf16.msra.mxu0 %v2863
      %2879 = vmatprep.subr.bf16.mxu0 0
      %2880 = vmatpush1.bf16.msra.mxu0 0
      %2881 = vmatprep.subr.bf16.mxu0 0
      %2882 = vmatpush1.bf16.msra.mxu0 0
      %2883 = vmatprep.subr.bf16.mxu0 0
      %2884 = vmatpush1.bf16.msra.mxu0 0
      %2885 = vmatprep.subr.bf16.mxu0 0
      %2886 = vmatpush1.bf16.msra.mxu0 0
      %2887 = vmatprep.subr.bf16.mxu0 0
      %2888 = vmatpush1.bf16.msra.mxu0 0
      %2889 = vmatprep.subr.bf16.mxu0 0
      %2890 = vmatpush1.bf16.msra.mxu0 0
      %2891 = vmatprep.subr.bf16.mxu0 0
      %2892 = vmatpush1.bf16.msra.mxu0 0
      %2893 = vmatprep.subr.bf16.mxu0 0
      %2894 = vmatpush1.bf16.msra.mxu0 0
      %2895 = vmatprep.subr.bf16.mxu0 0
      %2896 = vmatpush1.bf16.msra.mxu0 0
      %2897 = vmatprep.subr.bf16.mxu0 0
      %2898 = vmatpush1.bf16.msra.mxu0 0
      %2899 = vmatprep.subr.bf16.mxu0 0
      %2900 = vmatpush1.bf16.msra.mxu0 0
      %2901 = vmatprep.subr.bf16.mxu0 0
      %2902 = vmatpush1.bf16.msra.mxu0 0
      %2903 = vmatprep.mubr.bf16.mxu0 0
      %2904 = vmatmul.mubr.bf16.gmra.mrb[0].mxu0 %v2869
      %v2905 = vpop.f32.mrb[0].mxu0
      %v2906 = vadd.f32 0.0, %v2905
      %v2907 = vpop.f32.mrb[0].mxu0
      %v2908 = vpop.f32.mrb[0].mxu0
      %v2909 = vpop.f32.mrb[0].mxu0
      %2910 = vdwg.mxu0
      %2911 = vst.msk [vmem:[#allocation2] sm:$0xff] %vm537, %v2906
      %v2912 = vpack.c.bf16 %v2848, %v2848
      %2913 = vrot.lane.b32.xlu0 %v2548, 88
      %v2914 = vpop.permute.xlu0 %2913
      %2915 = vrot.lane.b32.xlu0 %v2549, 88
      %v2916 = vpop.permute.xlu0 %2915
      %2917 = vrot.lane.b32.xlu0 %v2550, 88
      %v2918 = vpop.permute.xlu0 %2917
      %2919 = vrot.lane.b32.xlu0 %v2551, 88
      %v2920 = vpop.permute.xlu0 %2919
      %v2926 = vsel %vm942, %v2912, 0
      %2928 = vmatprep.subr.bf16.mxu0 0
      %2929 = vmatpush1.bf16.msra.mxu0 %v2914
      %2930 = vmatprep.subr.bf16.mxu0 0
      %2931 = vmatpush1.bf16.msra.mxu0 %v2916
      %2932 = vmatprep.subr.bf16.mxu0 0
      %2933 = vmatpush1.bf16.msra.mxu0 %v2918
      %2934 = vmatprep.subr.bf16.mxu0 0
      %2935 = vmatpush1.bf16.msra.mxu0 %v2920
      %2936 = vmatprep.subr.bf16.mxu0 0
      %2937 = vmatpush1.bf16.msra.mxu0 0
      %2938 = vmatprep.subr.bf16.mxu0 0
      %2939 = vmatpush1.bf16.msra.mxu0 0
      %2940 = vmatprep.subr.bf16.mxu0 0
      %2941 = vmatpush1.bf16.msra.mxu0 0
      %2942 = vmatprep.subr.bf16.mxu0 0
      %2943 = vmatpush1.bf16.msra.mxu0 0
      %2944 = vmatprep.subr.bf16.mxu0 0
      %2945 = vmatpush1.bf16.msra.mxu0 0
      %2946 = vmatprep.subr.bf16.mxu0 0
      %2947 = vmatpush1.bf16.msra.mxu0 0
      %2948 = vmatprep.subr.bf16.mxu0 0
      %2949 = vmatpush1.bf16.msra.mxu0 0
      %2950 = vmatprep.subr.bf16.mxu0 0
      %2951 = vmatpush1.bf16.msra.mxu0 0
      %2952 = vmatprep.subr.bf16.mxu0 0
      %2953 = vmatpush1.bf16.msra.mxu0 0
      %2954 = vmatprep.subr.bf16.mxu0 0
      %2955 = vmatpush1.bf16.msra.mxu0 0
      %2956 = vmatprep.subr.bf16.mxu0 0
      %2957 = vmatpush1.bf16.msra.mxu0 0
      %2958 = vmatprep.subr.bf16.mxu0 0
      %2959 = vmatpush1.bf16.msra.mxu0 0
      %2960 = vmatprep.mubr.bf16.mxu0 0
      %2961 = vmatmul.mubr.bf16.gmra.mrb[0].mxu0 %v2926
      %v2962 = vpop.f32.mrb[0].mxu0
      %v2963 = vadd.f32 0.0, %v2962
      %v2964 = vpop.f32.mrb[0].mxu0
      %v2965 = vpop.f32.mrb[0].mxu0
      %v2966 = vpop.f32.mrb[0].mxu0
      %2967 = vdwg.mxu0
      %2969 = vrot.lane.b32.xlu0 %v2963, 8
      %v2970 = vpop.permute.xlu0 %2969
      %2972 = vst.msk [vmem:[#allocation2] sm:$0xff] %vm1525, %v2970
      %v2973 = vpack.c.bf16 %v2849, %v2849
      %2974 = vrot.lane.b32.xlu0 %v2548, 80
      %v2975 = vpop.permute.xlu0 %2974
      %2976 = vrot.lane.b32.xlu0 %v2549, 80
      %v2977 = vpop.permute.xlu0 %2976
      %2978 = vrot.lane.b32.xlu0 %v2550, 80
      %v2979 = vpop.permute.xlu0 %2978
      %2980 = vrot.lane.b32.xlu0 %v2551, 80
      %v2981 = vpop.permute.xlu0 %2980
      %v2987 = vsel %vm942, %v2973, 0
      %2989 = vmatprep.subr.bf16.mxu0 0
      %2990 = vmatpush1.bf16.msra.mxu0 %v2975
      %2991 = vmatprep.subr.bf16.mxu0 0
      %2992 = vmatpush1.bf16.msra.mxu0 %v2977
      %2993 = vmatprep.subr.bf16.mxu0 0
      %2994 = vmatpush1.bf16.msra.mxu0 %v2979
      %2995 = vmatprep.subr.bf16.mxu0 0
      %2996 = vmatpush1.bf16.msra.mxu0 %v2981
      %2997 = vmatprep.subr.bf16.mxu0 0
      %2998 = vmatpush1.bf16.msra.mxu0 0
      %2999 = vmatprep.subr.bf16.mxu0 0
      %3000 = vmatpush1.bf16.msra.mxu0 0
      %3001 = vmatprep.subr.bf16.mxu0 0
      %3002 = vmatpush1.bf16.msra.mxu0 0
      %3003 = vmatprep.subr.bf16.mxu0 0
      %3004 = vmatpush1.bf16.msra.mxu0 0
      %3005 = vmatprep.subr.bf16.mxu0 0
      %3006 = vmatpush1.bf16.msra.mxu0 0
      %3007 = vmatprep.subr.bf16.mxu0 0
      %3008 = vmatpush1.bf16.msra.mxu0 0
      %3009 = vmatprep.subr.bf16.mxu0 0
      %3010 = vmatpush1.bf16.msra.mxu0 0
      %3011 = vmatprep.subr.bf16.mxu0 0
      %3012 = vmatpush1.bf16.msra.mxu0 0
      %3013 = vmatprep.subr.bf16.mxu0 0
      %3014 = vmatpush1.bf16.msra.mxu0 0
      %3015 = vmatprep.subr.bf16.mxu0 0
      %3016 = vmatpush1.bf16.msra.mxu0 0
      %3017 = vmatprep.subr.bf16.mxu0 0
      %3018 = vmatpush1.bf16.msra.mxu0 0
      %3019 = vmatprep.subr.bf16.mxu0 0
      %3020 = vmatpush1.bf16.msra.mxu0 0
      %3021 = vmatprep.mubr.bf16.mxu0 0
      %3022 = vmatmul.mubr.bf16.gmra.mrb[0].mxu0 %v2987
      %v3023 = vpop.f32.mrb[0].mxu0
      %v3024 = vadd.f32 0.0, %v3023
      %v3025 = vpop.f32.mrb[0].mxu0
      %v3026 = vpop.f32.mrb[0].mxu0
      %v3027 = vpop.f32.mrb[0].mxu0
      %3028 = vdwg.mxu0
      %3030 = vrot.lane.b32.xlu0 %v3024, 16
      %v3031 = vpop.permute.xlu0 %3030
      %3033 = vst.msk [vmem:[#allocation2] sm:$0xff] %vm1659, %v3031
      %v3034 = vpack.c.bf16 %v2850, %v2850
      %3035 = vrot.lane.b32.xlu0 %v2548, 72
      %v3036 = vpop.permute.xlu0 %3035
      %3037 = vrot.lane.b32.xlu0 %v2549, 72
      %v3038 = vpop.permute.xlu0 %3037
      %3039 = vrot.lane.b32.xlu0 %v2550, 72
      %v3040 = vpop.permute.xlu0 %3039
      %3041 = vrot.lane.b32.xlu0 %v2551, 72
      %v3042 = vpop.permute.xlu0 %3041
      %v3048 = vsel %vm942, %v3034, 0
      %3050 = vmatprep.subr.bf16.mxu0 0
      %3051 = vmatpush1.bf16.msra.mxu0 %v3036
      %3052 = vmatprep.subr.bf16.mxu0 0
      %3053 = vmatpush1.bf16.msra.mxu0 %v3038
      %3054 = vmatprep.subr.bf16.mxu0 0
      %3055 = vmatpush1.bf16.msra.mxu0 %v3040
      %3056 = vmatprep.subr.bf16.mxu0 0
      %3057 = vmatpush1.bf16.msra.mxu0 %v3042
      %3058 = vmatprep.subr.bf16.mxu0 0
      %3059 = vmatpush1.bf16.msra.mxu0 0
      %3060 = vmatprep.subr.bf16.mxu0 0
      %3061 = vmatpush1.bf16.msra.mxu0 0
      %3062 = vmatprep.subr.bf16.mxu0 0
      %3063 = vmatpush1.bf16.msra.mxu0 0
      %3064 = vmatprep.subr.bf16.mxu0 0
      %3065 = vmatpush1.bf16.msra.mxu0 0
      %3066 = vmatprep.subr.bf16.mxu0 0
      %3067 = vmatpush1.bf16.msra.mxu0 0
      %3068 = vmatprep.subr.bf16.mxu0 0
      %3069 = vmatpush1.bf16.msra.mxu0 0
      %3070 = vmatprep.subr.bf16.mxu0 0
      %3071 = vmatpush1.bf16.msra.mxu0 0
      %3072 = vmatprep.subr.bf16.mxu0 0
      %3073 = vmatpush1.bf16.msra.mxu0 0
      %3074 = vmatprep.subr.bf16.mxu0 0
      %3075 = vmatpush1.bf16.msra.mxu0 0
      %3076 = vmatprep.subr.bf16.mxu0 0
      %3077 = vmatpush1.bf16.msra.mxu0 0
      %3078 = vmatprep.subr.bf16.mxu0 0
      %3079 = vmatpush1.bf16.msra.mxu0 0
      %3080 = vmatprep.subr.bf16.mxu0 0
      %3081 = vmatpush1.bf16.msra.mxu0 0
      %3082 = vmatprep.mubr.bf16.mxu0 0
      %3083 = vmatmul.mubr.bf16.gmra.mrb[0].mxu0 %v3048
      %v3084 = vpop.f32.mrb[0].mxu0
      %v3085 = vadd.f32 0.0, %v3084
      %v3086 = vpop.f32.mrb[0].mxu0
      %v3087 = vpop.f32.mrb[0].mxu0
      %v3088 = vpop.f32.mrb[0].mxu0
      %3089 = vdwg.mxu0
      %3091 = vrot.lane.b32.xlu0 %v3085, 24
      %v3092 = vpop.permute.xlu0 %3091
      %3094 = vst.msk [vmem:[#allocation2] sm:$0xff] %vm1793, %v3092
      %v3095 = vld [vmem:[#allocation2] sm:$0xff]
      %v3096 = vld [vmem:[%s1 + $0x70] sm:$0xf]
      %v3097 = vld [vmem:[%s1 + $0x74] sm:$0xf]
      %v3098 = vld [vmem:[%s1 + $0x78] sm:$0xf]
      %v3099 = vld [vmem:[%s1 + $0x7c] sm:$0xf]
      %v3100 = vpack.c.bf16 %v3095, %v3095
      %v3101 = vlaneseq
      %v3102 = vshrl.u32 %v3101, 7
      %v3103 = vsub.s32 3, %v3102
      %v3104 = vrot.slane %v171, %v3103
      %v3109 = vunpack.c.l.b16 %v3096
      %v3110 = vunpack.c.l.b16 %v3097
      %v3111 = vunpack.c.l.b16 %v3098
      %v3112 = vunpack.c.l.b16 %v3099
      %v3113 = vpack.c.b16 %v3110, %v3109
      %v3114 = vpack.c.b16 %v3112, %v3111
      %v3118 = vsel %vm399, %v3100, 0
      %3120 = vmatprep.subr.bf16.mxu0 0
      %3121 = vmatpush1.bf16.msra.mxu0 %v3113
      %3122 = vmatprep.subr.bf16.mxu0 0
      %3123 = vmatpush1.bf16.msra.mxu0 %v3114
      %3124 = vmatprep.subr.bf16.mxu0 0
      %3125 = vmatpush1.bf16.msra.mxu0 0
      %3126 = vmatprep.subr.bf16.mxu0 0
      %3127 = vmatpush1.bf16.msra.mxu0 0
      %3128 = vmatprep.subr.bf16.mxu0 0
      %3129 = vmatpush1.bf16.msra.mxu0 0
      %3130 = vmatprep.subr.bf16.mxu0 0
      %3131 = vmatpush1.bf16.msra.mxu0 0
      %3132 = vmatprep.subr.bf16.mxu0 0
      %3133 = vmatpush1.bf16.msra.mxu0 0
      %3134 = vmatprep.subr.bf16.mxu0 0
      %3135 = vmatpush1.bf16.msra.mxu0 0
      %3136 = vmatprep.subr.bf16.mxu0 0
      %3137 = vmatpush1.bf16.msra.mxu0 0
      %3138 = vmatprep.subr.bf16.mxu0 0
      %3139 = vmatpush1.bf16.msra.mxu0 0
      %3140 = vmatprep.subr.bf16.mxu0 0
      %3141 = vmatpush1.bf16.msra.mxu0 0
      %3142 = vmatprep.subr.bf16.mxu0 0
      %3143 = vmatpush1.bf16.msra.mxu0 0
      %3144 = vmatprep.subr.bf16.mxu0 0
      %3145 = vmatpush1.bf16.msra.mxu0 0
      %3146 = vmatprep.subr.bf16.mxu0 0
      %3147 = vmatpush1.bf16.msra.mxu0 0
      %3148 = vmatprep.subr.bf16.mxu0 0
      %3149 = vmatpush1.bf16.msra.mxu0 0
      %3150 = vmatprep.subr.bf16.mxu0 0
      %3151 = vmatpush1.bf16.msra.mxu0 0
      %3152 = vmatprep.mubr.bf16.mxu0 0
      %3153 = vmatmul.mubr.bf16.gmra.mrb[0].mxu0 %v3118
      %v3154 = vpop.f32.mrb[0].mxu0
      %v3155 = vadd.f32 %v3104, %v3154
      %v3156 = vpop.f32.mrb[0].mxu0
      %v3157 = vpop.f32.mrb[0].mxu0
      %v3158 = vpop.f32.mrb[0].mxu0
      %3159 = vdwg.mxu0
      %v3160 = vlaneseq
      %v3161 = vshrl.u32 %v3160, 7
      %v3162 = vsub.s32 5, %v3161
      %v3163 = vrot.slane %v172, %v3162
      %v3164 = vadd.f32 %v3163, %v3155
      %v3165 = vsel %vm399, %v3164, 0.0
      %3166 = vadd.xlane.f32.xlu0 %v3165
      %v3167 = vpop.xlane.xlu0 %3166
      %v3168 = vmul.f32 %v3167, %v1943
      %v3169 = vsub.f32 %v3164, %v3168
      %v3170 = vmul.f32 %v3169, %v3169
      %v3171 = vsel %vm399, %v3170, 0.0
      %3172 = vadd.xlane.f32.xlu0 %v3171
      %v3173 = vpop.xlane.xlu0 %3172
      %v3174 = vmul.f32 %v3173, %v1943
      %v3175 = vadd.f32 %v3174, 1e-05
      %v3176 = vrsqrt.pop %v3175
      %v3177 = vmul.f32 %v3169, %v3176
      %v3178 = vlaneseq
      %v3179 = vshrl.u32 %v3178, 7
      %v3180 = vsub.s32 4, %v3179
      %v3181 = vrot.slane %v171, %v3180
      %v3182 = vmul.f32 %v3177, %v3181
      %v3183 = vlaneseq
      %v3184 = vshrl.u32 %v3183, 7
      %v3185 = vsub.s32 5, %v3184
      %v3186 = vrot.slane %v171, %v3185
      %v3187 = vadd.f32 %v3182, %v3186
      %v3188 = vld [vmem:[%s1 + $0x80] sm:$0xf]
      %v3189 = vld [vmem:[%s1 + $0x84] sm:$0xf]
      %v3190 = vld [vmem:[%s1 + $0x88] sm:$0xf]
      %v3191 = vld [vmem:[%s1 + $0x8c] sm:$0xf]
      %v3192 = vpack.c.bf16 %v3187, %v3187
      %v3193 = vlaneseq
      %v3194 = vshrl.u32 %v3193, 7
      %v3195 = vsub.s32 6, %v3194
      %v3196 = vrot.slane %v171, %v3195
      %v3201 = vunpack.c.l.b16 %v3188
      %v3202 = vunpack.c.l.b16 %v3189
      %v3203 = vunpack.c.l.b16 %v3190
      %v3204 = vunpack.c.l.b16 %v3191
      %v3205 = vpack.c.b16 %v3202, %v3201
      %v3206 = vpack.c.b16 %v3204, %v3203
      %v3210 = vsel %vm399, %v3192, 0
      %3212 = vmatprep.subr.bf16.mxu0 0
      %3213 = vmatpush1.bf16.msra.mxu0 %v3205
      %3214 = vmatprep.subr.bf16.mxu0 0
      %3215 = vmatpush1.bf16.msra.mxu0 %v3206
      %3216 = vmatprep.subr.bf16.mxu0 0
      %3217 = vmatpush1.bf16.msra.mxu0 0
      %3218 = vmatprep.subr.bf16.mxu0 0
      %3219 = vmatpush1.bf16.msra.mxu0 0
      %3220 = vmatprep.subr.bf16.mxu0 0
      %3221 = vmatpush1.bf16.msra.mxu0 0
      %3222 = vmatprep.subr.bf16.mxu0 0
      %3223 = vmatpush1.bf16.msra.mxu0 0
      %3224 = vmatprep.subr.bf16.mxu0 0
      %3225 = vmatpush1.bf16.msra.mxu0 0
      %3226 = vmatprep.subr.bf16.mxu0 0
      %3227 = vmatpush1.bf16.msra.mxu0 0
      %3228 = vmatprep.subr.bf16.mxu0 0
      %3229 = vmatpush1.bf16.msra.mxu0 0
      %3230 = vmatprep.subr.bf16.mxu0 0
      %3231 = vmatpush1.bf16.msra.mxu0 0
      %3232 = vmatprep.subr.bf16.mxu0 0
      %3233 = vmatpush1.bf16.msra.mxu0 0
      %3234 = vmatprep.subr.bf16.mxu0 0
      %3235 = vmatpush1.bf16.msra.mxu0 0
      %3236 = vmatprep.subr.bf16.mxu0 0
      %3237 = vmatpush1.bf16.msra.mxu0 0
      %3238 = vmatprep.subr.bf16.mxu0 0
      %3239 = vmatpush1.bf16.msra.mxu0 0
      %3240 = vmatprep.subr.bf16.mxu0 0
      %3241 = vmatpush1.bf16.msra.mxu0 0
      %3242 = vmatprep.subr.bf16.mxu0 0
      %3243 = vmatpush1.bf16.msra.mxu0 0
      %3244 = vmatprep.mubr.bf16.mxu0 0
      %3245 = vmatmul.mubr.bf16.gmra.mrb[0].mxu0 %v3210
      %v3246 = vpop.f32.mrb[0].mxu0
      %v3247 = vadd.f32 %v3196, %v3246
      %v3248 = vpop.f32.mrb[0].mxu0
      %v3249 = vpop.f32.mrb[0].mxu0
      %v3250 = vpop.f32.mrb[0].mxu0
      %3251 = vdwg.mxu0
      %v3252 = vmax.f32 %v3247, 0.0
      %v3253 = vld [vmem:[%s1 + $0x90] sm:$0xf]
      %v3254 = vld [vmem:[%s1 + $0x94] sm:$0xf]
      %v3255 = vld [vmem:[%s1 + $0x98] sm:$0xf]
      %v3256 = vld [vmem:[%s1 + $0x9c] sm:$0xf]
      %v3257 = vld [vmem:[%s1 + $0xa0] sm:$0xf]
      %v3258 = vld [vmem:[%s1 + $0xa4] sm:$0xf]
      %v3259 = vld [vmem:[%s1 + $0xa8] sm:$0xf]
      %v3260 = vld [vmem:[%s1 + $0xac] sm:$0xf]
      %v3261 = vpack.c.bf16 %v3252, %v3252
      %v3262 = vlaneseq
      %v3263 = vshrl.u32 %v3262, 7
      %v3264 = vsub.s32 7, %v3263
      %v3265 = vrot.slane %v171, %v3264
      %v3274 = vunpack.c.l.b16 %v3253
      %v3275 = vunpack.c.l.b16 %v3254
      %v3276 = vunpack.c.l.b16 %v3255
      %v3277 = vunpack.c.l.b16 %v3256
      %v3278 = vunpack.c.l.b16 %v3257
      %v3279 = vunpack.c.l.b16 %v3258
      %v3280 = vunpack.c.l.b16 %v3259
      %v3281 = vunpack.c.l.b16 %v3260
      %v3282 = vpack.c.b16 %v3275, %v3274
      %v3283 = vpack.c.b16 %v3277, %v3276
      %v3284 = vpack.c.b16 %v3279, %v3278
      %v3285 = vpack.c.b16 %v3281, %v3280
      %v3291 = vsel %vm942, %v3261, 0
      %3293 = vmatprep.subr.bf16.mxu0 0
      %3294 = vmatpush1.bf16.msra.mxu0 %v3282
      %3295 = vmatprep.subr.bf16.mxu0 0
      %3296 = vmatpush1.bf16.msra.mxu0 %v3283
      %3297 = vmatprep.subr.bf16.mxu0 0
      %3298 = vmatpush1.bf16.msra.mxu0 %v3284
      %3299 = vmatprep.subr.bf16.mxu0 0
      %3300 = vmatpush1.bf16.msra.mxu0 %v3285
      %3301 = vmatprep.subr.bf16.mxu0 0
      %3302 = vmatpush1.bf16.msra.mxu0 0
      %3303 = vmatprep.subr.bf16.mxu0 0
      %3304 = vmatpush1.bf16.msra.mxu0 0
      %3305 = vmatprep.subr.bf16.mxu0 0
      %3306 = vmatpush1.bf16.msra.mxu0 0
      %3307 = vmatprep.subr.bf16.mxu0 0
      %3308 = vmatpush1.bf16.msra.mxu0 0
      %3309 = vmatprep.subr.bf16.mxu0 0
      %3310 = vmatpush1.bf16.msra.mxu0 0
      %3311 = vmatprep.subr.bf16.mxu0 0
      %3312 = vmatpush1.bf16.msra.mxu0 0
      %3313 = vmatprep.subr.bf16.mxu0 0
      %3314 = vmatpush1.bf16.msra.mxu0 0
      %3315 = vmatprep.subr.bf16.mxu0 0
      %3316 = vmatpush1.bf16.msra.mxu0 0
      %3317 = vmatprep.subr.bf16.mxu0 0
      %3318 = vmatpush1.bf16.msra.mxu0 0
      %3319 = vmatprep.subr.bf16.mxu0 0
      %3320 = vmatpush1.bf16.msra.mxu0 0
      %3321 = vmatprep.subr.bf16.mxu0 0
      %3322 = vmatpush1.bf16.msra.mxu0 0
      %3323 = vmatprep.subr.bf16.mxu0 0
      %3324 = vmatpush1.bf16.msra.mxu0 0
      %3325 = vmatprep.mubr.bf16.mxu0 0
      %3326 = vmatmul.mubr.bf16.gmra.mrb[0].mxu0 %v3291
      %v3327 = vpop.f32.mrb[0].mxu0
      %v3328 = vadd.f32 %v3265, %v3327
      %v3329 = vpop.f32.mrb[0].mxu0
      %v3330 = vpop.f32.mrb[0].mxu0
      %v3331 = vpop.f32.mrb[0].mxu0
      %3332 = vdwg.mxu0
      %v3333 = vadd.f32 %v3187, %v3328
      %v3334 = vsel %vm399, %v3333, 0.0
      %3335 = vadd.xlane.f32.xlu0 %v3334
      %v3336 = vpop.xlane.xlu0 %3335
      %v3337 = vmul.f32 %v3336, %v1943
      %v3338 = vsub.f32 %v3333, %v3337
      %v3339 = vmul.f32 %v3338, %v3338
      %v3340 = vsel %vm399, %v3339, 0.0
      %3341 = vadd.xlane.f32.xlu0 %v3340
      %v3342 = vpop.xlane.xlu0 %3341
      %v3343 = vmul.f32 %v3342, %v1943
      %v3344 = vadd.f32 %v3343, 1e-05
      %v3345 = vrsqrt.pop %v3344
      %v3346 = vmul.f32 %v3338, %v3345
      %v3347 = vlaneseq
      %v3348 = vshrl.u32 %v3347, 7
      %v3349 = vsub.s32 0, %v3348
      %v3350 = vrot.slane %v172, %v3349
      %v3351 = vmul.f32 %v3346, %v3350
      %v3352 = vlaneseq
      %v3353 = vshrl.u32 %v3352, 7
      %v3354 = vsub.s32 1, %v3353
      %v3355 = vrot.slane %v172, %v3354
      %v3356 = vadd.f32 %v3351, %v3355
      %v3357 = vld [vmem:[%s1 + $0xb0] sm:$0xf]
      %v3358 = vld [vmem:[%s1 + $0xb4] sm:$0xf]
      %v3359 = vld [vmem:[%s1 + $0xb8] sm:$0xf]
      %v3360 = vld [vmem:[%s1 + $0xbc] sm:$0xf]
      %v3361 = vpack.c.bf16 %v3356, %v3356
      %v3362 = vlaneseq
      %v3363 = vshrl.u32 %v3362, 7
      %v3364 = vsub.s32 2, %v3363
      %v3365 = vrot.slane %v172, %v3364
      %v3370 = vunpack.c.l.b16 %v3357
      %v3371 = vunpack.c.l.b16 %v3358
      %v3372 = vunpack.c.l.b16 %v3359
      %v3373 = vunpack.c.l.b16 %v3360
      %v3374 = vpack.c.b16 %v3371, %v3370
      %v3375 = vpack.c.b16 %v3373, %v3372
      %v3379 = vsel %vm399, %v3361, 0
      %3381 = vmatprep.subr.bf16.mxu0 0
      %3382 = vmatpush1.bf16.msra.mxu0 %v3374
      %3383 = vmatprep.subr.bf16.mxu0 0
      %3384 = vmatpush1.bf16.msra.mxu0 %v3375
      %3385 = vmatprep.subr.bf16.mxu0 0
      %3386 = vmatpush1.bf16.msra.mxu0 0
      %3387 = vmatprep.subr.bf16.mxu0 0
      %3388 = vmatpush1.bf16.msra.mxu0 0
      %3389 = vmatprep.subr.bf16.mxu0 0
      %3390 = vmatpush1.bf16.msra.mxu0 0
      %3391 = vmatprep.subr.bf16.mxu0 0
      %3392 = vmatpush1.bf16.msra.mxu0 0
      %3393 = vmatprep.subr.bf16.mxu0 0
      %3394 = vmatpush1.bf16.msra.mxu0 0
      %3395 = vmatprep.subr.bf16.mxu0 0
      %3396 = vmatpush1.bf16.msra.mxu0 0
      %3397 = vmatprep.subr.bf16.mxu0 0
      %3398 = vmatpush1.bf16.msra.mxu0 0
      %3399 = vmatprep.subr.bf16.mxu0 0
      %3400 = vmatpush1.bf16.msra.mxu0 0
      %3401 = vmatprep.subr.bf16.mxu0 0
      %3402 = vmatpush1.bf16.msra.mxu0 0
      %3403 = vmatprep.subr.bf16.mxu0 0
      %3404 = vmatpush1.bf16.msra.mxu0 0
      %3405 = vmatprep.subr.bf16.mxu0 0
      %3406 = vmatpush1.bf16.msra.mxu0 0
      %3407 = vmatprep.subr.bf16.mxu0 0
      %3408 = vmatpush1.bf16.msra.mxu0 0
      %3409 = vmatprep.subr.bf16.mxu0 0
      %3410 = vmatpush1.bf16.msra.mxu0 0
      %3411 = vmatprep.subr.bf16.mxu0 0
      %3412 = vmatpush1.bf16.msra.mxu0 0
      %3413 = vmatprep.mubr.bf16.mxu0 0
      %3414 = vmatmul.mubr.bf16.gmra.mrb[0].mxu0 %v3379
      %v3415 = vpop.f32.mrb[0].mxu0
      %v3416 = vadd.f32 %v3365, %v3415
      %v3417 = vpop.f32.mrb[0].mxu0
      %v3418 = vpop.f32.mrb[0].mxu0
      %v3419 = vpop.f32.mrb[0].mxu0
      %3420 = vdwg.mxu0
      %v3421 = vmax.f32 %v3416, 0.0
      %v3422 = vld [vmem:[%s1 + $0xc0] sm:$0xf]
      %v3423 = vld [vmem:[%s1 + $0xc4] sm:$0xf]
      %v3424 = vld [vmem:[%s1 + $0xc8] sm:$0xf]
      %v3425 = vld [vmem:[%s1 + $0xcc] sm:$0xf]
      %v3426 = vpack.c.bf16 %v3421, %v3421
      %v3427 = vlaneseq
      %v3428 = vshrl.u32 %v3427, 7
      %v3429 = vsub.s32 3, %v3428
      %v3430 = vrot.slane %v172, %v3429
      %v3435 = vunpack.c.l.b16 %v3422
      %v3436 = vunpack.c.l.b16 %v3423
      %v3437 = vunpack.c.l.b16 %v3424
      %v3438 = vunpack.c.l.b16 %v3425
      %v3439 = vpack.c.b16 %v3436, %v3435
      %v3440 = vpack.c.b16 %v3438, %v3437
      %v3444 = vsel %vm399, %v3426, 0
      %3446 = vmatprep.subr.bf16.mxu0 0
      %3447 = vmatpush1.bf16.msra.mxu0 %v3439
      %3448 = vmatprep.subr.bf16.mxu0 0
      %3449 = vmatpush1.bf16.msra.mxu0 %v3440
      %3450 = vmatprep.subr.bf16.mxu0 0
      %3451 = vmatpush1.bf16.msra.mxu0 0
      %3452 = vmatprep.subr.bf16.mxu0 0
      %3453 = vmatpush1.bf16.msra.mxu0 0
      %3454 = vmatprep.subr.bf16.mxu0 0
      %3455 = vmatpush1.bf16.msra.mxu0 0
      %3456 = vmatprep.subr.bf16.mxu0 0
      %3457 = vmatpush1.bf16.msra.mxu0 0
      %3458 = vmatprep.subr.bf16.mxu0 0
      %3459 = vmatpush1.bf16.msra.mxu0 0
      %3460 = vmatprep.subr.bf16.mxu0 0
      %3461 = vmatpush1.bf16.msra.mxu0 0
      %3462 = vmatprep.subr.bf16.mxu0 0
      %3463 = vmatpush1.bf16.msra.mxu0 0
      %3464 = vmatprep.subr.bf16.mxu0 0
      %3465 = vmatpush1.bf16.msra.mxu0 0
      %3466 = vmatprep.subr.bf16.mxu0 0
      %3467 = vmatpush1.bf16.msra.mxu0 0
      %3468 = vmatprep.subr.bf16.mxu0 0
      %3469 = vmatpush1.bf16.msra.mxu0 0
      %3470 = vmatprep.subr.bf16.mxu0 0
      %3471 = vmatpush1.bf16.msra.mxu0 0
      %3472 = vmatprep.subr.bf16.mxu0 0
      %3473 = vmatpush1.bf16.msra.mxu0 0
      %3474 = vmatprep.subr.bf16.mxu0 0
      %3475 = vmatpush1.bf16.msra.mxu0 0
      %3476 = vmatprep.subr.bf16.mxu0 0
      %3477 = vmatpush1.bf16.msra.mxu0 0
      %3478 = vmatprep.mubr.bf16.mxu0 0
      %3479 = vmatmul.mubr.bf16.gmra.mrb[0].mxu0 %v3444
      %v3480 = vpop.f32.mrb[0].mxu0
      %v3481 = vadd.f32 %v3430, %v3480
      %v3482 = vpop.f32.mrb[0].mxu0
      %v3483 = vpop.f32.mrb[0].mxu0
      %v3484 = vpop.f32.mrb[0].mxu0
      %3485 = vdwg.mxu0
      %v3486 = vmax.f32 %v3481, 0.0
      %v3487 = vld [vmem:[%s1 + $0xd0] sm:$0xf]
      %v3488 = vld [vmem:[%s1 + $0xd4] sm:$0xf]
      %v3489 = vld [vmem:[%s1 + $0xd8] sm:$0xf]
      %v3490 = vld [vmem:[%s1 + $0xdc] sm:$0xf]
      %v3491 = vld [vmem:[%s1 + $0xe0] sm:$0xf]
      %v3492 = vld [vmem:[%s1 + $0xe4] sm:$0xf]
      %v3493 = vld [vmem:[%s1 + $0xe8] sm:$0xf]
      %v3494 = vld [vmem:[%s1 + $0xec] sm:$0xf]
      %v3495 = vpack.c.bf16 %v3486, %v3486
      %v3500 = vunpack.c.l.b16 %v3491
      %v3501 = vunpack.c.l.b16 %v3492
      %v3502 = vunpack.c.l.b16 %v3493
      %v3503 = vunpack.c.l.b16 %v3494
      %v3504 = vpack.c.b16 %v3501, %v3500
      %v3505 = vpack.c.b16 %v3503, %v3502
      %v3509 = vsel %vm399, %v3495, 0
      %3511 = vmatprep.subr.bf16.mxu0 0
      %3512 = vmatpush1.bf16.msra.mxu0 %v3504
      %3513 = vmatprep.subr.bf16.mxu0 0
      %3514 = vmatpush1.bf16.msra.mxu0 %v3505
      %3515 = vmatprep.subr.bf16.mxu0 0
      %3516 = vmatpush1.bf16.msra.mxu0 0
      %3517 = vmatprep.subr.bf16.mxu0 0
      %3518 = vmatpush1.bf16.msra.mxu0 0
      %3519 = vmatprep.subr.bf16.mxu0 0
      %3520 = vmatpush1.bf16.msra.mxu0 0
      %3521 = vmatprep.subr.bf16.mxu0 0
      %3522 = vmatpush1.bf16.msra.mxu0 0
      %3523 = vmatprep.subr.bf16.mxu0 0
      %3524 = vmatpush1.bf16.msra.mxu0 0
      %3525 = vmatprep.subr.bf16.mxu0 0
      %3526 = vmatpush1.bf16.msra.mxu0 0
      %3527 = vmatprep.subr.bf16.mxu0 0
      %3528 = vmatpush1.bf16.msra.mxu0 0
      %3529 = vmatprep.subr.bf16.mxu0 0
      %3530 = vmatpush1.bf16.msra.mxu0 0
      %3531 = vmatprep.subr.bf16.mxu0 0
      %3532 = vmatpush1.bf16.msra.mxu0 0
      %3533 = vmatprep.subr.bf16.mxu0 0
      %3534 = vmatpush1.bf16.msra.mxu0 0
      %3535 = vmatprep.subr.bf16.mxu0 0
      %3536 = vmatpush1.bf16.msra.mxu0 0
      %3537 = vmatprep.subr.bf16.mxu0 0
      %3538 = vmatpush1.bf16.msra.mxu0 0
      %3539 = vmatprep.subr.bf16.mxu0 0
      %3540 = vmatpush1.bf16.msra.mxu0 0
      %3541 = vmatprep.subr.bf16.mxu0 0
      %3542 = vmatpush1.bf16.msra.mxu0 0
      %3543 = vmatprep.mubr.bf16.mxu0 0
      %3544 = vmatmul.mubr.bf16.gmra.mrb[0].mxu0 %v3509
      %v3545 = vpop.f32.mrb[0].mxu0
      %v3546 = vadd.f32 0.0, %v3545
      %v3547 = vpop.f32.mrb[0].mxu0
      %v3548 = vpop.f32.mrb[0].mxu0
      %v3549 = vpop.f32.mrb[0].mxu0
      %3550 = vdwg.mxu0
      %v3555 = vunpack.c.l.b16 %v3487
      %v3556 = vunpack.c.l.b16 %v3488
      %v3557 = vunpack.c.l.b16 %v3489
      %v3558 = vunpack.c.l.b16 %v3490
      %v3559 = vpack.c.b16 %v3556, %v3555
      %v3560 = vpack.c.b16 %v3558, %v3557
      %3563 = vmatprep.subr.bf16.mxu0 0
      %3564 = vmatpush1.bf16.msra.mxu0 %v3559
      %3565 = vmatprep.subr.bf16.mxu0 0
      %3566 = vmatpush1.bf16.msra.mxu0 %v3560
      %3567 = vmatprep.subr.bf16.mxu0 0
      %3568 = vmatpush1.bf16.msra.mxu0 0
      %3569 = vmatprep.subr.bf16.mxu0 0
      %3570 = vmatpush1.bf16.msra.mxu0 0
      %3571 = vmatprep.subr.bf16.mxu0 0
      %3572 = vmatpush1.bf16.msra.mxu0 0
      %3573 = vmatprep.subr.bf16.mxu0 0
      %3574 = vmatpush1.bf16.msra.mxu0 0
      %3575 = vmatprep.subr.bf16.mxu0 0
      %3576 = vmatpush1.bf16.msra.mxu0 0
      %3577 = vmatprep.subr.bf16.mxu0 0
      %3578 = vmatpush1.bf16.msra.mxu0 0
      %3579 = vmatprep.subr.bf16.mxu0 0
      %3580 = vmatpush1.bf16.msra.mxu0 0
      %3581 = vmatprep.subr.bf16.mxu0 0
      %3582 = vmatpush1.bf16.msra.mxu0 0
      %3583 = vmatprep.subr.bf16.mxu0 0
      %3584 = vmatpush1.bf16.msra.mxu0 0
      %3585 = vmatprep.subr.bf16.mxu0 0
      %3586 = vmatpush1.bf16.msra.mxu0 0
      %3587 = vmatprep.subr.bf16.mxu0 0
      %3588 = vmatpush1.bf16.msra.mxu0 0
      %3589 = vmatprep.subr.bf16.mxu0 0
      %3590 = vmatpush1.bf16.msra.mxu0 0
      %3591 = vmatprep.subr.bf16.mxu0 0
      %3592 = vmatpush1.bf16.msra.mxu0 0
      %3593 = vmatprep.subr.bf16.mxu0 0
      %3594 = vmatpush1.bf16.msra.mxu0 0
      %3595 = vmatprep.mubr.bf16.mxu0 0
      %3596 = vmatmul.mubr.bf16.gmra.mrb[0].mxu0 %v3379
      %v3597 = vpop.f32.mrb[0].mxu0
      %v3598 = vadd.f32 %v3546, %v3597
      %v3599 = vpop.f32.mrb[0].mxu0
      %v3600 = vpop.f32.mrb[0].mxu0
      %v3601 = vpop.f32.mrb[0].mxu0
      %3602 = vdwg.mxu0
      %v3603 = vlaneseq
      %v3604 = vshrl.u32 %v3603, 7
      %v3605 = vsub.s32 4, %v3604
      %v3606 = vrot.slane %v172, %v3605
      %v3607 = vadd.f32 %v3598, %v3606
      %v3608 = vlaneseq
      %v3609 = vand.u32 %v3608, 127
      %vm3610 = vcmp.ge.s32.totalorder %v3609, 6
      %vm3611 = vcmp.lt.s32.totalorder %v3609, 10
      %vm3612 = vmand %vm3610, %vm3611
      %v3613 = vxor.u32 %v3607, 2147483648
      %v3614 = vmul.f32 %v3613, 1.442695
      %v3615 = vpow.pop %v3614
      %v3616 = vadd.f32 %v3615, 1.0
      %v3617 = vrcp.pop %v3616
      %v3618 = vmul.f32 1.0, %v3617
      %v3619 = vsel %vm3612, %v3618, %v3607
      %3620 = vst [vmem:[%s168] sm:$0xff] %v3619
      %p3621 = scmp.lt.s32.totalorder %s14, 1
      %s3622 = scalar_select %p3621, %s14, 1
      %s3623 = smul.addr %s3622, 8
      %s3624 = scalar_lea.vmem %s3, %s3623
      // Predicated region
      $region33: #{detr_forward.1} parent=31 // pred_check
        %p3625 = pneg %p100
      $region34: #{detr_forward.1} parent=31 // pred_check_branch
        %3627 = sbr.rel (%p3625) target = $region36
      $region35: #{detr_forward.1} parent=31 // pred_region
        _
      $region36: #{detr_forward.1} parent=31 // pred_fallthru
        _
    $region32: #{detr_forward.1} parent=5 // pred_fallthru
      _
    %p3628 = scmp.le.s32.totalorder 2, %s9
    // Predicated region
    $region37: #{detr_forward.1} parent=5 // pred_check
      %p3629 = pneg %p3628
    $region38: #{detr_forward.1} parent=5 // pred_check_branch
      %3631 = sbr.rel (%p3629) target = $region40
    $region39: #{detr_forward.1} parent=5 // pred_region
      %s3632 = ssub.s32 %s9, 2
      // Predicated region
      $region41: #{detr_forward.1} parent=39 // pred_check
        %p3633 = pneg %p106
      $region42: #{detr_forward.1} parent=39 // pred_check_branch
        %3635 = sbr.rel (%p3633) target = $region44
      $region43: #{detr_forward.1} parent=39 // pred_region
        %p3636 = scmp.lt.s32.totalorder %s15, 1
        %s3637 = scalar_select %p3636, %s15, 1
        %s3638 = smul.addr %s3637, 8
        %s3639 = scalar_lea.vmem %s3, %s3638
      $region44: #{detr_forward.1} parent=39 // pred_fallthru
        _
    $region40: #{detr_forward.1} parent=5 // pred_fallthru
      _
  $region6: #{detr_forward.1} parent=0 // loop_footer
    %s13 = sadd.s32 1, %s9
  $region7: #{detr_forward.1} parent=0 // loop_footer_branch
    %8 = sbr.rel target = $region3
  $region8: #{detr_forward.1} parent=0 // loop_exit
    _

</llo_original>
